<compile_context>
chip_gen: v7x
topology: tpu7x:2x2x1
jax: 0.10.0
libtpu: 0.0.40
codegen_flags: <defaults>
</compile_context>

<pallas_src>
import functools

import jax
import jax.numpy as jnp
from jax import lax
from jax.experimental import pallas as pl
from jax.experimental.pallas import tpu as pltpu


# ---------------------------------------------------------------------------
# Fused Pallas kernel
# ---------------------------------------------------------------------------
def fused_lstm_kernel(x_ref, wih1_ref, whh1_ref, b1_ref,
                      wih2_ref, whh2_ref, b2_ref,
                      wl_ref, bl_ref, out_ref,
                      y1_scr, y2_scr, *, seq_len, batch):
    """Whole forward pass in one kernel (everything resident in VMEM).

    x_ref:    (S*B, D_in)        flattened input
    wih1_ref: (D_in, 4*H1)       whh1_ref: (H1, 4*H1)    b1_ref: (1, 4*H1)
    wih2_ref: (H1, 4*Hp2)        whh2_ref: (Hp2, 4*Hp2)  b2_ref: (1, 4*Hp2)
    wl_ref:   (B*Hp2, Op)        bl_ref:   (1, Op)   (padded cols bias = -1e30)
    out_ref:  (S, Op)            softmax probabilities (padded cols == 0)
    y1_scr:   (S*B, H1) VMEM     layer-1 hidden states (input to layer 2)
    y2_scr:   (S*B, Hp2) VMEM    layer-2 hidden states (input to linear)
    """
    S, B = seq_len, batch
    H1 = whh1_ref.shape[0]
    H2 = whh2_ref.shape[0]          # padded hidden2 (multiple of 128)

    def run_layer(xw, whh_ref, H, y_scr):
        # xw: (S*B, 4H) precomputed input projection with bias folded in.
        # h/c live in vregs (loop carry), only y_scr[t] is stored per step.
        h = jnp.zeros((B, H), jnp.float32)
        c = jnp.zeros((B, H), jnp.float32)
        for t in range(S):          # static trip count -> fully unrolled
            gates = (jnp.dot(h, whh_ref[...],
                             preferred_element_type=jnp.float32)
                     + xw[t * B:(t + 1) * B, :])
            i = jax.nn.sigmoid(gates[:, 0 * H:1 * H])
            f = jax.nn.sigmoid(gates[:, 1 * H:2 * H])
            g = jnp.tanh(gates[:, 2 * H:3 * H])
            o = jax.nn.sigmoid(gates[:, 3 * H:4 * H])
            c = f * c + i * g
            h = o * jnp.tanh(c)
            y_scr[t * B:(t + 1) * B, :] = h

    # ---- layer 1: input projection hoisted out of the recurrence ----------
    xw1 = (jnp.dot(x_ref[...], wih1_ref[...],
                   preferred_element_type=jnp.float32) + b1_ref[...])
    run_layer(xw1, whh1_ref, H1, y1_scr)

    # ---- layer 2 -----------------------------------------------------------
    xw2 = (jnp.dot(y1_scr[...], wih2_ref[...],
                   preferred_element_type=jnp.float32) + b2_ref[...])
    run_layer(xw2, whh2_ref, H2, y2_scr)

    # ---- linear + softmax (lane-dense, padded logits -> exp == 0) ----------
    y2 = y2_scr[...].reshape(S, B * H2)
    logits = (jnp.dot(y2, wl_ref[...], preferred_element_type=jnp.float32)
              + bl_ref[...])
    m = jnp.max(logits, axis=-1, keepdims=True)
    e = jnp.exp(logits - m)
    denom = jnp.sum(e, axis=-1, keepdims=True)
    out_ref[...] = (e * pl.reciprocal(denom, approx=True)).astype(out_ref.dtype)


# ---------------------------------------------------------------------------
# Wrapper
# ---------------------------------------------------------------------------
@functools.partial(jax.jit, static_argnames=("out_size",))
def lstm_forward(pp, x, out_size):
    """pp: padded kernel params. x: (S, B, D_in). Returns (S, out_size)."""
    S, B, Din = x.shape
    H1 = pp["w_hh1"].shape[0]
    Hp2 = pp["w_hh2"].shape[0]
    Op = pp["w_l"].shape[1]

    kern = functools.partial(fused_lstm_kernel, seq_len=S, batch=B)
    vmem = pl.BlockSpec(memory_space=pltpu.MemorySpace.VMEM)
    probs_pad = pl.pallas_call(
        kern,
        out_shape=jax.ShapeDtypeStruct((S, Op), jnp.float32),
        in_specs=[vmem] * 9,
        out_specs=vmem,
        scratch_shapes=[
            pltpu.VMEM((S * B, H1), jnp.float32),
            pltpu.VMEM((S * B, Hp2), jnp.float32),
        ],
    )(x.reshape(S * B, Din),
      pp["w_ih1"], pp["w_hh1"], pp["b1"],
      pp["w_ih2"], pp["w_hh2"], pp["b2"],
      pp["w_l"], pp["b_l"])
    return probs_pad[:, :out_size]


# ---------------------------------------------------------------------------
# Parameter construction (real params + lane-padded kernel params)
# ---------------------------------------------------------------------------
def init_params(key, input_size, hidden1, hidden2, output_size, batch):
    """Deterministic synthetic init (PyTorch-like uniform(-1/sqrt(H), 1/sqrt(H)))."""
    ks = jax.random.split(key, 10)

    def u(k, shape, bound):
        return jax.random.uniform(k, shape, jnp.float32, -bound, bound)

    b1 = 1.0 / jnp.sqrt(hidden1)
    b2 = 1.0 / jnp.sqrt(hidden2)
    bl = 1.0 / jnp.sqrt(hidden2 * batch)
    return {
        # LSTM 1 (weights stored transposed: (in, 4H)); gate order i,f,g,o
        "w_ih1": u(ks[0], (input_size, 4 * hidden1), b1),
        "w_hh1": u(ks[1], (hidden1, 4 * hidden1), b1),
        "b1": u(ks[2], (1, 4 * hidden1), b1) + u(ks[3], (1, 4 * hidden1), b1),
        # LSTM 2
        "w_ih2": u(ks[4], (hidden1, 4 * hidden2), b2),
        "w_hh2": u(ks[5], (hidden2, 4 * hidden2), b2),
        "b2": u(ks[6], (1, 4 * hidden2), b2) + u(ks[7], (1, 4 * hidden2), b2),
        # Linear (hidden2*batch -> out), stored transposed
        "w_l": u(ks[8], (hidden2 * batch, output_size), bl),
        "b_l": u(ks[9], (1, output_size), bl),
    }


def _pad_gate_blocks(w, h_real, h_pad):
    """(R, 4*h_real) -> (R, 4*h_pad): zero-pad each gate block on the last dim."""
    r = w.shape[0]
    w4 = w.reshape(r, 4, h_real)
    return jnp.pad(w4, ((0, 0), (0, 0), (0, h_pad - h_real))).reshape(r, 4 * h_pad)


def pad_params(p, hidden2, hidden2_pad, out_size, out_pad, batch):
    """Lane-pad layer-2 / linear params. Padding keeps padded h2 lanes exactly 0
    (zero gate weights/bias -> i=f=o=0.5, g=0, c stays 0) and padded logits at
    -1e30 so softmax over the padded row is exact."""
    h2, hp2 = hidden2, hidden2_pad
    w_ih2 = _pad_gate_blocks(p["w_ih2"], h2, hp2)                       # (H1, 4*Hp2)
    w_hh2 = _pad_gate_blocks(jnp.pad(p["w_hh2"], ((0, hp2 - h2), (0, 0))), h2, hp2)
    b2 = _pad_gate_blocks(p["b2"], h2, hp2)
    w_l = jnp.zeros((batch * hp2, out_pad), jnp.float32)
    for b in range(batch):
        w_l = w_l.at[b * hp2:b * hp2 + h2, :out_size].set(
            p["w_l"][b * h2:(b + 1) * h2, :])
    b_l = jnp.full((1, out_pad), -1e30, jnp.float32).at[:, :out_size].set(p["b_l"][0])
    return {"w_ih1": p["w_ih1"], "w_hh1": p["w_hh1"], "b1": p["b1"],
            "w_ih2": w_ih2, "w_hh2": w_hh2, "b2": b2,
            "w_l": w_l, "b_l": b_l}


# ---------------------------------------------------------------------------
# Pure-JAX reference (uses the real/unpadded params)
# ---------------------------------------------------------------------------
def lstm_layer_ref(x, w_ih_t, w_hh_t, b, hidden):
    S, B, _ = x.shape
    H = hidden

    def step(carry, x_t):
        h, c = carry
        gates = x_t @ w_ih_t + h @ w_hh_t + b
        i = jax.nn.sigmoid(gates[:, 0 * H:1 * H])
        f = jax.nn.sigmoid(gates[:, 1 * H:2 * H])
        g = jnp.tanh(gates[:, 2 * H:3 * H])
        o = jax.nn.sigmoid(gates[:, 3 * H:4 * H])
        c = f * c + i * g
        h = o * jnp.tanh(c)
        return (h, c), h

    init = (jnp.zeros((B, H), jnp.float32), jnp.zeros((B, H), jnp.float32))
    _, ys = lax.scan(step, init, x)
    return ys


def forward_ref(params, x, hidden1, hidden2):
    y1 = lstm_layer_ref(x, params["w_ih1"], params["w_hh1"], params["b1"], hidden1)
    y2 = lstm_layer_ref(y1, params["w_ih2"], params["w_hh2"], params["b2"], hidden2)
    s, b, h = y2.shape
    logits = y2.reshape(s, b * h) @ params["w_l"] + params["b_l"]
    return jax.nn.softmax(logits, axis=1)


# ---------------------------------------------------------------------------
if __name__ == "__main__":
    # Shapes consistent with the module's forward:
    #   x: (seq=8, batch=1, input_size=16); hidden1=128, hidden2=64, output=6
    # NOTE: the module couples the Linear's in_features to batch (h2*batch);
    # as in the PyTorch spec this kernel matches the batch it was built with.
    SEQ, BATCH, INPUT = 8, 1, 16
    H1, H2, OUT = 128, 64, 6
    HP2, OUTP = 128, 128        # lane-padded sizes used inside the kernel

    key = jax.random.PRNGKey(0)
    k_x, k_p = jax.random.split(key)
    x = jax.random.normal(k_x, (SEQ, BATCH, INPUT), jnp.float32)

    params = init_params(k_p, INPUT, H1, H2, OUT, BATCH)
    kparams = pad_params(params, H2, HP2, OUT, OUTP, BATCH)

    out = lstm_forward(kparams, x, out_size=OUT)
    out = jax.block_until_ready(out)

    ref = forward_ref(params, x, H1, H2)
    assert out.shape == (SEQ, OUT), out.shape
    assert jnp.allclose(jnp.sum(out, axis=1), 1.0, atol=5e-3)
    assert jnp.allclose(out, ref, rtol=2e-3, atol=2e-3), float(jnp.max(jnp.abs(out - ref)))

    print("KERNEL_OK")
</pallas_src>

<mosaic_0001>
module attributes {stable_mosaic.version = 11 : i64} {
  func.func @fused_lstm_kernel(%arg0: memref<8x16xf32, #tpu.memory_space<vmem>>, %arg1: memref<16x512xf32, #tpu.memory_space<vmem>>, %arg2: memref<128x512xf32, #tpu.memory_space<vmem>>, %arg3: memref<1x512xf32, #tpu.memory_space<vmem>>, %arg4: memref<128x512xf32, #tpu.memory_space<vmem>>, %arg5: memref<128x512xf32, #tpu.memory_space<vmem>>, %arg6: memref<1x512xf32, #tpu.memory_space<vmem>>, %arg7: memref<128x128xf32, #tpu.memory_space<vmem>>, %arg8: memref<1x128xf32, #tpu.memory_space<vmem>>, %arg9: memref<8x128xf32, #tpu.memory_space<vmem>>, %arg10: memref<8x128xf32, #tpu.memory_space<vmem>>, %arg11: memref<8x128xf32, #tpu.memory_space<vmem>>) attributes {dimension_semantics = [], scalar_prefetch = 0 : i64, scratch_operands = 2 : i64, tpu.core_type = #tpu.core_type<tc>} {
    %c0 = arith.constant 0 : index
    %c0_0 = arith.constant 0 : index
    %0 = vector.load %arg0[%c0, %c0_0] : memref<8x16xf32, #tpu.memory_space<vmem>>, vector<8x16xf32>
    %c0_1 = arith.constant 0 : index
    %c0_2 = arith.constant 0 : index
    %1 = vector.load %arg1[%c0_1, %c0_2] : memref<16x512xf32, #tpu.memory_space<vmem>>, vector<16x512xf32>
    %cst = arith.constant dense<0.000000e+00> : vector<8x512xf32>
    %2 = tpu.matmul %0, %1, %cst {dimension_numbers = #tpu.dot_dimension_numbers<[1], [0], [0], [1], [0, 0, 1, 1], [], []>} : vector<8x16xf32>, vector<16x512xf32>, vector<8x512xf32> -> vector<8x512xf32>
    %c0_3 = arith.constant 0 : index
    %c0_4 = arith.constant 0 : index
    %3 = vector.load %arg3[%c0_3, %c0_4] : memref<1x512xf32, #tpu.memory_space<vmem>>, vector<1x512xf32>
    %4 = vector.broadcast %3 : vector<1x512xf32> to vector<8x512xf32>
    %5 = arith.addf %2, %4 : vector<8x512xf32>
    %cst_5 = arith.constant 0.000000e+00 : f32
    %6 = vector.broadcast %cst_5 : f32 to vector<1x128xf32>
    %cst_6 = arith.constant 0.000000e+00 : f32
    %7 = vector.broadcast %cst_6 : f32 to vector<1x128xf32>
    %c0_7 = arith.constant 0 : index
    %c0_8 = arith.constant 0 : index
    %8 = vector.load %arg2[%c0_7, %c0_8] : memref<128x512xf32, #tpu.memory_space<vmem>>, vector<128x512xf32>
    %cst_9 = arith.constant dense<0.000000e+00> : vector<1x512xf32>
    %9 = tpu.matmul %6, %8, %cst_9 {dimension_numbers = #tpu.dot_dimension_numbers<[1], [0], [0], [1], [0, 0, 1, 1], [], []>} : vector<1x128xf32>, vector<128x512xf32>, vector<1x512xf32> -> vector<1x512xf32>
    %10 = vector.extract_strided_slice %5 {offsets = [0, 0], sizes = [1, 512], strides = [1, 1]} : vector<8x512xf32> to vector<1x512xf32>
    %11 = arith.addf %9, %10 : vector<1x512xf32>
    %12 = vector.extract_strided_slice %11 {offsets = [0, 0], sizes = [1, 128], strides = [1, 1]} : vector<1x512xf32> to vector<1x128xf32>
    %13 = arith.negf %12 : vector<1x128xf32>
    %14 = math.exp %13 : vector<1x128xf32>
    %cst_10 = arith.constant 1.000000e+00 : f32
    %15 = vector.broadcast %cst_10 : f32 to vector<1x128xf32>
    %16 = arith.addf %15, %14 : vector<1x128xf32>
    %17 = arith.divf %15, %16 : vector<1x128xf32>
    %18 = vector.extract_strided_slice %11 {offsets = [0, 128], sizes = [1, 128], strides = [1, 1]} : vector<1x512xf32> to vector<1x128xf32>
    %19 = arith.negf %18 : vector<1x128xf32>
    %20 = math.exp %19 : vector<1x128xf32>
    %cst_11 = arith.constant 1.000000e+00 : f32
    %21 = vector.broadcast %cst_11 : f32 to vector<1x128xf32>
    %22 = arith.addf %21, %20 : vector<1x128xf32>
    %23 = arith.divf %21, %22 : vector<1x128xf32>
    %24 = vector.extract_strided_slice %11 {offsets = [0, 256], sizes = [1, 128], strides = [1, 1]} : vector<1x512xf32> to vector<1x128xf32>
    %25 = math.tanh %24 : vector<1x128xf32>
    %26 = vector.extract_strided_slice %11 {offsets = [0, 384], sizes = [1, 128], strides = [1, 1]} : vector<1x512xf32> to vector<1x128xf32>
    %27 = arith.negf %26 : vector<1x128xf32>
    %28 = math.exp %27 : vector<1x128xf32>
    %cst_12 = arith.constant 1.000000e+00 : f32
    %29 = vector.broadcast %cst_12 : f32 to vector<1x128xf32>
    %30 = arith.addf %29, %28 : vector<1x128xf32>
    %31 = arith.divf %29, %30 : vector<1x128xf32>
    %32 = arith.mulf %23, %7 : vector<1x128xf32>
    %33 = arith.mulf %17, %25 : vector<1x128xf32>
    %34 = arith.addf %32, %33 : vector<1x128xf32>
    %35 = math.tanh %34 : vector<1x128xf32>
    %36 = arith.mulf %31, %35 : vector<1x128xf32>
    %c0_13 = arith.constant 0 : index
    %c0_14 = arith.constant 0 : index
    %37 = vector.load %arg10[%c0_13, %c0_14] : memref<8x128xf32, #tpu.memory_space<vmem>>, vector<1x128xf32>
    tpu.vector_store %arg10[%c0_13, %c0_14], %36 {strides = array<i32>} : memref<8x128xf32, #tpu.memory_space<vmem>>, vector<1x128xf32>,
    %c0_15 = arith.constant 0 : index
    %c0_16 = arith.constant 0 : index
    %38 = vector.load %arg2[%c0_15, %c0_16] : memref<128x512xf32, #tpu.memory_space<vmem>>, vector<128x512xf32>
    %cst_17 = arith.constant dense<0.000000e+00> : vector<1x512xf32>
    %39 = tpu.matmul %36, %38, %cst_17 {dimension_numbers = #tpu.dot_dimension_numbers<[1], [0], [0], [1], [0, 0, 1, 1], [], []>} : vector<1x128xf32>, vector<128x512xf32>, vector<1x512xf32> -> vector<1x512xf32>
    %40 = vector.extract_strided_slice %5 {offsets = [1, 0], sizes = [1, 512], strides = [1, 1]} : vector<8x512xf32> to vector<1x512xf32>
    %41 = arith.addf %39, %40 : vector<1x512xf32>
    %42 = vector.extract_strided_slice %41 {offsets = [0, 0], sizes = [1, 128], strides = [1, 1]} : vector<1x512xf32> to vector<1x128xf32>
    %43 = arith.negf %42 : vector<1x128xf32>
    %44 = math.exp %43 : vector<1x128xf32>
    %cst_18 = arith.constant 1.000000e+00 : f32
    %45 = vector.broadcast %cst_18 : f32 to vector<1x128xf32>
    %46 = arith.addf %45, %44 : vector<1x128xf32>
    %47 = arith.divf %45, %46 : vector<1x128xf32>
    %48 = vector.extract_strided_slice %41 {offsets = [0, 128], sizes = [1, 128], strides = [1, 1]} : vector<1x512xf32> to vector<1x128xf32>
    %49 = arith.negf %48 : vector<1x128xf32>
    %50 = math.exp %49 : vector<1x128xf32>
    %cst_19 = arith.constant 1.000000e+00 : f32
    %51 = vector.broadcast %cst_19 : f32 to vector<1x128xf32>
    %52 = arith.addf %51, %50 : vector<1x128xf32>
    %53 = arith.divf %51, %52 : vector<1x128xf32>
    %54 = vector.extract_strided_slice %41 {offsets = [0, 256], sizes = [1, 128], strides = [1, 1]} : vector<1x512xf32> to vector<1x128xf32>
    %55 = math.tanh %54 : vector<1x128xf32>
    %56 = vector.extract_strided_slice %41 {offsets = [0, 384], sizes = [1, 128], strides = [1, 1]} : vector<1x512xf32> to vector<1x128xf32>
    %57 = arith.negf %56 : vector<1x128xf32>
    %58 = math.exp %57 : vector<1x128xf32>
    %cst_20 = arith.constant 1.000000e+00 : f32
    %59 = vector.broadcast %cst_20 : f32 to vector<1x128xf32>
    %60 = arith.addf %59, %58 : vector<1x128xf32>
    %61 = arith.divf %59, %60 : vector<1x128xf32>
    %62 = arith.mulf %53, %34 : vector<1x128xf32>
    %63 = arith.mulf %47, %55 : vector<1x128xf32>
    %64 = arith.addf %62, %63 : vector<1x128xf32>
    %65 = math.tanh %64 : vector<1x128xf32>
    %66 = arith.mulf %61, %65 : vector<1x128xf32>
    %c1 = arith.constant 1 : index
    %c0_21 = arith.constant 0 : index
    %67 = vector.load %arg10[%c1, %c0_21] : memref<8x128xf32, #tpu.memory_space<vmem>>, vector<1x128xf32>
    tpu.vector_store %arg10[%c1, %c0_21], %66 {strides = array<i32>} : memref<8x128xf32, #tpu.memory_space<vmem>>, vector<1x128xf32>,
    %c0_22 = arith.constant 0 : index
    %c0_23 = arith.constant 0 : index
    %68 = vector.load %arg2[%c0_22, %c0_23] : memref<128x512xf32, #tpu.memory_space<vmem>>, vector<128x512xf32>
    %cst_24 = arith.constant dense<0.000000e+00> : vector<1x512xf32>
    %69 = tpu.matmul %66, %68, %cst_24 {dimension_numbers = #tpu.dot_dimension_numbers<[1], [0], [0], [1], [0, 0, 1, 1], [], []>} : vector<1x128xf32>, vector<128x512xf32>, vector<1x512xf32> -> vector<1x512xf32>
    %70 = vector.extract_strided_slice %5 {offsets = [2, 0], sizes = [1, 512], strides = [1, 1]} : vector<8x512xf32> to vector<1x512xf32>
    %71 = arith.addf %69, %70 : vector<1x512xf32>
    %72 = vector.extract_strided_slice %71 {offsets = [0, 0], sizes = [1, 128], strides = [1, 1]} : vector<1x512xf32> to vector<1x128xf32>
    %73 = arith.negf %72 : vector<1x128xf32>
    %74 = math.exp %73 : vector<1x128xf32>
    %cst_25 = arith.constant 1.000000e+00 : f32
    %75 = vector.broadcast %cst_25 : f32 to vector<1x128xf32>
    %76 = arith.addf %75, %74 : vector<1x128xf32>
    %77 = arith.divf %75, %76 : vector<1x128xf32>
    %78 = vector.extract_strided_slice %71 {offsets = [0, 128], sizes = [1, 128], strides = [1, 1]} : vector<1x512xf32> to vector<1x128xf32>
    %79 = arith.negf %78 : vector<1x128xf32>
    %80 = math.exp %79 : vector<1x128xf32>
    %cst_26 = arith.constant 1.000000e+00 : f32
    %81 = vector.broadcast %cst_26 : f32 to vector<1x128xf32>
    %82 = arith.addf %81, %80 : vector<1x128xf32>
    %83 = arith.divf %81, %82 : vector<1x128xf32>
    %84 = vector.extract_strided_slice %71 {offsets = [0, 256], sizes = [1, 128], strides = [1, 1]} : vector<1x512xf32> to vector<1x128xf32>
    %85 = math.tanh %84 : vector<1x128xf32>
    %86 = vector.extract_strided_slice %71 {offsets = [0, 384], sizes = [1, 128], strides = [1, 1]} : vector<1x512xf32> to vector<1x128xf32>
    %87 = arith.negf %86 : vector<1x128xf32>
    %88 = math.exp %87 : vector<1x128xf32>
    %cst_27 = arith.constant 1.000000e+00 : f32
    %89 = vector.broadcast %cst_27 : f32 to vector<1x128xf32>
    %90 = arith.addf %89, %88 : vector<1x128xf32>
    %91 = arith.divf %89, %90 : vector<1x128xf32>
    %92 = arith.mulf %83, %64 : vector<1x128xf32>
    %93 = arith.mulf %77, %85 : vector<1x128xf32>
    %94 = arith.addf %92, %93 : vector<1x128xf32>
    %95 = math.tanh %94 : vector<1x128xf32>
    %96 = arith.mulf %91, %95 : vector<1x128xf32>
    %c2 = arith.constant 2 : index
    %c0_28 = arith.constant 0 : index
    %97 = vector.load %arg10[%c2, %c0_28] : memref<8x128xf32, #tpu.memory_space<vmem>>, vector<1x128xf32>
    tpu.vector_store %arg10[%c2, %c0_28], %96 {strides = array<i32>} : memref<8x128xf32, #tpu.memory_space<vmem>>, vector<1x128xf32>,
    %c0_29 = arith.constant 0 : index
    %c0_30 = arith.constant 0 : index
    %98 = vector.load %arg2[%c0_29, %c0_30] : memref<128x512xf32, #tpu.memory_space<vmem>>, vector<128x512xf32>
    %cst_31 = arith.constant dense<0.000000e+00> : vector<1x512xf32>
    %99 = tpu.matmul %96, %98, %cst_31 {dimension_numbers = #tpu.dot_dimension_numbers<[1], [0], [0], [1], [0, 0, 1, 1], [], []>} : vector<1x128xf32>, vector<128x512xf32>, vector<1x512xf32> -> vector<1x512xf32>
    %100 = vector.extract_strided_slice %5 {offsets = [3, 0], sizes = [1, 512], strides = [1, 1]} : vector<8x512xf32> to vector<1x512xf32>
    %101 = arith.addf %99, %100 : vector<1x512xf32>
    %102 = vector.extract_strided_slice %101 {offsets = [0, 0], sizes = [1, 128], strides = [1, 1]} : vector<1x512xf32> to vector<1x128xf32>
    %103 = arith.negf %102 : vector<1x128xf32>
    %104 = math.exp %103 : vector<1x128xf32>
    %cst_32 = arith.constant 1.000000e+00 : f32
    %105 = vector.broadcast %cst_32 : f32 to vector<1x128xf32>
    %106 = arith.addf %105, %104 : vector<1x128xf32>
    %107 = arith.divf %105, %106 : vector<1x128xf32>
    %108 = vector.extract_strided_slice %101 {offsets = [0, 128], sizes = [1, 128], strides = [1, 1]} : vector<1x512xf32> to vector<1x128xf32>
    %109 = arith.negf %108 : vector<1x128xf32>
    %110 = math.exp %109 : vector<1x128xf32>
    %cst_33 = arith.constant 1.000000e+00 : f32
    %111 = vector.broadcast %cst_33 : f32 to vector<1x128xf32>
    %112 = arith.addf %111, %110 : vector<1x128xf32>
    %113 = arith.divf %111, %112 : vector<1x128xf32>
    %114 = vector.extract_strided_slice %101 {offsets = [0, 256], sizes = [1, 128], strides = [1, 1]} : vector<1x512xf32> to vector<1x128xf32>
    %115 = math.tanh %114 : vector<1x128xf32>
    %116 = vector.extract_strided_slice %101 {offsets = [0, 384], sizes = [1, 128], strides = [1, 1]} : vector<1x512xf32> to vector<1x128xf32>
    %117 = arith.negf %116 : vector<1x128xf32>
    %118 = math.exp %117 : vector<1x128xf32>
    %cst_34 = arith.constant 1.000000e+00 : f32
    %119 = vector.broadcast %cst_34 : f32 to vector<1x128xf32>
    %120 = arith.addf %119, %118 : vector<1x128xf32>
    %121 = arith.divf %119, %120 : vector<1x128xf32>
    %122 = arith.mulf %113, %94 : vector<1x128xf32>
    %123 = arith.mulf %107, %115 : vector<1x128xf32>
    %124 = arith.addf %122, %123 : vector<1x128xf32>
    %125 = math.tanh %124 : vector<1x128xf32>
    %126 = arith.mulf %121, %125 : vector<1x128xf32>
    %c3 = arith.constant 3 : index
    %c0_35 = arith.constant 0 : index
    %127 = vector.load %arg10[%c3, %c0_35] : memref<8x128xf32, #tpu.memory_space<vmem>>, vector<1x128xf32>
    tpu.vector_store %arg10[%c3, %c0_35], %126 {strides = array<i32>} : memref<8x128xf32, #tpu.memory_space<vmem>>, vector<1x128xf32>,
    %c0_36 = arith.constant 0 : index
    %c0_37 = arith.constant 0 : index
    %128 = vector.load %arg2[%c0_36, %c0_37] : memref<128x512xf32, #tpu.memory_space<vmem>>, vector<128x512xf32>
    %cst_38 = arith.constant dense<0.000000e+00> : vector<1x512xf32>
    %129 = tpu.matmul %126, %128, %cst_38 {dimension_numbers = #tpu.dot_dimension_numbers<[1], [0], [0], [1], [0, 0, 1, 1], [], []>} : vector<1x128xf32>, vector<128x512xf32>, vector<1x512xf32> -> vector<1x512xf32>
    %130 = vector.extract_strided_slice %5 {offsets = [4, 0], sizes = [1, 512], strides = [1, 1]} : vector<8x512xf32> to vector<1x512xf32>
    %131 = arith.addf %129, %130 : vector<1x512xf32>
    %132 = vector.extract_strided_slice %131 {offsets = [0, 0], sizes = [1, 128], strides = [1, 1]} : vector<1x512xf32> to vector<1x128xf32>
    %133 = arith.negf %132 : vector<1x128xf32>
    %134 = math.exp %133 : vector<1x128xf32>
    %cst_39 = arith.constant 1.000000e+00 : f32
    %135 = vector.broadcast %cst_39 : f32 to vector<1x128xf32>
    %136 = arith.addf %135, %134 : vector<1x128xf32>
    %137 = arith.divf %135, %136 : vector<1x128xf32>
    %138 = vector.extract_strided_slice %131 {offsets = [0, 128], sizes = [1, 128], strides = [1, 1]} : vector<1x512xf32> to vector<1x128xf32>
    %139 = arith.negf %138 : vector<1x128xf32>
    %140 = math.exp %139 : vector<1x128xf32>
    %cst_40 = arith.constant 1.000000e+00 : f32
    %141 = vector.broadcast %cst_40 : f32 to vector<1x128xf32>
    %142 = arith.addf %141, %140 : vector<1x128xf32>
    %143 = arith.divf %141, %142 : vector<1x128xf32>
    %144 = vector.extract_strided_slice %131 {offsets = [0, 256], sizes = [1, 128], strides = [1, 1]} : vector<1x512xf32> to vector<1x128xf32>
    %145 = math.tanh %144 : vector<1x128xf32>
    %146 = vector.extract_strided_slice %131 {offsets = [0, 384], sizes = [1, 128], strides = [1, 1]} : vector<1x512xf32> to vector<1x128xf32>
    %147 = arith.negf %146 : vector<1x128xf32>
    %148 = math.exp %147 : vector<1x128xf32>
    %cst_41 = arith.constant 1.000000e+00 : f32
    %149 = vector.broadcast %cst_41 : f32 to vector<1x128xf32>
    %150 = arith.addf %149, %148 : vector<1x128xf32>
    %151 = arith.divf %149, %150 : vector<1x128xf32>
    %152 = arith.mulf %143, %124 : vector<1x128xf32>
    %153 = arith.mulf %137, %145 : vector<1x128xf32>
    %154 = arith.addf %152, %153 : vector<1x128xf32>
    %155 = math.tanh %154 : vector<1x128xf32>
    %156 = arith.mulf %151, %155 : vector<1x128xf32>
    %c4 = arith.constant 4 : index
    %c0_42 = arith.constant 0 : index
    %157 = vector.load %arg10[%c4, %c0_42] : memref<8x128xf32, #tpu.memory_space<vmem>>, vector<1x128xf32>
    tpu.vector_store %arg10[%c4, %c0_42], %156 {strides = array<i32>} : memref<8x128xf32, #tpu.memory_space<vmem>>, vector<1x128xf32>,
    %c0_43 = arith.constant 0 : index
    %c0_44 = arith.constant 0 : index
    %158 = vector.load %arg2[%c0_43, %c0_44] : memref<128x512xf32, #tpu.memory_space<vmem>>, vector<128x512xf32>
    %cst_45 = arith.constant dense<0.000000e+00> : vector<1x512xf32>
    %159 = tpu.matmul %156, %158, %cst_45 {dimension_numbers = #tpu.dot_dimension_numbers<[1], [0], [0], [1], [0, 0, 1, 1], [], []>} : vector<1x128xf32>, vector<128x512xf32>, vector<1x512xf32> -> vector<1x512xf32>
    %160 = vector.extract_strided_slice %5 {offsets = [5, 0], sizes = [1, 512], strides = [1, 1]} : vector<8x512xf32> to vector<1x512xf32>
    %161 = arith.addf %159, %160 : vector<1x512xf32>
    %162 = vector.extract_strided_slice %161 {offsets = [0, 0], sizes = [1, 128], strides = [1, 1]} : vector<1x512xf32> to vector<1x128xf32>
    %163 = arith.negf %162 : vector<1x128xf32>
    %164 = math.exp %163 : vector<1x128xf32>
    %cst_46 = arith.constant 1.000000e+00 : f32
    %165 = vector.broadcast %cst_46 : f32 to vector<1x128xf32>
    %166 = arith.addf %165, %164 : vector<1x128xf32>
    %167 = arith.divf %165, %166 : vector<1x128xf32>
    %168 = vector.extract_strided_slice %161 {offsets = [0, 128], sizes = [1, 128], strides = [1, 1]} : vector<1x512xf32> to vector<1x128xf32>
    %169 = arith.negf %168 : vector<1x128xf32>
    %170 = math.exp %169 : vector<1x128xf32>
    %cst_47 = arith.constant 1.000000e+00 : f32
    %171 = vector.broadcast %cst_47 : f32 to vector<1x128xf32>
    %172 = arith.addf %171, %170 : vector<1x128xf32>
    %173 = arith.divf %171, %172 : vector<1x128xf32>
    %174 = vector.extract_strided_slice %161 {offsets = [0, 256], sizes = [1, 128], strides = [1, 1]} : vector<1x512xf32> to vector<1x128xf32>
    %175 = math.tanh %174 : vector<1x128xf32>
    %176 = vector.extract_strided_slice %161 {offsets = [0, 384], sizes = [1, 128], strides = [1, 1]} : vector<1x512xf32> to vector<1x128xf32>
    %177 = arith.negf %176 : vector<1x128xf32>
    %178 = math.exp %177 : vector<1x128xf32>
    %cst_48 = arith.constant 1.000000e+00 : f32
    %179 = vector.broadcast %cst_48 : f32 to vector<1x128xf32>
    %180 = arith.addf %179, %178 : vector<1x128xf32>
    %181 = arith.divf %179, %180 : vector<1x128xf32>
    %182 = arith.mulf %173, %154 : vector<1x128xf32>
    %183 = arith.mulf %167, %175 : vector<1x128xf32>
    %184 = arith.addf %182, %183 : vector<1x128xf32>
    %185 = math.tanh %184 : vector<1x128xf32>
    %186 = arith.mulf %181, %185 : vector<1x128xf32>
    %c5 = arith.constant 5 : index
    %c0_49 = arith.constant 0 : index
    %187 = vector.load %arg10[%c5, %c0_49] : memref<8x128xf32, #tpu.memory_space<vmem>>, vector<1x128xf32>
    tpu.vector_store %arg10[%c5, %c0_49], %186 {strides = array<i32>} : memref<8x128xf32, #tpu.memory_space<vmem>>, vector<1x128xf32>,
    %c0_50 = arith.constant 0 : index
    %c0_51 = arith.constant 0 : index
    %188 = vector.load %arg2[%c0_50, %c0_51] : memref<128x512xf32, #tpu.memory_space<vmem>>, vector<128x512xf32>
    %cst_52 = arith.constant dense<0.000000e+00> : vector<1x512xf32>
    %189 = tpu.matmul %186, %188, %cst_52 {dimension_numbers = #tpu.dot_dimension_numbers<[1], [0], [0], [1], [0, 0, 1, 1], [], []>} : vector<1x128xf32>, vector<128x512xf32>, vector<1x512xf32> -> vector<1x512xf32>
    %190 = vector.extract_strided_slice %5 {offsets = [6, 0], sizes = [1, 512], strides = [1, 1]} : vector<8x512xf32> to vector<1x512xf32>
    %191 = arith.addf %189, %190 : vector<1x512xf32>
    %192 = vector.extract_strided_slice %191 {offsets = [0, 0], sizes = [1, 128], strides = [1, 1]} : vector<1x512xf32> to vector<1x128xf32>
    %193 = arith.negf %192 : vector<1x128xf32>
    %194 = math.exp %193 : vector<1x128xf32>
    %cst_53 = arith.constant 1.000000e+00 : f32
    %195 = vector.broadcast %cst_53 : f32 to vector<1x128xf32>
    %196 = arith.addf %195, %194 : vector<1x128xf32>
    %197 = arith.divf %195, %196 : vector<1x128xf32>
    %198 = vector.extract_strided_slice %191 {offsets = [0, 128], sizes = [1, 128], strides = [1, 1]} : vector<1x512xf32> to vector<1x128xf32>
    %199 = arith.negf %198 : vector<1x128xf32>
    %200 = math.exp %199 : vector<1x128xf32>
    %cst_54 = arith.constant 1.000000e+00 : f32
    %201 = vector.broadcast %cst_54 : f32 to vector<1x128xf32>
    %202 = arith.addf %201, %200 : vector<1x128xf32>
    %203 = arith.divf %201, %202 : vector<1x128xf32>
    %204 = vector.extract_strided_slice %191 {offsets = [0, 256], sizes = [1, 128], strides = [1, 1]} : vector<1x512xf32> to vector<1x128xf32>
    %205 = math.tanh %204 : vector<1x128xf32>
    %206 = vector.extract_strided_slice %191 {offsets = [0, 384], sizes = [1, 128], strides = [1, 1]} : vector<1x512xf32> to vector<1x128xf32>
    %207 = arith.negf %206 : vector<1x128xf32>
    %208 = math.exp %207 : vector<1x128xf32>
    %cst_55 = arith.constant 1.000000e+00 : f32
    %209 = vector.broadcast %cst_55 : f32 to vector<1x128xf32>
    %210 = arith.addf %209, %208 : vector<1x128xf32>
    %211 = arith.divf %209, %210 : vector<1x128xf32>
    %212 = arith.mulf %203, %184 : vector<1x128xf32>
    %213 = arith.mulf %197, %205 : vector<1x128xf32>
    %214 = arith.addf %212, %213 : vector<1x128xf32>
    %215 = math.tanh %214 : vector<1x128xf32>
    %216 = arith.mulf %211, %215 : vector<1x128xf32>
    %c6 = arith.constant 6 : index
    %c0_56 = arith.constant 0 : index
    %217 = vector.load %arg10[%c6, %c0_56] : memref<8x128xf32, #tpu.memory_space<vmem>>, vector<1x128xf32>
    tpu.vector_store %arg10[%c6, %c0_56], %216 {strides = array<i32>} : memref<8x128xf32, #tpu.memory_space<vmem>>, vector<1x128xf32>,
    %c0_57 = arith.constant 0 : index
    %c0_58 = arith.constant 0 : index
    %218 = vector.load %arg2[%c0_57, %c0_58] : memref<128x512xf32, #tpu.memory_space<vmem>>, vector<128x512xf32>
    %cst_59 = arith.constant dense<0.000000e+00> : vector<1x512xf32>
    %219 = tpu.matmul %216, %218, %cst_59 {dimension_numbers = #tpu.dot_dimension_numbers<[1], [0], [0], [1], [0, 0, 1, 1], [], []>} : vector<1x128xf32>, vector<128x512xf32>, vector<1x512xf32> -> vector<1x512xf32>
    %220 = vector.extract_strided_slice %5 {offsets = [7, 0], sizes = [1, 512], strides = [1, 1]} : vector<8x512xf32> to vector<1x512xf32>
    %221 = arith.addf %219, %220 : vector<1x512xf32>
    %222 = vector.extract_strided_slice %221 {offsets = [0, 0], sizes = [1, 128], strides = [1, 1]} : vector<1x512xf32> to vector<1x128xf32>
    %223 = arith.negf %222 : vector<1x128xf32>
    %224 = math.exp %223 : vector<1x128xf32>
    %cst_60 = arith.constant 1.000000e+00 : f32
    %225 = vector.broadcast %cst_60 : f32 to vector<1x128xf32>
    %226 = arith.addf %225, %224 : vector<1x128xf32>
    %227 = arith.divf %225, %226 : vector<1x128xf32>
    %228 = vector.extract_strided_slice %221 {offsets = [0, 128], sizes = [1, 128], strides = [1, 1]} : vector<1x512xf32> to vector<1x128xf32>
    %229 = arith.negf %228 : vector<1x128xf32>
    %230 = math.exp %229 : vector<1x128xf32>
    %cst_61 = arith.constant 1.000000e+00 : f32
    %231 = vector.broadcast %cst_61 : f32 to vector<1x128xf32>
    %232 = arith.addf %231, %230 : vector<1x128xf32>
    %233 = arith.divf %231, %232 : vector<1x128xf32>
    %234 = vector.extract_strided_slice %221 {offsets = [0, 256], sizes = [1, 128], strides = [1, 1]} : vector<1x512xf32> to vector<1x128xf32>
    %235 = math.tanh %234 : vector<1x128xf32>
    %236 = vector.extract_strided_slice %221 {offsets = [0, 384], sizes = [1, 128], strides = [1, 1]} : vector<1x512xf32> to vector<1x128xf32>
    %237 = arith.negf %236 : vector<1x128xf32>
    %238 = math.exp %237 : vector<1x128xf32>
    %cst_62 = arith.constant 1.000000e+00 : f32
    %239 = vector.broadcast %cst_62 : f32 to vector<1x128xf32>
    %240 = arith.addf %239, %238 : vector<1x128xf32>
    %241 = arith.divf %239, %240 : vector<1x128xf32>
    %242 = arith.mulf %233, %214 : vector<1x128xf32>
    %243 = arith.mulf %227, %235 : vector<1x128xf32>
    %244 = arith.addf %242, %243 : vector<1x128xf32>
    %245 = math.tanh %244 : vector<1x128xf32>
    %246 = arith.mulf %241, %245 : vector<1x128xf32>
    %c7 = arith.constant 7 : index
    %c0_63 = arith.constant 0 : index
    %247 = vector.load %arg10[%c7, %c0_63] : memref<8x128xf32, #tpu.memory_space<vmem>>, vector<1x128xf32>
    tpu.vector_store %arg10[%c7, %c0_63], %246 {strides = array<i32>} : memref<8x128xf32, #tpu.memory_space<vmem>>, vector<1x128xf32>,
    %c0_64 = arith.constant 0 : index
    %c0_65 = arith.constant 0 : index
    %248 = vector.load %arg10[%c0_64, %c0_65] : memref<8x128xf32, #tpu.memory_space<vmem>>, vector<8x128xf32>
    %c0_66 = arith.constant 0 : index
    %c0_67 = arith.constant 0 : index
    %249 = vector.load %arg4[%c0_66, %c0_67] : memref<128x512xf32, #tpu.memory_space<vmem>>, vector<128x512xf32>
    %cst_68 = arith.constant dense<0.000000e+00> : vector<8x512xf32>
    %250 = tpu.matmul %248, %249, %cst_68 {dimension_numbers = #tpu.dot_dimension_numbers<[1], [0], [0], [1], [0, 0, 1, 1], [], []>} : vector<8x128xf32>, vector<128x512xf32>, vector<8x512xf32> -> vector<8x512xf32>
    %c0_69 = arith.constant 0 : index
    %c0_70 = arith.constant 0 : index
    %251 = vector.load %arg6[%c0_69, %c0_70] : memref<1x512xf32, #tpu.memory_space<vmem>>, vector<1x512xf32>
    %252 = vector.broadcast %251 : vector<1x512xf32> to vector<8x512xf32>
    %253 = arith.addf %250, %252 : vector<8x512xf32>
    %cst_71 = arith.constant 0.000000e+00 : f32
    %254 = vector.broadcast %cst_71 : f32 to vector<1x128xf32>
    %cst_72 = arith.constant 0.000000e+00 : f32
    %255 = vector.broadcast %cst_72 : f32 to vector<1x128xf32>
    %c0_73 = arith.constant 0 : index
    %c0_74 = arith.constant 0 : index
    %256 = vector.load %arg5[%c0_73, %c0_74] : memref<128x512xf32, #tpu.memory_space<vmem>>, vector<128x512xf32>
    %cst_75 = arith.constant dense<0.000000e+00> : vector<1x512xf32>
    %257 = tpu.matmul %254, %256, %cst_75 {dimension_numbers = #tpu.dot_dimension_numbers<[1], [0], [0], [1], [0, 0, 1, 1], [], []>} : vector<1x128xf32>, vector<128x512xf32>, vector<1x512xf32> -> vector<1x512xf32>
    %258 = vector.extract_strided_slice %253 {offsets = [0, 0], sizes = [1, 512], strides = [1, 1]} : vector<8x512xf32> to vector<1x512xf32>
    %259 = arith.addf %257, %258 : vector<1x512xf32>
    %260 = vector.extract_strided_slice %259 {offsets = [0, 0], sizes = [1, 128], strides = [1, 1]} : vector<1x512xf32> to vector<1x128xf32>
    %261 = arith.negf %260 : vector<1x128xf32>
    %262 = math.exp %261 : vector<1x128xf32>
    %cst_76 = arith.constant 1.000000e+00 : f32
    %263 = vector.broadcast %cst_76 : f32 to vector<1x128xf32>
    %264 = arith.addf %263, %262 : vector<1x128xf32>
    %265 = arith.divf %263, %264 : vector<1x128xf32>
    %266 = vector.extract_strided_slice %259 {offsets = [0, 128], sizes = [1, 128], strides = [1, 1]} : vector<1x512xf32> to vector<1x128xf32>
    %267 = arith.negf %266 : vector<1x128xf32>
    %268 = math.exp %267 : vector<1x128xf32>
    %cst_77 = arith.constant 1.000000e+00 : f32
    %269 = vector.broadcast %cst_77 : f32 to vector<1x128xf32>
    %270 = arith.addf %269, %268 : vector<1x128xf32>
    %271 = arith.divf %269, %270 : vector<1x128xf32>
    %272 = vector.extract_strided_slice %259 {offsets = [0, 256], sizes = [1, 128], strides = [1, 1]} : vector<1x512xf32> to vector<1x128xf32>
    %273 = math.tanh %272 : vector<1x128xf32>
    %274 = vector.extract_strided_slice %259 {offsets = [0, 384], sizes = [1, 128], strides = [1, 1]} : vector<1x512xf32> to vector<1x128xf32>
    %275 = arith.negf %274 : vector<1x128xf32>
    %276 = math.exp %275 : vector<1x128xf32>
    %cst_78 = arith.constant 1.000000e+00 : f32
    %277 = vector.broadcast %cst_78 : f32 to vector<1x128xf32>
    %278 = arith.addf %277, %276 : vector<1x128xf32>
    %279 = arith.divf %277, %278 : vector<1x128xf32>
    %280 = arith.mulf %271, %255 : vector<1x128xf32>
    %281 = arith.mulf %265, %273 : vector<1x128xf32>
    %282 = arith.addf %280, %281 : vector<1x128xf32>
    %283 = math.tanh %282 : vector<1x128xf32>
    %284 = arith.mulf %279, %283 : vector<1x128xf32>
    %c0_79 = arith.constant 0 : index
    %c0_80 = arith.constant 0 : index
    %285 = vector.load %arg11[%c0_79, %c0_80] : memref<8x128xf32, #tpu.memory_space<vmem>>, vector<1x128xf32>
    tpu.vector_store %arg11[%c0_79, %c0_80], %284 {strides = array<i32>} : memref<8x128xf32, #tpu.memory_space<vmem>>, vector<1x128xf32>,
    %c0_81 = arith.constant 0 : index
    %c0_82 = arith.constant 0 : index
    %286 = vector.load %arg5[%c0_81, %c0_82] : memref<128x512xf32, #tpu.memory_space<vmem>>, vector<128x512xf32>
    %cst_83 = arith.constant dense<0.000000e+00> : vector<1x512xf32>
    %287 = tpu.matmul %284, %286, %cst_83 {dimension_numbers = #tpu.dot_dimension_numbers<[1], [0], [0], [1], [0, 0, 1, 1], [], []>} : vector<1x128xf32>, vector<128x512xf32>, vector<1x512xf32> -> vector<1x512xf32>
    %288 = vector.extract_strided_slice %253 {offsets = [1, 0], sizes = [1, 512], strides = [1, 1]} : vector<8x512xf32> to vector<1x512xf32>
    %289 = arith.addf %287, %288 : vector<1x512xf32>
    %290 = vector.extract_strided_slice %289 {offsets = [0, 0], sizes = [1, 128], strides = [1, 1]} : vector<1x512xf32> to vector<1x128xf32>
    %291 = arith.negf %290 : vector<1x128xf32>
    %292 = math.exp %291 : vector<1x128xf32>
    %cst_84 = arith.constant 1.000000e+00 : f32
    %293 = vector.broadcast %cst_84 : f32 to vector<1x128xf32>
    %294 = arith.addf %293, %292 : vector<1x128xf32>
    %295 = arith.divf %293, %294 : vector<1x128xf32>
    %296 = vector.extract_strided_slice %289 {offsets = [0, 128], sizes = [1, 128], strides = [1, 1]} : vector<1x512xf32> to vector<1x128xf32>
    %297 = arith.negf %296 : vector<1x128xf32>
    %298 = math.exp %297 : vector<1x128xf32>
    %cst_85 = arith.constant 1.000000e+00 : f32
    %299 = vector.broadcast %cst_85 : f32 to vector<1x128xf32>
    %300 = arith.addf %299, %298 : vector<1x128xf32>
    %301 = arith.divf %299, %300 : vector<1x128xf32>
    %302 = vector.extract_strided_slice %289 {offsets = [0, 256], sizes = [1, 128], strides = [1, 1]} : vector<1x512xf32> to vector<1x128xf32>
    %303 = math.tanh %302 : vector<1x128xf32>
    %304 = vector.extract_strided_slice %289 {offsets = [0, 384], sizes = [1, 128], strides = [1, 1]} : vector<1x512xf32> to vector<1x128xf32>
    %305 = arith.negf %304 : vector<1x128xf32>
    %306 = math.exp %305 : vector<1x128xf32>
    %cst_86 = arith.constant 1.000000e+00 : f32
    %307 = vector.broadcast %cst_86 : f32 to vector<1x128xf32>
    %308 = arith.addf %307, %306 : vector<1x128xf32>
    %309 = arith.divf %307, %308 : vector<1x128xf32>
    %310 = arith.mulf %301, %282 : vector<1x128xf32>
    %311 = arith.mulf %295, %303 : vector<1x128xf32>
    %312 = arith.addf %310, %311 : vector<1x128xf32>
    %313 = math.tanh %312 : vector<1x128xf32>
    %314 = arith.mulf %309, %313 : vector<1x128xf32>
    %c1_87 = arith.constant 1 : index
    %c0_88 = arith.constant 0 : index
    %315 = vector.load %arg11[%c1_87, %c0_88] : memref<8x128xf32, #tpu.memory_space<vmem>>, vector<1x128xf32>
    tpu.vector_store %arg11[%c1_87, %c0_88], %314 {strides = array<i32>} : memref<8x128xf32, #tpu.memory_space<vmem>>, vector<1x128xf32>,
    %c0_89 = arith.constant 0 : index
    %c0_90 = arith.constant 0 : index
    %316 = vector.load %arg5[%c0_89, %c0_90] : memref<128x512xf32, #tpu.memory_space<vmem>>, vector<128x512xf32>
    %cst_91 = arith.constant dense<0.000000e+00> : vector<1x512xf32>
    %317 = tpu.matmul %314, %316, %cst_91 {dimension_numbers = #tpu.dot_dimension_numbers<[1], [0], [0], [1], [0, 0, 1, 1], [], []>} : vector<1x128xf32>, vector<128x512xf32>, vector<1x512xf32> -> vector<1x512xf32>
    %318 = vector.extract_strided_slice %253 {offsets = [2, 0], sizes = [1, 512], strides = [1, 1]} : vector<8x512xf32> to vector<1x512xf32>
    %319 = arith.addf %317, %318 : vector<1x512xf32>
    %320 = vector.extract_strided_slice %319 {offsets = [0, 0], sizes = [1, 128], strides = [1, 1]} : vector<1x512xf32> to vector<1x128xf32>
    %321 = arith.negf %320 : vector<1x128xf32>
    %322 = math.exp %321 : vector<1x128xf32>
    %cst_92 = arith.constant 1.000000e+00 : f32
    %323 = vector.broadcast %cst_92 : f32 to vector<1x128xf32>
    %324 = arith.addf %323, %322 : vector<1x128xf32>
    %325 = arith.divf %323, %324 : vector<1x128xf32>
    %326 = vector.extract_strided_slice %319 {offsets = [0, 128], sizes = [1, 128], strides = [1, 1]} : vector<1x512xf32> to vector<1x128xf32>
    %327 = arith.negf %326 : vector<1x128xf32>
    %328 = math.exp %327 : vector<1x128xf32>
    %cst_93 = arith.constant 1.000000e+00 : f32
    %329 = vector.broadcast %cst_93 : f32 to vector<1x128xf32>
    %330 = arith.addf %329, %328 : vector<1x128xf32>
    %331 = arith.divf %329, %330 : vector<1x128xf32>
    %332 = vector.extract_strided_slice %319 {offsets = [0, 256], sizes = [1, 128], strides = [1, 1]} : vector<1x512xf32> to vector<1x128xf32>
    %333 = math.tanh %332 : vector<1x128xf32>
    %334 = vector.extract_strided_slice %319 {offsets = [0, 384], sizes = [1, 128], strides = [1, 1]} : vector<1x512xf32> to vector<1x128xf32>
    %335 = arith.negf %334 : vector<1x128xf32>
    %336 = math.exp %335 : vector<1x128xf32>
    %cst_94 = arith.constant 1.000000e+00 : f32
    %337 = vector.broadcast %cst_94 : f32 to vector<1x128xf32>
    %338 = arith.addf %337, %336 : vector<1x128xf32>
    %339 = arith.divf %337, %338 : vector<1x128xf32>
    %340 = arith.mulf %331, %312 : vector<1x128xf32>
    %341 = arith.mulf %325, %333 : vector<1x128xf32>
    %342 = arith.addf %340, %341 : vector<1x128xf32>
    %343 = math.tanh %342 : vector<1x128xf32>
    %344 = arith.mulf %339, %343 : vector<1x128xf32>
    %c2_95 = arith.constant 2 : index
    %c0_96 = arith.constant 0 : index
    %345 = vector.load %arg11[%c2_95, %c0_96] : memref<8x128xf32, #tpu.memory_space<vmem>>, vector<1x128xf32>
    tpu.vector_store %arg11[%c2_95, %c0_96], %344 {strides = array<i32>} : memref<8x128xf32, #tpu.memory_space<vmem>>, vector<1x128xf32>,
    %c0_97 = arith.constant 0 : index
    %c0_98 = arith.constant 0 : index
    %346 = vector.load %arg5[%c0_97, %c0_98] : memref<128x512xf32, #tpu.memory_space<vmem>>, vector<128x512xf32>
    %cst_99 = arith.constant dense<0.000000e+00> : vector<1x512xf32>
    %347 = tpu.matmul %344, %346, %cst_99 {dimension_numbers = #tpu.dot_dimension_numbers<[1], [0], [0], [1], [0, 0, 1, 1], [], []>} : vector<1x128xf32>, vector<128x512xf32>, vector<1x512xf32> -> vector<1x512xf32>
    %348 = vector.extract_strided_slice %253 {offsets = [3, 0], sizes = [1, 512], strides = [1, 1]} : vector<8x512xf32> to vector<1x512xf32>
    %349 = arith.addf %347, %348 : vector<1x512xf32>
    %350 = vector.extract_strided_slice %349 {offsets = [0, 0], sizes = [1, 128], strides = [1, 1]} : vector<1x512xf32> to vector<1x128xf32>
    %351 = arith.negf %350 : vector<1x128xf32>
    %352 = math.exp %351 : vector<1x128xf32>
    %cst_100 = arith.constant 1.000000e+00 : f32
    %353 = vector.broadcast %cst_100 : f32 to vector<1x128xf32>
    %354 = arith.addf %353, %352 : vector<1x128xf32>
    %355 = arith.divf %353, %354 : vector<1x128xf32>
    %356 = vector.extract_strided_slice %349 {offsets = [0, 128], sizes = [1, 128], strides = [1, 1]} : vector<1x512xf32> to vector<1x128xf32>
    %357 = arith.negf %356 : vector<1x128xf32>
    %358 = math.exp %357 : vector<1x128xf32>
    %cst_101 = arith.constant 1.000000e+00 : f32
    %359 = vector.broadcast %cst_101 : f32 to vector<1x128xf32>
    %360 = arith.addf %359, %358 : vector<1x128xf32>
    %361 = arith.divf %359, %360 : vector<1x128xf32>
    %362 = vector.extract_strided_slice %349 {offsets = [0, 256], sizes = [1, 128], strides = [1, 1]} : vector<1x512xf32> to vector<1x128xf32>
    %363 = math.tanh %362 : vector<1x128xf32>
    %364 = vector.extract_strided_slice %349 {offsets = [0, 384], sizes = [1, 128], strides = [1, 1]} : vector<1x512xf32> to vector<1x128xf32>
    %365 = arith.negf %364 : vector<1x128xf32>
    %366 = math.exp %365 : vector<1x128xf32>
    %cst_102 = arith.constant 1.000000e+00 : f32
    %367 = vector.broadcast %cst_102 : f32 to vector<1x128xf32>
    %368 = arith.addf %367, %366 : vector<1x128xf32>
    %369 = arith.divf %367, %368 : vector<1x128xf32>
    %370 = arith.mulf %361, %342 : vector<1x128xf32>
    %371 = arith.mulf %355, %363 : vector<1x128xf32>
    %372 = arith.addf %370, %371 : vector<1x128xf32>
    %373 = math.tanh %372 : vector<1x128xf32>
    %374 = arith.mulf %369, %373 : vector<1x128xf32>
    %c3_103 = arith.constant 3 : index
    %c0_104 = arith.constant 0 : index
    %375 = vector.load %arg11[%c3_103, %c0_104] : memref<8x128xf32, #tpu.memory_space<vmem>>, vector<1x128xf32>
    tpu.vector_store %arg11[%c3_103, %c0_104], %374 {strides = array<i32>} : memref<8x128xf32, #tpu.memory_space<vmem>>, vector<1x128xf32>,
    %c0_105 = arith.constant 0 : index
    %c0_106 = arith.constant 0 : index
    %376 = vector.load %arg5[%c0_105, %c0_106] : memref<128x512xf32, #tpu.memory_space<vmem>>, vector<128x512xf32>
    %cst_107 = arith.constant dense<0.000000e+00> : vector<1x512xf32>
    %377 = tpu.matmul %374, %376, %cst_107 {dimension_numbers = #tpu.dot_dimension_numbers<[1], [0], [0], [1], [0, 0, 1, 1], [], []>} : vector<1x128xf32>, vector<128x512xf32>, vector<1x512xf32> -> vector<1x512xf32>
    %378 = vector.extract_strided_slice %253 {offsets = [4, 0], sizes = [1, 512], strides = [1, 1]} : vector<8x512xf32> to vector<1x512xf32>
    %379 = arith.addf %377, %378 : vector<1x512xf32>
    %380 = vector.extract_strided_slice %379 {offsets = [0, 0], sizes = [1, 128], strides = [1, 1]} : vector<1x512xf32> to vector<1x128xf32>
    %381 = arith.negf %380 : vector<1x128xf32>
    %382 = math.exp %381 : vector<1x128xf32>
    %cst_108 = arith.constant 1.000000e+00 : f32
    %383 = vector.broadcast %cst_108 : f32 to vector<1x128xf32>
    %384 = arith.addf %383, %382 : vector<1x128xf32>
    %385 = arith.divf %383, %384 : vector<1x128xf32>
    %386 = vector.extract_strided_slice %379 {offsets = [0, 128], sizes = [1, 128], strides = [1, 1]} : vector<1x512xf32> to vector<1x128xf32>
    %387 = arith.negf %386 : vector<1x128xf32>
    %388 = math.exp %387 : vector<1x128xf32>
    %cst_109 = arith.constant 1.000000e+00 : f32
    %389 = vector.broadcast %cst_109 : f32 to vector<1x128xf32>
    %390 = arith.addf %389, %388 : vector<1x128xf32>
    %391 = arith.divf %389, %390 : vector<1x128xf32>
    %392 = vector.extract_strided_slice %379 {offsets = [0, 256], sizes = [1, 128], strides = [1, 1]} : vector<1x512xf32> to vector<1x128xf32>
    %393 = math.tanh %392 : vector<1x128xf32>
    %394 = vector.extract_strided_slice %379 {offsets = [0, 384], sizes = [1, 128], strides = [1, 1]} : vector<1x512xf32> to vector<1x128xf32>
    %395 = arith.negf %394 : vector<1x128xf32>
    %396 = math.exp %395 : vector<1x128xf32>
    %cst_110 = arith.constant 1.000000e+00 : f32
    %397 = vector.broadcast %cst_110 : f32 to vector<1x128xf32>
    %398 = arith.addf %397, %396 : vector<1x128xf32>
    %399 = arith.divf %397, %398 : vector<1x128xf32>
    %400 = arith.mulf %391, %372 : vector<1x128xf32>
    %401 = arith.mulf %385, %393 : vector<1x128xf32>
    %402 = arith.addf %400, %401 : vector<1x128xf32>
    %403 = math.tanh %402 : vector<1x128xf32>
    %404 = arith.mulf %399, %403 : vector<1x128xf32>
    %c4_111 = arith.constant 4 : index
    %c0_112 = arith.constant 0 : index
    %405 = vector.load %arg11[%c4_111, %c0_112] : memref<8x128xf32, #tpu.memory_space<vmem>>, vector<1x128xf32>
    tpu.vector_store %arg11[%c4_111, %c0_112], %404 {strides = array<i32>} : memref<8x128xf32, #tpu.memory_space<vmem>>, vector<1x128xf32>,
    %c0_113 = arith.constant 0 : index
    %c0_114 = arith.constant 0 : index
    %406 = vector.load %arg5[%c0_113, %c0_114] : memref<128x512xf32, #tpu.memory_space<vmem>>, vector<128x512xf32>
    %cst_115 = arith.constant dense<0.000000e+00> : vector<1x512xf32>
    %407 = tpu.matmul %404, %406, %cst_115 {dimension_numbers = #tpu.dot_dimension_numbers<[1], [0], [0], [1], [0, 0, 1, 1], [], []>} : vector<1x128xf32>, vector<128x512xf32>, vector<1x512xf32> -> vector<1x512xf32>
    %408 = vector.extract_strided_slice %253 {offsets = [5, 0], sizes = [1, 512], strides = [1, 1]} : vector<8x512xf32> to vector<1x512xf32>
    %409 = arith.addf %407, %408 : vector<1x512xf32>
    %410 = vector.extract_strided_slice %409 {offsets = [0, 0], sizes = [1, 128], strides = [1, 1]} : vector<1x512xf32> to vector<1x128xf32>
    %411 = arith.negf %410 : vector<1x128xf32>
    %412 = math.exp %411 : vector<1x128xf32>
    %cst_116 = arith.constant 1.000000e+00 : f32
    %413 = vector.broadcast %cst_116 : f32 to vector<1x128xf32>
    %414 = arith.addf %413, %412 : vector<1x128xf32>
    %415 = arith.divf %413, %414 : vector<1x128xf32>
    %416 = vector.extract_strided_slice %409 {offsets = [0, 128], sizes = [1, 128], strides = [1, 1]} : vector<1x512xf32> to vector<1x128xf32>
    %417 = arith.negf %416 : vector<1x128xf32>
    %418 = math.exp %417 : vector<1x128xf32>
    %cst_117 = arith.constant 1.000000e+00 : f32
    %419 = vector.broadcast %cst_117 : f32 to vector<1x128xf32>
    %420 = arith.addf %419, %418 : vector<1x128xf32>
    %421 = arith.divf %419, %420 : vector<1x128xf32>
    %422 = vector.extract_strided_slice %409 {offsets = [0, 256], sizes = [1, 128], strides = [1, 1]} : vector<1x512xf32> to vector<1x128xf32>
    %423 = math.tanh %422 : vector<1x128xf32>
    %424 = vector.extract_strided_slice %409 {offsets = [0, 384], sizes = [1, 128], strides = [1, 1]} : vector<1x512xf32> to vector<1x128xf32>
    %425 = arith.negf %424 : vector<1x128xf32>
    %426 = math.exp %425 : vector<1x128xf32>
    %cst_118 = arith.constant 1.000000e+00 : f32
    %427 = vector.broadcast %cst_118 : f32 to vector<1x128xf32>
    %428 = arith.addf %427, %426 : vector<1x128xf32>
    %429 = arith.divf %427, %428 : vector<1x128xf32>
    %430 = arith.mulf %421, %402 : vector<1x128xf32>
    %431 = arith.mulf %415, %423 : vector<1x128xf32>
    %432 = arith.addf %430, %431 : vector<1x128xf32>
    %433 = math.tanh %432 : vector<1x128xf32>
    %434 = arith.mulf %429, %433 : vector<1x128xf32>
    %c5_119 = arith.constant 5 : index
    %c0_120 = arith.constant 0 : index
    %435 = vector.load %arg11[%c5_119, %c0_120] : memref<8x128xf32, #tpu.memory_space<vmem>>, vector<1x128xf32>
    tpu.vector_store %arg11[%c5_119, %c0_120], %434 {strides = array<i32>} : memref<8x128xf32, #tpu.memory_space<vmem>>, vector<1x128xf32>,
    %c0_121 = arith.constant 0 : index
    %c0_122 = arith.constant 0 : index
    %436 = vector.load %arg5[%c0_121, %c0_122] : memref<128x512xf32, #tpu.memory_space<vmem>>, vector<128x512xf32>
    %cst_123 = arith.constant dense<0.000000e+00> : vector<1x512xf32>
    %437 = tpu.matmul %434, %436, %cst_123 {dimension_numbers = #tpu.dot_dimension_numbers<[1], [0], [0], [1], [0, 0, 1, 1], [], []>} : vector<1x128xf32>, vector<128x512xf32>, vector<1x512xf32> -> vector<1x512xf32>
    %438 = vector.extract_strided_slice %253 {offsets = [6, 0], sizes = [1, 512], strides = [1, 1]} : vector<8x512xf32> to vector<1x512xf32>
    %439 = arith.addf %437, %438 : vector<1x512xf32>
    %440 = vector.extract_strided_slice %439 {offsets = [0, 0], sizes = [1, 128], strides = [1, 1]} : vector<1x512xf32> to vector<1x128xf32>
    %441 = arith.negf %440 : vector<1x128xf32>
    %442 = math.exp %441 : vector<1x128xf32>
    %cst_124 = arith.constant 1.000000e+00 : f32
    %443 = vector.broadcast %cst_124 : f32 to vector<1x128xf32>
    %444 = arith.addf %443, %442 : vector<1x128xf32>
    %445 = arith.divf %443, %444 : vector<1x128xf32>
    %446 = vector.extract_strided_slice %439 {offsets = [0, 128], sizes = [1, 128], strides = [1, 1]} : vector<1x512xf32> to vector<1x128xf32>
    %447 = arith.negf %446 : vector<1x128xf32>
    %448 = math.exp %447 : vector<1x128xf32>
    %cst_125 = arith.constant 1.000000e+00 : f32
    %449 = vector.broadcast %cst_125 : f32 to vector<1x128xf32>
    %450 = arith.addf %449, %448 : vector<1x128xf32>
    %451 = arith.divf %449, %450 : vector<1x128xf32>
    %452 = vector.extract_strided_slice %439 {offsets = [0, 256], sizes = [1, 128], strides = [1, 1]} : vector<1x512xf32> to vector<1x128xf32>
    %453 = math.tanh %452 : vector<1x128xf32>
    %454 = vector.extract_strided_slice %439 {offsets = [0, 384], sizes = [1, 128], strides = [1, 1]} : vector<1x512xf32> to vector<1x128xf32>
    %455 = arith.negf %454 : vector<1x128xf32>
    %456 = math.exp %455 : vector<1x128xf32>
    %cst_126 = arith.constant 1.000000e+00 : f32
    %457 = vector.broadcast %cst_126 : f32 to vector<1x128xf32>
    %458 = arith.addf %457, %456 : vector<1x128xf32>
    %459 = arith.divf %457, %458 : vector<1x128xf32>
    %460 = arith.mulf %451, %432 : vector<1x128xf32>
    %461 = arith.mulf %445, %453 : vector<1x128xf32>
    %462 = arith.addf %460, %461 : vector<1x128xf32>
    %463 = math.tanh %462 : vector<1x128xf32>
    %464 = arith.mulf %459, %463 : vector<1x128xf32>
    %c6_127 = arith.constant 6 : index
    %c0_128 = arith.constant 0 : index
    %465 = vector.load %arg11[%c6_127, %c0_128] : memref<8x128xf32, #tpu.memory_space<vmem>>, vector<1x128xf32>
    tpu.vector_store %arg11[%c6_127, %c0_128], %464 {strides = array<i32>} : memref<8x128xf32, #tpu.memory_space<vmem>>, vector<1x128xf32>,
    %c0_129 = arith.constant 0 : index
    %c0_130 = arith.constant 0 : index
    %466 = vector.load %arg5[%c0_129, %c0_130] : memref<128x512xf32, #tpu.memory_space<vmem>>, vector<128x512xf32>
    %cst_131 = arith.constant dense<0.000000e+00> : vector<1x512xf32>
    %467 = tpu.matmul %464, %466, %cst_131 {dimension_numbers = #tpu.dot_dimension_numbers<[1], [0], [0], [1], [0, 0, 1, 1], [], []>} : vector<1x128xf32>, vector<128x512xf32>, vector<1x512xf32> -> vector<1x512xf32>
    %468 = vector.extract_strided_slice %253 {offsets = [7, 0], sizes = [1, 512], strides = [1, 1]} : vector<8x512xf32> to vector<1x512xf32>
    %469 = arith.addf %467, %468 : vector<1x512xf32>
    %470 = vector.extract_strided_slice %469 {offsets = [0, 0], sizes = [1, 128], strides = [1, 1]} : vector<1x512xf32> to vector<1x128xf32>
    %471 = arith.negf %470 : vector<1x128xf32>
    %472 = math.exp %471 : vector<1x128xf32>
    %cst_132 = arith.constant 1.000000e+00 : f32
    %473 = vector.broadcast %cst_132 : f32 to vector<1x128xf32>
    %474 = arith.addf %473, %472 : vector<1x128xf32>
    %475 = arith.divf %473, %474 : vector<1x128xf32>
    %476 = vector.extract_strided_slice %469 {offsets = [0, 128], sizes = [1, 128], strides = [1, 1]} : vector<1x512xf32> to vector<1x128xf32>
    %477 = arith.negf %476 : vector<1x128xf32>
    %478 = math.exp %477 : vector<1x128xf32>
    %cst_133 = arith.constant 1.000000e+00 : f32
    %479 = vector.broadcast %cst_133 : f32 to vector<1x128xf32>
    %480 = arith.addf %479, %478 : vector<1x128xf32>
    %481 = arith.divf %479, %480 : vector<1x128xf32>
    %482 = vector.extract_strided_slice %469 {offsets = [0, 256], sizes = [1, 128], strides = [1, 1]} : vector<1x512xf32> to vector<1x128xf32>
    %483 = math.tanh %482 : vector<1x128xf32>
    %484 = vector.extract_strided_slice %469 {offsets = [0, 384], sizes = [1, 128], strides = [1, 1]} : vector<1x512xf32> to vector<1x128xf32>
    %485 = arith.negf %484 : vector<1x128xf32>
    %486 = math.exp %485 : vector<1x128xf32>
    %cst_134 = arith.constant 1.000000e+00 : f32
    %487 = vector.broadcast %cst_134 : f32 to vector<1x128xf32>
    %488 = arith.addf %487, %486 : vector<1x128xf32>
    %489 = arith.divf %487, %488 : vector<1x128xf32>
    %490 = arith.mulf %481, %462 : vector<1x128xf32>
    %491 = arith.mulf %475, %483 : vector<1x128xf32>
    %492 = arith.addf %490, %491 : vector<1x128xf32>
    %493 = math.tanh %492 : vector<1x128xf32>
    %494 = arith.mulf %489, %493 : vector<1x128xf32>
    %c7_135 = arith.constant 7 : index
    %c0_136 = arith.constant 0 : index
    %495 = vector.load %arg11[%c7_135, %c0_136] : memref<8x128xf32, #tpu.memory_space<vmem>>, vector<1x128xf32>
    tpu.vector_store %arg11[%c7_135, %c0_136], %494 {strides = array<i32>} : memref<8x128xf32, #tpu.memory_space<vmem>>, vector<1x128xf32>,
    %c0_137 = arith.constant 0 : index
    %c0_138 = arith.constant 0 : index
    %496 = vector.load %arg11[%c0_137, %c0_138] : memref<8x128xf32, #tpu.memory_space<vmem>>, vector<8x128xf32>
    %c0_139 = arith.constant 0 : index
    %c0_140 = arith.constant 0 : index
    %497 = vector.load %arg7[%c0_139, %c0_140] : memref<128x128xf32, #tpu.memory_space<vmem>>, vector<128x128xf32>
    %cst_141 = arith.constant dense<0.000000e+00> : vector<8x128xf32>
    %498 = tpu.matmul %496, %497, %cst_141 {dimension_numbers = #tpu.dot_dimension_numbers<[1], [0], [0], [1], [0, 0, 1, 1], [], []>} : vector<8x128xf32>, vector<128x128xf32>, vector<8x128xf32> -> vector<8x128xf32>
    %c0_142 = arith.constant 0 : index
    %c0_143 = arith.constant 0 : index
    %499 = vector.load %arg8[%c0_142, %c0_143] : memref<1x128xf32, #tpu.memory_space<vmem>>, vector<1x128xf32>
    %500 = vector.broadcast %499 : vector<1x128xf32> to vector<8x128xf32>
    %501 = arith.addf %498, %500 : vector<8x128xf32>
    %cst_144 = arith.constant dense<0xFF800000> : vector<8xf32>
    %502 = vector.multi_reduction <maximumf>, %501, %cst_144 [1] : vector<8x128xf32> to vector<8xf32>
    %503 = vector.shape_cast %502 : vector<8xf32> to vector<8x1xf32>
    %504 = vector.broadcast %503 : vector<8x1xf32> to vector<8x128xf32>
    %505 = arith.subf %501, %504 : vector<8x128xf32>
    %506 = math.exp %505 : vector<8x128xf32>
    %cst_145 = arith.constant dense<0.000000e+00> : vector<8xf32>
    %507 = vector.multi_reduction <add>, %506, %cst_145 [1] : vector<8x128xf32> to vector<8xf32>
    %508 = vector.shape_cast %507 : vector<8xf32> to vector<8x1xf32>
    %509 = tpu.reciprocal %508 {approx = true} : vector<8x1xf32> -> vector<8x1xf32>
    %510 = vector.broadcast %509 : vector<8x1xf32> to vector<8x128xf32>
    %511 = arith.mulf %506, %510 : vector<8x128xf32>
    %c0_146 = arith.constant 0 : index
    %c0_147 = arith.constant 0 : index
    %512 = vector.load %arg9[%c0_146, %c0_147] : memref<8x128xf32, #tpu.memory_space<vmem>>, vector<8x128xf32>
    tpu.vector_store %arg9[%c0_146, %c0_147], %511 {strides = array<i32>} : memref<8x128xf32, #tpu.memory_space<vmem>>, vector<8x128xf32>,
    return
  }
}

</mosaic_0001>

<llo_original>
// kernel: lstm_forward.1
$region0: #{lstm_forward.1}
  #allocation0 [shape = 'u32[]', space=smem, size = 0x4, offset = 0x4, fixed_abs, tag = 'smem constant byte address 0x4 - core index']
  #allocation1 [shape = 'u32[144,128]{1,0:T(1,128)}', space=vmem, size = 0x12000, scoped, tag = 'internal scratch']
  #allocation2 [shape = 'f32[8,128]{1,0:T(8,128)}', space=vmem, size = 0x1000, scoped, tag = 'scratch operand']
  #allocation3 [shape = 'f32[8,128]{1,0:T(8,128)}', space=vmem, size = 0x1000, scoped, tag = 'scratch operand']
  %s0 = inlined_call_operand.vmem [shape: f32[8,16], index: 0, kind: input, shape index: {}]
  %s1 = inlined_call_operand.hbm [shape: f32[16,512], index: 1, kind: input, shape index: {}]
  %s2 = inlined_call_operand.hbm [shape: f32[128,512], index: 2, kind: input, shape index: {}]
  %s3 = inlined_call_operand.hbm [shape: f32[1,512], index: 3, kind: input, shape index: {}]
  %s4 = inlined_call_operand.hbm [shape: f32[128,512], index: 4, kind: input, shape index: {}]
  %s5 = inlined_call_operand.hbm [shape: f32[128,512], index: 5, kind: input, shape index: {}]
  %s6 = inlined_call_operand.vmem [shape: f32[1,512], index: 6, kind: input, shape index: {}]
  %s7 = inlined_call_operand.hbm [shape: f32[128,128], index: 7, kind: input, shape index: {}]
  %s8 = inlined_call_operand.vmem [shape: f32[1,128], index: 8, kind: input, shape index: {}]
  %s9 = inlined_call_operand.hbm [shape: f32[8,128], index: 9, kind: output, shape index: {}]
  %s10 = sld [smem:[#allocation0]]
  $region70: #{lstm_forward.1} parent=0
    _
  %s12 = ssub.s32 1, %s10
  %s13 = scalar_select 0, %s12, %s10
  $region1: #{lstm_forward.1} parent=0
    #allocation4 [shape = 'u8[32768]{0}', space=vmem, size = 0x8000, scoped, tag = 'input window, operand 1, single buffered']
    #allocation5 [shape = 's32[1]{0}', space=sflag, size = 0x4, scoped, tag = 'scoped memory for lstm_forward.1']
    #allocation6 [shape = 's32[1]{0}', space=sflag, size = 0x4, scoped, tag = 'scoped memory for lstm_forward.1']
    #allocation7 [shape = 'u8[262144]{0}', space=vmem, size = 0x40000, scoped, tag = 'input window, operand 2, single buffered']
    #allocation8 [shape = 's32[1]{0}', space=sflag, size = 0x4, scoped, tag = 'scoped memory for lstm_forward.1']
    #allocation9 [shape = 'u8[2048]{0}', space=vmem, size = 0x800, scoped, tag = 'input window, operand 3, single buffered']
    #allocation10 [shape = 'u8[262144]{0}', space=vmem, size = 0x40000, scoped, tag = 'input window, operand 4, single buffered']
    #allocation11 [shape = 's32[1]{0}', space=sflag, size = 0x4, scoped, tag = 'scoped memory for lstm_forward.1']
    #allocation12 [shape = 'u8[262144]{0}', space=vmem, size = 0x40000, scoped, tag = 'input window, operand 5, single buffered']
    #allocation13 [shape = 'u8[65536]{0}', space=vmem, size = 0x10000, scoped, tag = 'input window, operand 7, single buffered']
    #allocation14 [shape = 's32[1]{0}', space=sflag, size = 0x4, scoped, tag = 'scoped memory for lstm_forward.1']
    #allocation15 [shape = 'u8[4096]{0}', space=vmem, size = 0x1000, scoped, tag = 'output window, operand 0, single buffered']
    %14 = vsyncpa [#allocation5], 0
    %15 = vsyncpa [#allocation8], 0
    %16 = vsyncpa [#allocation11], 0
    %17 = vsyncpa [#allocation14], 0
    %18 = vsyncpa [#allocation6], 0
    // Predicated region
    $region2: #{lstm_forward.1} parent=1 // pred_check
      _
    $region3: #{lstm_forward.1} parent=1 // pred_check_branch
      %20 = sbr.rel (0) target = $region5
    $region4: #{lstm_forward.1} parent=1 // pred_region
      _
    $region5: #{lstm_forward.1} parent=1 // pred_fallthru
      _
    // Predicated region
    $region6: #{lstm_forward.1} parent=1 // pred_check
      _
    $region7: #{lstm_forward.1} parent=1 // pred_check_branch
      %22 = sbr.rel (0) target = $region9
    $region8: #{lstm_forward.1} parent=1 // pred_region
      %s24 = ssub.s32 1024, 1024
      %25 = vsyncadd [#allocation5], %s24
      %s26 = sshll.u32 [#allocation4], 4
      %s27 = int_to_ptr.vmem [resolvable:$true] %s26
      %32 = dma.hbm_to_vmem [thread:$0]  %s1, 1024, %s27, [#allocation5], 512, 512, 32
    $region9: #{lstm_forward.1} parent=1 // pred_fallthru
      _
    // Predicated region
    $region10: #{lstm_forward.1} parent=1 // pred_check
      _
    $region11: #{lstm_forward.1} parent=1 // pred_check_branch
      %34 = sbr.rel (0) target = $region13
    $region12: #{lstm_forward.1} parent=1 // pred_region
      %s36 = ssub.s32 8192, 8192
      %37 = vsyncadd [#allocation8], %s36
      %s38 = sshll.u32 [#allocation7], 4
      %s39 = int_to_ptr.vmem [resolvable:$true] %s38
      %44 = dma.hbm_to_vmem [thread:$0]  %s2, 8192, %s39, [#allocation8], 512, 512, 32
    $region13: #{lstm_forward.1} parent=1 // pred_fallthru
      _
    // Predicated region
    $region14: #{lstm_forward.1} parent=1 // pred_check
      _
    $region15: #{lstm_forward.1} parent=1 // pred_check_branch
      %46 = sbr.rel (0) target = $region17
    $region16: #{lstm_forward.1} parent=1 // pred_region
      %s48 = ssub.s32 64, 64
      %49 = vsyncadd [#allocation8], %s48
      %s51 = sshll.u32 [#allocation9], 4
      %s52 = int_to_ptr.vmem [resolvable:$true] %s51
      %54 = dma.hbm_to_vmem [thread:$0]  %s3, 64, %s52, [#allocation8]
    $region17: #{lstm_forward.1} parent=1 // pred_fallthru
      _
    // Predicated region
    $region18: #{lstm_forward.1} parent=1 // pred_check
      _
    $region19: #{lstm_forward.1} parent=1 // pred_check_branch
      %56 = sbr.rel (0) target = $region21
    $region20: #{lstm_forward.1} parent=1 // pred_region
      %s58 = ssub.s32 8192, 8192
      %59 = vsyncadd [#allocation11], %s58
      %s60 = sshll.u32 [#allocation10], 4
      %s61 = int_to_ptr.vmem [resolvable:$true] %s60
      %66 = dma.hbm_to_vmem [thread:$0]  %s4, 8192, %s61, [#allocation11], 512, 512, 32
    $region21: #{lstm_forward.1} parent=1 // pred_fallthru
      _
    // Predicated region
    $region22: #{lstm_forward.1} parent=1 // pred_check
      _
    $region23: #{lstm_forward.1} parent=1 // pred_check_branch
      %68 = sbr.rel (0) target = $region25
    $region24: #{lstm_forward.1} parent=1 // pred_region
      %s70 = ssub.s32 8192, 8192
      %71 = vsyncadd [#allocation11], %s70
      %s72 = sshll.u32 [#allocation12], 4
      %s73 = int_to_ptr.vmem [resolvable:$true] %s72
      %78 = dma.hbm_to_vmem [thread:$0]  %s5, 8192, %s73, [#allocation11], 512, 512, 32
    $region25: #{lstm_forward.1} parent=1 // pred_fallthru
      _
    // Predicated region
    $region26: #{lstm_forward.1} parent=1 // pred_check
      _
    $region27: #{lstm_forward.1} parent=1 // pred_check_branch
      %80 = sbr.rel (0) target = $region29
    $region28: #{lstm_forward.1} parent=1 // pred_region
      _
    $region29: #{lstm_forward.1} parent=1 // pred_fallthru
      _
    // Predicated region
    $region30: #{lstm_forward.1} parent=1 // pred_check
      _
    $region31: #{lstm_forward.1} parent=1 // pred_check_branch
      %82 = sbr.rel (0) target = $region33
    $region32: #{lstm_forward.1} parent=1 // pred_region
      %s84 = ssub.s32 2048, 2048
      %85 = vsyncadd [#allocation14], %s84
      %s86 = sshll.u32 [#allocation13], 4
      %s87 = int_to_ptr.vmem [resolvable:$true] %s86
      %92 = dma.hbm_to_vmem [thread:$0]  %s7, 2048, %s87, [#allocation14], 128, 128, 8
    $region33: #{lstm_forward.1} parent=1 // pred_fallthru
      _
    // Predicated region
    $region34: #{lstm_forward.1} parent=1 // pred_check
      _
    $region35: #{lstm_forward.1} parent=1 // pred_check_branch
      %94 = sbr.rel (0) target = $region37
    $region36: #{lstm_forward.1} parent=1 // pred_region
      _
    $region37: #{lstm_forward.1} parent=1 // pred_fallthru
      _
    // Predicated region
    $region38: #{lstm_forward.1} parent=1 // pred_check
      _
    $region39: #{lstm_forward.1} parent=1 // pred_check_branch
      %96 = sbr.rel (0) target = $region41
    $region40: #{lstm_forward.1} parent=1 // pred_region
      %97 = dma.done [#allocation5], 1024
    $region41: #{lstm_forward.1} parent=1 // pred_fallthru
      _
    // Predicated region
    $region42: #{lstm_forward.1} parent=1 // pred_check
      _
    $region43: #{lstm_forward.1} parent=1 // pred_check_branch
      %99 = sbr.rel (0) target = $region45
    $region44: #{lstm_forward.1} parent=1 // pred_region
      %100 = dma.done [#allocation8], 8192
    $region45: #{lstm_forward.1} parent=1 // pred_fallthru
      _
    // Predicated region
    $region46: #{lstm_forward.1} parent=1 // pred_check
      _
    $region47: #{lstm_forward.1} parent=1 // pred_check_branch
      %102 = sbr.rel (0) target = $region49
    $region48: #{lstm_forward.1} parent=1 // pred_region
      %103 = dma.done [#allocation8], 64
    $region49: #{lstm_forward.1} parent=1 // pred_fallthru
      _
    // Predicated region
    $region50: #{lstm_forward.1} parent=1 // pred_check
      _
    $region51: #{lstm_forward.1} parent=1 // pred_check_branch
      %105 = sbr.rel (0) target = $region53
    $region52: #{lstm_forward.1} parent=1 // pred_region
      %106 = dma.done [#allocation11], 8192
    $region53: #{lstm_forward.1} parent=1 // pred_fallthru
      _
    // Predicated region
    $region54: #{lstm_forward.1} parent=1 // pred_check
      _
    $region55: #{lstm_forward.1} parent=1 // pred_check_branch
      %108 = sbr.rel (0) target = $region57
    $region56: #{lstm_forward.1} parent=1 // pred_region
      %109 = dma.done [#allocation11], 8192
    $region57: #{lstm_forward.1} parent=1 // pred_fallthru
      _
    // Predicated region
    $region58: #{lstm_forward.1} parent=1 // pred_check
      _
    $region59: #{lstm_forward.1} parent=1 // pred_check_branch
      %111 = sbr.rel (0) target = $region61
    $region60: #{lstm_forward.1} parent=1 // pred_region
      %112 = dma.done [#allocation14], 2048
    $region61: #{lstm_forward.1} parent=1 // pred_fallthru
      _
    %v113 = vld [vmem:[%s0] sm:$0xff]
    %v114 = vld [vmem:[#allocation4] sm:$0xff]
    %v115 = vld [vmem:[#allocation4 + $0x8] sm:$0xff]
    %v116 = vld [vmem:[#allocation4 + $0x10] sm:$0xff]
    %v117 = vld [vmem:[#allocation4 + $0x18] sm:$0xff]
    %v118 = vld [vmem:[#allocation4 + $0x20] sm:$0xff]
    %v119 = vld [vmem:[#allocation4 + $0x28] sm:$0xff]
    %v120 = vld [vmem:[#allocation4 + $0x30] sm:$0xff]
    %v121 = vld [vmem:[#allocation4 + $0x38] sm:$0xff]
    %v122 = vld [vmem:[#allocation9] sm:$0xf]
    %v124 = vlaneseq
    %v125 = vshrl.u32 %v124, 7
    %v126 = vsub.s32 0, %v125
    %v127 = vrot.slane %v122, %v126
    %v128 = vlaneseq
    %v129 = vshrl.u32 %v128, 7
    %v130 = vsub.s32 1, %v129
    %v131 = vrot.slane %v122, %v130
    %v132 = vlaneseq
    %v133 = vshrl.u32 %v132, 7
    %v134 = vsub.s32 2, %v133
    %v135 = vrot.slane %v122, %v134
    %v136 = vlaneseq
    %v137 = vshrl.u32 %v136, 7
    %v138 = vsub.s32 3, %v137
    %v139 = vrot.slane %v122, %v138
    %vm144 = vcmask 130048
    %v146 = vsel %vm144, %v113, 0
    %148 = vmatprep.subr.mxu0 %v115
    %149 = vmatpush1.msra.mxu0 %v114
    %150 = vmatprep.subr.mxu0 %v119
    %151 = vmatpush1.msra.mxu0 %v118
    %152 = vmatprep.subr.mxu0 0.0
    %153 = vmatpush1.msra.mxu0 0.0
    %154 = vmatprep.subr.mxu0 0.0
    %155 = vmatpush1.msra.mxu0 0.0
    %156 = vmatprep.subr.mxu0 0.0
    %157 = vmatpush1.msra.mxu0 0.0
    %158 = vmatprep.subr.mxu0 0.0
    %159 = vmatpush1.msra.mxu0 0.0
    %160 = vmatprep.subr.mxu0 0.0
    %161 = vmatpush1.msra.mxu0 0.0
    %162 = vmatprep.subr.mxu0 0.0
    %163 = vmatpush1.msra.mxu0 0.0
    %164 = vmatprep.subr.mxu0 0.0
    %165 = vmatpush1.msra.mxu0 0.0
    %166 = vmatprep.subr.mxu0 0.0
    %167 = vmatpush1.msra.mxu0 0.0
    %168 = vmatprep.subr.mxu0 0.0
    %169 = vmatpush1.msra.mxu0 0.0
    %170 = vmatprep.subr.mxu0 0.0
    %171 = vmatpush1.msra.mxu0 0.0
    %172 = vmatprep.subr.mxu0 0.0
    %173 = vmatpush1.msra.mxu0 0.0
    %174 = vmatprep.subr.mxu0 0.0
    %175 = vmatpush1.msra.mxu0 0.0
    %176 = vmatprep.subr.mxu0 0.0
    %177 = vmatpush1.msra.mxu0 0.0
    %178 = vmatprep.subr.mxu0 0.0
    %179 = vmatpush1.msra.mxu0 0.0
    %180 = vmatprep.subr.mxu0 0.0
    %181 = vmatpush1.msra.mxu0 0.0
    %182 = vmatprep.subr.mxu0 0.0
    %183 = vmatpush1.msra.mxu0 0.0
    %184 = vmatprep.subr.mxu0 0.0
    %185 = vmatpush1.msra.mxu0 0.0
    %186 = vmatprep.subr.mxu0 0.0
    %187 = vmatpush1.msra.mxu0 0.0
    %188 = vmatprep.subr.mxu0 0.0
    %189 = vmatpush1.msra.mxu0 0.0
    %190 = vmatprep.subr.mxu0 0.0
    %191 = vmatpush1.msra.mxu0 0.0
    %192 = vmatprep.subr.mxu0 0.0
    %193 = vmatpush1.msra.mxu0 0.0
    %194 = vmatprep.subr.mxu0 0.0
    %195 = vmatpush1.msra.mxu0 0.0
    %196 = vmatprep.subr.mxu0 0.0
    %197 = vmatpush1.msra.mxu0 0.0
    %198 = vmatprep.subr.mxu0 0.0
    %199 = vmatpush1.msra.mxu0 0.0
    %200 = vmatprep.subr.mxu0 0.0
    %201 = vmatpush1.msra.mxu0 0.0
    %202 = vmatprep.subr.mxu0 0.0
    %203 = vmatpush1.msra.mxu0 0.0
    %204 = vmatprep.subr.mxu0 0.0
    %205 = vmatpush1.msra.mxu0 0.0
    %206 = vmatprep.subr.mxu0 0.0
    %207 = vmatpush1.msra.mxu0 0.0
    %208 = vmatprep.subr.mxu0 0.0
    %209 = vmatpush1.msra.mxu0 0.0
    %210 = vmatprep.subr.mxu0 0.0
    %211 = vmatpush1.msra.mxu0 0.0
    %212 = vmatprep.mubr.f32.mxu0 0.0
    %213 = vmatmul.mubr.f32.gmra.mrb[0].mxu0 %v146
    %v214 = vpop.f32.mrb[0].mxu0
    %v215 = vadd.f32 %v127, %v214
    %v216 = vpop.f32.mrb[0].mxu0
    %v217 = vadd.f32 %v131, %v216
    %218 = vdwg.mxu0
    %219 = vmatprep.subr.mxu0 %v117
    %220 = vmatpush1.msra.mxu0 %v116
    %221 = vmatprep.subr.mxu0 %v121
    %222 = vmatpush1.msra.mxu0 %v120
    %223 = vmatprep.subr.mxu0 0.0
    %224 = vmatpush1.msra.mxu0 0.0
    %225 = vmatprep.subr.mxu0 0.0
    %226 = vmatpush1.msra.mxu0 0.0
    %227 = vmatprep.subr.mxu0 0.0
    %228 = vmatpush1.msra.mxu0 0.0
    %229 = vmatprep.subr.mxu0 0.0
    %230 = vmatpush1.msra.mxu0 0.0
    %231 = vmatprep.subr.mxu0 0.0
    %232 = vmatpush1.msra.mxu0 0.0
    %233 = vmatprep.subr.mxu0 0.0
    %234 = vmatpush1.msra.mxu0 0.0
    %235 = vmatprep.subr.mxu0 0.0
    %236 = vmatpush1.msra.mxu0 0.0
    %237 = vmatprep.subr.mxu0 0.0
    %238 = vmatpush1.msra.mxu0 0.0
    %239 = vmatprep.subr.mxu0 0.0
    %240 = vmatpush1.msra.mxu0 0.0
    %241 = vmatprep.subr.mxu0 0.0
    %242 = vmatpush1.msra.mxu0 0.0
    %243 = vmatprep.subr.mxu0 0.0
    %244 = vmatpush1.msra.mxu0 0.0
    %245 = vmatprep.subr.mxu0 0.0
    %246 = vmatpush1.msra.mxu0 0.0
    %247 = vmatprep.subr.mxu0 0.0
    %248 = vmatpush1.msra.mxu0 0.0
    %249 = vmatprep.subr.mxu0 0.0
    %250 = vmatpush1.msra.mxu0 0.0
    %251 = vmatprep.subr.mxu0 0.0
    %252 = vmatpush1.msra.mxu0 0.0
    %253 = vmatprep.subr.mxu0 0.0
    %254 = vmatpush1.msra.mxu0 0.0
    %255 = vmatprep.subr.mxu0 0.0
    %256 = vmatpush1.msra.mxu0 0.0
    %257 = vmatprep.subr.mxu0 0.0
    %258 = vmatpush1.msra.mxu0 0.0
    %259 = vmatprep.subr.mxu0 0.0
    %260 = vmatpush1.msra.mxu0 0.0
    %261 = vmatprep.subr.mxu0 0.0
    %262 = vmatpush1.msra.mxu0 0.0
    %263 = vmatprep.subr.mxu0 0.0
    %264 = vmatpush1.msra.mxu0 0.0
    %265 = vmatprep.subr.mxu0 0.0
    %266 = vmatpush1.msra.mxu0 0.0
    %267 = vmatprep.subr.mxu0 0.0
    %268 = vmatpush1.msra.mxu0 0.0
    %269 = vmatprep.subr.mxu0 0.0
    %270 = vmatpush1.msra.mxu0 0.0
    %271 = vmatprep.subr.mxu0 0.0
    %272 = vmatpush1.msra.mxu0 0.0
    %273 = vmatprep.subr.mxu0 0.0
    %274 = vmatpush1.msra.mxu0 0.0
    %275 = vmatprep.subr.mxu0 0.0
    %276 = vmatpush1.msra.mxu0 0.0
    %277 = vmatprep.subr.mxu0 0.0
    %278 = vmatpush1.msra.mxu0 0.0
    %279 = vmatprep.subr.mxu0 0.0
    %280 = vmatpush1.msra.mxu0 0.0
    %281 = vmatprep.subr.mxu0 0.0
    %282 = vmatpush1.msra.mxu0 0.0
    %283 = vmatprep.mubr.f32.mxu0 0.0
    %284 = vmatmul.mubr.f32.gmra.mrb[0].mxu0 %v146
    %v285 = vpop.f32.mrb[0].mxu0
    %v286 = vadd.f32 %v135, %v285
    %v287 = vpop.f32.mrb[0].mxu0
    %v288 = vadd.f32 %v139, %v287
    %289 = vdwg.mxu0
    %v290 = vld [vmem:[#allocation7] sm:$0xff]
    %v291 = vld [vmem:[#allocation7 + $0x8] sm:$0xff]
    %v292 = vld [vmem:[#allocation7 + $0x10] sm:$0xff]
    %v293 = vld [vmem:[#allocation7 + $0x18] sm:$0xff]
    %v294 = vld [vmem:[#allocation7 + $0x20] sm:$0xff]
    %v295 = vld [vmem:[#allocation7 + $0x28] sm:$0xff]
    %v296 = vld [vmem:[#allocation7 + $0x30] sm:$0xff]
    %v297 = vld [vmem:[#allocation7 + $0x38] sm:$0xff]
    %v298 = vld [vmem:[#allocation7 + $0x40] sm:$0xff]
    %v299 = vld [vmem:[#allocation7 + $0x48] sm:$0xff]
    %v300 = vld [vmem:[#allocation7 + $0x50] sm:$0xff]
    %v301 = vld [vmem:[#allocation7 + $0x58] sm:$0xff]
    %v302 = vld [vmem:[#allocation7 + $0x60] sm:$0xff]
    %v303 = vld [vmem:[#allocation7 + $0x68] sm:$0xff]
    %v304 = vld [vmem:[#allocation7 + $0x70] sm:$0xff]
    %v305 = vld [vmem:[#allocation7 + $0x78] sm:$0xff]
    %v306 = vld [vmem:[#allocation7 + $0x80] sm:$0xff]
    %v307 = vld [vmem:[#allocation7 + $0x88] sm:$0xff]
    %v308 = vld [vmem:[#allocation7 + $0x90] sm:$0xff]
    %v309 = vld [vmem:[#allocation7 + $0x98] sm:$0xff]
    %v310 = vld [vmem:[#allocation7 + $0xa0] sm:$0xff]
    %v311 = vld [vmem:[#allocation7 + $0xa8] sm:$0xff]
    %v312 = vld [vmem:[#allocation7 + $0xb0] sm:$0xff]
    %v313 = vld [vmem:[#allocation7 + $0xb8] sm:$0xff]
    %v314 = vld [vmem:[#allocation7 + $0xc0] sm:$0xff]
    %v315 = vld [vmem:[#allocation7 + $0xc8] sm:$0xff]
    %v316 = vld [vmem:[#allocation7 + $0xd0] sm:$0xff]
    %v317 = vld [vmem:[#allocation7 + $0xd8] sm:$0xff]
    %v318 = vld [vmem:[#allocation7 + $0xe0] sm:$0xff]
    %v319 = vld [vmem:[#allocation7 + $0xe8] sm:$0xff]
    %v320 = vld [vmem:[#allocation7 + $0xf0] sm:$0xff]
    %v321 = vld [vmem:[#allocation7 + $0xf8] sm:$0xff]
    %v322 = vld [vmem:[#allocation7 + $0x100] sm:$0xff]
    %v323 = vld [vmem:[#allocation7 + $0x108] sm:$0xff]
    %v324 = vld [vmem:[#allocation7 + $0x110] sm:$0xff]
    %v325 = vld [vmem:[#allocation7 + $0x118] sm:$0xff]
    %v326 = vld [vmem:[#allocation7 + $0x120] sm:$0xff]
    %v327 = vld [vmem:[#allocation7 + $0x128] sm:$0xff]
    %v328 = vld [vmem:[#allocation7 + $0x130] sm:$0xff]
    %v329 = vld [vmem:[#allocation7 + $0x138] sm:$0xff]
    %v330 = vld [vmem:[#allocation7 + $0x140] sm:$0xff]
    %v331 = vld [vmem:[#allocation7 + $0x148] sm:$0xff]
    %v332 = vld [vmem:[#allocation7 + $0x150] sm:$0xff]
    %v333 = vld [vmem:[#allocation7 + $0x158] sm:$0xff]
    %v334 = vld [vmem:[#allocation7 + $0x160] sm:$0xff]
    %v335 = vld [vmem:[#allocation7 + $0x168] sm:$0xff]
    %v336 = vld [vmem:[#allocation7 + $0x170] sm:$0xff]
    %v337 = vld [vmem:[#allocation7 + $0x178] sm:$0xff]
    %v338 = vld [vmem:[#allocation7 + $0x180] sm:$0xff]
    %v339 = vld [vmem:[#allocation7 + $0x188] sm:$0xff]
    %v340 = vld [vmem:[#allocation7 + $0x190] sm:$0xff]
    %v341 = vld [vmem:[#allocation7 + $0x198] sm:$0xff]
    %v342 = vld [vmem:[#allocation7 + $0x1a0] sm:$0xff]
    %v343 = vld [vmem:[#allocation7 + $0x1a8] sm:$0xff]
    %v344 = vld [vmem:[#allocation7 + $0x1b0] sm:$0xff]
    %v345 = vld [vmem:[#allocation7 + $0x1b8] sm:$0xff]
    %v346 = vld [vmem:[#allocation7 + $0x1c0] sm:$0xff]
    %v347 = vld [vmem:[#allocation7 + $0x1c8] sm:$0xff]
    %v348 = vld [vmem:[#allocation7 + $0x1d0] sm:$0xff]
    %v349 = vld [vmem:[#allocation7 + $0x1d8] sm:$0xff]
    %v350 = vld [vmem:[#allocation7 + $0x1e0] sm:$0xff]
    %v351 = vld [vmem:[#allocation7 + $0x1e8] sm:$0xff]
    %v352 = vld [vmem:[#allocation7 + $0x1f0] sm:$0xff]
    %v353 = vld [vmem:[#allocation7 + $0x1f8] sm:$0xff]
    %354 = vmatprep.subr.mxu0 %v291
    %355 = vmatpush1.msra.mxu0 %v290
    %356 = vmatprep.subr.mxu0 %v295
    %357 = vmatpush1.msra.mxu0 %v294
    %358 = vmatprep.subr.mxu0 %v299
    %359 = vmatpush1.msra.mxu0 %v298
    %360 = vmatprep.subr.mxu0 %v303
    %361 = vmatpush1.msra.mxu0 %v302
    %362 = vmatprep.subr.mxu0 %v307
    %363 = vmatpush1.msra.mxu0 %v306
    %364 = vmatprep.subr.mxu0 %v311
    %365 = vmatpush1.msra.mxu0 %v310
    %366 = vmatprep.subr.mxu0 %v315
    %367 = vmatpush1.msra.mxu0 %v314
    %368 = vmatprep.subr.mxu0 %v319
    %369 = vmatpush1.msra.mxu0 %v318
    %370 = vmatprep.subr.mxu0 %v323
    %371 = vmatpush1.msra.mxu0 %v322
    %372 = vmatprep.subr.mxu0 %v327
    %373 = vmatpush1.msra.mxu0 %v326
    %374 = vmatprep.subr.mxu0 %v331
    %375 = vmatpush1.msra.mxu0 %v330
    %376 = vmatprep.subr.mxu0 %v335
    %377 = vmatpush1.msra.mxu0 %v334
    %378 = vmatprep.subr.mxu0 %v339
    %379 = vmatpush1.msra.mxu0 %v338
    %380 = vmatprep.subr.mxu0 %v343
    %381 = vmatpush1.msra.mxu0 %v342
    %382 = vmatprep.subr.mxu0 %v347
    %383 = vmatpush1.msra.mxu0 %v346
    %384 = vmatprep.subr.mxu0 %v351
    %385 = vmatpush1.msra.mxu0 %v350
    %386 = vmatprep.subr.mxu0 0.0
    %387 = vmatpush1.msra.mxu0 0.0
    %388 = vmatprep.subr.mxu0 0.0
    %389 = vmatpush1.msra.mxu0 0.0
    %390 = vmatprep.subr.mxu0 0.0
    %391 = vmatpush1.msra.mxu0 0.0
    %392 = vmatprep.subr.mxu0 0.0
    %393 = vmatpush1.msra.mxu0 0.0
    %394 = vmatprep.subr.mxu0 0.0
    %395 = vmatpush1.msra.mxu0 0.0
    %396 = vmatprep.subr.mxu0 0.0
    %397 = vmatpush1.msra.mxu0 0.0
    %398 = vmatprep.subr.mxu0 0.0
    %399 = vmatpush1.msra.mxu0 0.0
    %400 = vmatprep.subr.mxu0 0.0
    %401 = vmatpush1.msra.mxu0 0.0
    %402 = vmatprep.subr.mxu0 0.0
    %403 = vmatpush1.msra.mxu0 0.0
    %404 = vmatprep.subr.mxu0 0.0
    %405 = vmatpush1.msra.mxu0 0.0
    %406 = vmatprep.subr.mxu0 0.0
    %407 = vmatpush1.msra.mxu0 0.0
    %408 = vmatprep.subr.mxu0 0.0
    %409 = vmatpush1.msra.mxu0 0.0
    %410 = vmatprep.subr.mxu0 0.0
    %411 = vmatpush1.msra.mxu0 0.0
    %412 = vmatprep.subr.mxu0 0.0
    %413 = vmatpush1.msra.mxu0 0.0
    %414 = vmatprep.subr.mxu0 0.0
    %415 = vmatpush1.msra.mxu0 0.0
    %416 = vmatprep.subr.mxu0 0.0
    %417 = vmatpush1.msra.mxu0 0.0
    %418 = vmatprep.mubr.f32.mxu0 0.0
    %419 = vmatmul.mubr.f32.gmra.mrb[0].mxu0 0.0
    %v420 = vpop.f32.mrb[0].mxu0
    %v421 = vadd.f32 %v215, %v420
    %v422 = vpop.f32.mrb[0].mxu0
    %v423 = vadd.f32 %v217, %v422
    %424 = vdwg.mxu0
    %425 = vmatprep.subr.mxu0 %v293
    %426 = vmatpush1.msra.mxu0 %v292
    %427 = vmatprep.subr.mxu0 %v297
    %428 = vmatpush1.msra.mxu0 %v296
    %429 = vmatprep.subr.mxu0 %v301
    %430 = vmatpush1.msra.mxu0 %v300
    %431 = vmatprep.subr.mxu0 %v305
    %432 = vmatpush1.msra.mxu0 %v304
    %433 = vmatprep.subr.mxu0 %v309
    %434 = vmatpush1.msra.mxu0 %v308
    %435 = vmatprep.subr.mxu0 %v313
    %436 = vmatpush1.msra.mxu0 %v312
    %437 = vmatprep.subr.mxu0 %v317
    %438 = vmatpush1.msra.mxu0 %v316
    %439 = vmatprep.subr.mxu0 %v321
    %440 = vmatpush1.msra.mxu0 %v320
    %441 = vmatprep.subr.mxu0 %v325
    %442 = vmatpush1.msra.mxu0 %v324
    %443 = vmatprep.subr.mxu0 %v329
    %444 = vmatpush1.msra.mxu0 %v328
    %445 = vmatprep.subr.mxu0 %v333
    %446 = vmatpush1.msra.mxu0 %v332
    %447 = vmatprep.subr.mxu0 %v337
    %448 = vmatpush1.msra.mxu0 %v336
    %449 = vmatprep.subr.mxu0 %v341
    %450 = vmatpush1.msra.mxu0 %v340
    %451 = vmatprep.subr.mxu0 %v345
    %452 = vmatpush1.msra.mxu0 %v344
    %453 = vmatprep.subr.mxu0 %v349
    %454 = vmatpush1.msra.mxu0 %v348
    %455 = vmatprep.subr.mxu0 %v353
    %456 = vmatpush1.msra.mxu0 %v352
    %457 = vmatprep.subr.mxu0 0.0
    %458 = vmatpush1.msra.mxu0 0.0
    %459 = vmatprep.subr.mxu0 0.0
    %460 = vmatpush1.msra.mxu0 0.0
    %461 = vmatprep.subr.mxu0 0.0
    %462 = vmatpush1.msra.mxu0 0.0
    %463 = vmatprep.subr.mxu0 0.0
    %464 = vmatpush1.msra.mxu0 0.0
    %465 = vmatprep.subr.mxu0 0.0
    %466 = vmatpush1.msra.mxu0 0.0
    %467 = vmatprep.subr.mxu0 0.0
    %468 = vmatpush1.msra.mxu0 0.0
    %469 = vmatprep.subr.mxu0 0.0
    %470 = vmatpush1.msra.mxu0 0.0
    %471 = vmatprep.subr.mxu0 0.0
    %472 = vmatpush1.msra.mxu0 0.0
    %473 = vmatprep.subr.mxu0 0.0
    %474 = vmatpush1.msra.mxu0 0.0
    %475 = vmatprep.subr.mxu0 0.0
    %476 = vmatpush1.msra.mxu0 0.0
    %477 = vmatprep.subr.mxu0 0.0
    %478 = vmatpush1.msra.mxu0 0.0
    %479 = vmatprep.subr.mxu0 0.0
    %480 = vmatpush1.msra.mxu0 0.0
    %481 = vmatprep.subr.mxu0 0.0
    %482 = vmatpush1.msra.mxu0 0.0
    %483 = vmatprep.subr.mxu0 0.0
    %484 = vmatpush1.msra.mxu0 0.0
    %485 = vmatprep.subr.mxu0 0.0
    %486 = vmatpush1.msra.mxu0 0.0
    %487 = vmatprep.subr.mxu0 0.0
    %488 = vmatpush1.msra.mxu0 0.0
    %489 = vmatprep.mubr.f32.mxu0 0.0
    %490 = vmatmul.mubr.f32.gmra.mrb[0].mxu0 0.0
    %v491 = vpop.f32.mrb[0].mxu0
    %v492 = vadd.f32 %v286, %v491
    %v493 = vpop.f32.mrb[0].mxu0
    %v494 = vadd.f32 %v288, %v493
    %495 = vdwg.mxu0
    %v496 = vxor.u32 %v421, 2147483648
    %v497 = vmul.f32 %v496, 1.442695
    %v498 = vpow.pop %v497
    %v499 = vadd.f32 %v498, 1.0
    %v500 = vrcp.pop %v499
    %v501 = vmul.f32 1.0, %v500
    %v502 = vxor.u32 %v423, 2147483648
    %v503 = vmul.f32 %v502, 1.442695
    %v504 = vpow.pop %v503
    %v505 = vadd.f32 %v504, 1.0
    %v506 = vrcp.pop %v505
    %v507 = vmul.f32 1.0, %v506
    %v508 = vtanh.pop %v492
    %v509 = vxor.u32 %v494, 2147483648
    %v510 = vmul.f32 %v509, 1.442695
    %v511 = vpow.pop %v510
    %v512 = vadd.f32 %v511, 1.0
    %v513 = vrcp.pop %v512
    %v514 = vmul.f32 1.0, %v513
    %v515 = vmul.f32 %v507, 0.0
    %v516 = vmul.f32 %v501, %v508
    %v517 = vadd.f32 %v515, %v516
    %v518 = vtanh.pop %v517
    %v519 = vmul.f32 %v514, %v518
    %520 = vst [vmem:[#allocation2] sm:$0x1] %v519
    %v521 = vld [vmem:[#allocation7] sm:$0xff]
    %v522 = vld [vmem:[#allocation7 + $0x8] sm:$0xff]
    %v523 = vld [vmem:[#allocation7 + $0x10] sm:$0xff]
    %v524 = vld [vmem:[#allocation7 + $0x18] sm:$0xff]
    %v525 = vld [vmem:[#allocation7 + $0x20] sm:$0xff]
    %v526 = vld [vmem:[#allocation7 + $0x28] sm:$0xff]
    %v527 = vld [vmem:[#allocation7 + $0x30] sm:$0xff]
    %v528 = vld [vmem:[#allocation7 + $0x38] sm:$0xff]
    %v529 = vld [vmem:[#allocation7 + $0x40] sm:$0xff]
    %v530 = vld [vmem:[#allocation7 + $0x48] sm:$0xff]
    %v531 = vld [vmem:[#allocation7 + $0x50] sm:$0xff]
    %v532 = vld [vmem:[#allocation7 + $0x58] sm:$0xff]
    %v533 = vld [vmem:[#allocation7 + $0x60] sm:$0xff]
    %v534 = vld [vmem:[#allocation7 + $0x68] sm:$0xff]
    %v535 = vld [vmem:[#allocation7 + $0x70] sm:$0xff]
    %v536 = vld [vmem:[#allocation7 + $0x78] sm:$0xff]
    %v537 = vld [vmem:[#allocation7 + $0x80] sm:$0xff]
    %v538 = vld [vmem:[#allocation7 + $0x88] sm:$0xff]
    %v539 = vld [vmem:[#allocation7 + $0x90] sm:$0xff]
    %v540 = vld [vmem:[#allocation7 + $0x98] sm:$0xff]
    %v541 = vld [vmem:[#allocation7 + $0xa0] sm:$0xff]
    %v542 = vld [vmem:[#allocation7 + $0xa8] sm:$0xff]
    %v543 = vld [vmem:[#allocation7 + $0xb0] sm:$0xff]
    %v544 = vld [vmem:[#allocation7 + $0xb8] sm:$0xff]
    %v545 = vld [vmem:[#allocation7 + $0xc0] sm:$0xff]
    %v546 = vld [vmem:[#allocation7 + $0xc8] sm:$0xff]
    %v547 = vld [vmem:[#allocation7 + $0xd0] sm:$0xff]
    %v548 = vld [vmem:[#allocation7 + $0xd8] sm:$0xff]
    %v549 = vld [vmem:[#allocation7 + $0xe0] sm:$0xff]
    %v550 = vld [vmem:[#allocation7 + $0xe8] sm:$0xff]
    %v551 = vld [vmem:[#allocation7 + $0xf0] sm:$0xff]
    %v552 = vld [vmem:[#allocation7 + $0xf8] sm:$0xff]
    %v553 = vld [vmem:[#allocation7 + $0x100] sm:$0xff]
    %v554 = vld [vmem:[#allocation7 + $0x108] sm:$0xff]
    %v555 = vld [vmem:[#allocation7 + $0x110] sm:$0xff]
    %v556 = vld [vmem:[#allocation7 + $0x118] sm:$0xff]
    %v557 = vld [vmem:[#allocation7 + $0x120] sm:$0xff]
    %v558 = vld [vmem:[#allocation7 + $0x128] sm:$0xff]
    %v559 = vld [vmem:[#allocation7 + $0x130] sm:$0xff]
    %v560 = vld [vmem:[#allocation7 + $0x138] sm:$0xff]
    %v561 = vld [vmem:[#allocation7 + $0x140] sm:$0xff]
    %v562 = vld [vmem:[#allocation7 + $0x148] sm:$0xff]
    %v563 = vld [vmem:[#allocation7 + $0x150] sm:$0xff]
    %v564 = vld [vmem:[#allocation7 + $0x158] sm:$0xff]
    %v565 = vld [vmem:[#allocation7 + $0x160] sm:$0xff]
    %v566 = vld [vmem:[#allocation7 + $0x168] sm:$0xff]
    %v567 = vld [vmem:[#allocation7 + $0x170] sm:$0xff]
    %v568 = vld [vmem:[#allocation7 + $0x178] sm:$0xff]
    %v569 = vld [vmem:[#allocation7 + $0x180] sm:$0xff]
    %v570 = vld [vmem:[#allocation7 + $0x188] sm:$0xff]
    %v571 = vld [vmem:[#allocation7 + $0x190] sm:$0xff]
    %v572 = vld [vmem:[#allocation7 + $0x198] sm:$0xff]
    %v573 = vld [vmem:[#allocation7 + $0x1a0] sm:$0xff]
    %v574 = vld [vmem:[#allocation7 + $0x1a8] sm:$0xff]
    %v575 = vld [vmem:[#allocation7 + $0x1b0] sm:$0xff]
    %v576 = vld [vmem:[#allocation7 + $0x1b8] sm:$0xff]
    %v577 = vld [vmem:[#allocation7 + $0x1c0] sm:$0xff]
    %v578 = vld [vmem:[#allocation7 + $0x1c8] sm:$0xff]
    %v579 = vld [vmem:[#allocation7 + $0x1d0] sm:$0xff]
    %v580 = vld [vmem:[#allocation7 + $0x1d8] sm:$0xff]
    %v581 = vld [vmem:[#allocation7 + $0x1e0] sm:$0xff]
    %v582 = vld [vmem:[#allocation7 + $0x1e8] sm:$0xff]
    %v583 = vld [vmem:[#allocation7 + $0x1f0] sm:$0xff]
    %v584 = vld [vmem:[#allocation7 + $0x1f8] sm:$0xff]
    %v589 = vrot.slane %v215, 1
    %v590 = vrot.slane %v217, 1
    %v591 = vrot.slane %v286, 1
    %v592 = vrot.slane %v288, 1
    %597 = vmatprep.subr.mxu0 %v522
    %598 = vmatpush1.msra.mxu0 %v521
    %599 = vmatprep.subr.mxu0 %v526
    %600 = vmatpush1.msra.mxu0 %v525
    %601 = vmatprep.subr.mxu0 %v530
    %602 = vmatpush1.msra.mxu0 %v529
    %603 = vmatprep.subr.mxu0 %v534
    %604 = vmatpush1.msra.mxu0 %v533
    %605 = vmatprep.subr.mxu0 %v538
    %606 = vmatpush1.msra.mxu0 %v537
    %607 = vmatprep.subr.mxu0 %v542
    %608 = vmatpush1.msra.mxu0 %v541
    %609 = vmatprep.subr.mxu0 %v546
    %610 = vmatpush1.msra.mxu0 %v545
    %611 = vmatprep.subr.mxu0 %v550
    %612 = vmatpush1.msra.mxu0 %v549
    %613 = vmatprep.subr.mxu0 %v554
    %614 = vmatpush1.msra.mxu0 %v553
    %615 = vmatprep.subr.mxu0 %v558
    %616 = vmatpush1.msra.mxu0 %v557
    %617 = vmatprep.subr.mxu0 %v562
    %618 = vmatpush1.msra.mxu0 %v561
    %619 = vmatprep.subr.mxu0 %v566
    %620 = vmatpush1.msra.mxu0 %v565
    %621 = vmatprep.subr.mxu0 %v570
    %622 = vmatpush1.msra.mxu0 %v569
    %623 = vmatprep.subr.mxu0 %v574
    %624 = vmatpush1.msra.mxu0 %v573
    %625 = vmatprep.subr.mxu0 %v578
    %626 = vmatpush1.msra.mxu0 %v577
    %627 = vmatprep.subr.mxu0 %v582
    %628 = vmatpush1.msra.mxu0 %v581
    %629 = vmatprep.subr.mxu0 0.0
    %630 = vmatpush1.msra.mxu0 0.0
    %631 = vmatprep.subr.mxu0 0.0
    %632 = vmatpush1.msra.mxu0 0.0
    %633 = vmatprep.subr.mxu0 0.0
    %634 = vmatpush1.msra.mxu0 0.0
    %635 = vmatprep.subr.mxu0 0.0
    %636 = vmatpush1.msra.mxu0 0.0
    %637 = vmatprep.subr.mxu0 0.0
    %638 = vmatpush1.msra.mxu0 0.0
    %639 = vmatprep.subr.mxu0 0.0
    %640 = vmatpush1.msra.mxu0 0.0
    %641 = vmatprep.subr.mxu0 0.0
    %642 = vmatpush1.msra.mxu0 0.0
    %643 = vmatprep.subr.mxu0 0.0
    %644 = vmatpush1.msra.mxu0 0.0
    %645 = vmatprep.subr.mxu0 0.0
    %646 = vmatpush1.msra.mxu0 0.0
    %647 = vmatprep.subr.mxu0 0.0
    %648 = vmatpush1.msra.mxu0 0.0
    %649 = vmatprep.subr.mxu0 0.0
    %650 = vmatpush1.msra.mxu0 0.0
    %651 = vmatprep.subr.mxu0 0.0
    %652 = vmatpush1.msra.mxu0 0.0
    %653 = vmatprep.subr.mxu0 0.0
    %654 = vmatpush1.msra.mxu0 0.0
    %655 = vmatprep.subr.mxu0 0.0
    %656 = vmatpush1.msra.mxu0 0.0
    %657 = vmatprep.subr.mxu0 0.0
    %658 = vmatpush1.msra.mxu0 0.0
    %659 = vmatprep.subr.mxu0 0.0
    %660 = vmatpush1.msra.mxu0 0.0
    %661 = vmatprep.mubr.f32.mxu0 0.0
    %662 = vmatmul.mubr.f32.gmra.mrb[0].mxu0 %v519
    %v663 = vpop.f32.mrb[0].mxu0
    %v664 = vadd.f32 %v589, %v663
    %v665 = vpop.f32.mrb[0].mxu0
    %v666 = vadd.f32 %v590, %v665
    %667 = vdwg.mxu0
    %668 = vmatprep.subr.mxu0 %v524
    %669 = vmatpush1.msra.mxu0 %v523
    %670 = vmatprep.subr.mxu0 %v528
    %671 = vmatpush1.msra.mxu0 %v527
    %672 = vmatprep.subr.mxu0 %v532
    %673 = vmatpush1.msra.mxu0 %v531
    %674 = vmatprep.subr.mxu0 %v536
    %675 = vmatpush1.msra.mxu0 %v535
    %676 = vmatprep.subr.mxu0 %v540
    %677 = vmatpush1.msra.mxu0 %v539
    %678 = vmatprep.subr.mxu0 %v544
    %679 = vmatpush1.msra.mxu0 %v543
    %680 = vmatprep.subr.mxu0 %v548
    %681 = vmatpush1.msra.mxu0 %v547
    %682 = vmatprep.subr.mxu0 %v552
    %683 = vmatpush1.msra.mxu0 %v551
    %684 = vmatprep.subr.mxu0 %v556
    %685 = vmatpush1.msra.mxu0 %v555
    %686 = vmatprep.subr.mxu0 %v560
    %687 = vmatpush1.msra.mxu0 %v559
    %688 = vmatprep.subr.mxu0 %v564
    %689 = vmatpush1.msra.mxu0 %v563
    %690 = vmatprep.subr.mxu0 %v568
    %691 = vmatpush1.msra.mxu0 %v567
    %692 = vmatprep.subr.mxu0 %v572
    %693 = vmatpush1.msra.mxu0 %v571
    %694 = vmatprep.subr.mxu0 %v576
    %695 = vmatpush1.msra.mxu0 %v575
    %696 = vmatprep.subr.mxu0 %v580
    %697 = vmatpush1.msra.mxu0 %v579
    %698 = vmatprep.subr.mxu0 %v584
    %699 = vmatpush1.msra.mxu0 %v583
    %700 = vmatprep.subr.mxu0 0.0
    %701 = vmatpush1.msra.mxu0 0.0
    %702 = vmatprep.subr.mxu0 0.0
    %703 = vmatpush1.msra.mxu0 0.0
    %704 = vmatprep.subr.mxu0 0.0
    %705 = vmatpush1.msra.mxu0 0.0
    %706 = vmatprep.subr.mxu0 0.0
    %707 = vmatpush1.msra.mxu0 0.0
    %708 = vmatprep.subr.mxu0 0.0
    %709 = vmatpush1.msra.mxu0 0.0
    %710 = vmatprep.subr.mxu0 0.0
    %711 = vmatpush1.msra.mxu0 0.0
    %712 = vmatprep.subr.mxu0 0.0
    %713 = vmatpush1.msra.mxu0 0.0
    %714 = vmatprep.subr.mxu0 0.0
    %715 = vmatpush1.msra.mxu0 0.0
    %716 = vmatprep.subr.mxu0 0.0
    %717 = vmatpush1.msra.mxu0 0.0
    %718 = vmatprep.subr.mxu0 0.0
    %719 = vmatpush1.msra.mxu0 0.0
    %720 = vmatprep.subr.mxu0 0.0
    %721 = vmatpush1.msra.mxu0 0.0
    %722 = vmatprep.subr.mxu0 0.0
    %723 = vmatpush1.msra.mxu0 0.0
    %724 = vmatprep.subr.mxu0 0.0
    %725 = vmatpush1.msra.mxu0 0.0
    %726 = vmatprep.subr.mxu0 0.0
    %727 = vmatpush1.msra.mxu0 0.0
    %728 = vmatprep.subr.mxu0 0.0
    %729 = vmatpush1.msra.mxu0 0.0
    %730 = vmatprep.subr.mxu0 0.0
    %731 = vmatpush1.msra.mxu0 0.0
    %732 = vmatprep.mubr.f32.mxu0 0.0
    %733 = vmatmul.mubr.f32.gmra.mrb[0].mxu0 %v519
    %v734 = vpop.f32.mrb[0].mxu0
    %v735 = vadd.f32 %v591, %v734
    %v736 = vpop.f32.mrb[0].mxu0
    %v737 = vadd.f32 %v592, %v736
    %738 = vdwg.mxu0
    %v739 = vxor.u32 %v664, 2147483648
    %v740 = vmul.f32 %v739, 1.442695
    %v741 = vpow.pop %v740
    %v742 = vadd.f32 %v741, 1.0
    %v743 = vrcp.pop %v742
    %v744 = vmul.f32 1.0, %v743
    %v745 = vxor.u32 %v666, 2147483648
    %v746 = vmul.f32 %v745, 1.442695
    %v747 = vpow.pop %v746
    %v748 = vadd.f32 %v747, 1.0
    %v749 = vrcp.pop %v748
    %v750 = vmul.f32 1.0, %v749
    %v751 = vtanh.pop %v735
    %v752 = vxor.u32 %v737, 2147483648
    %v753 = vmul.f32 %v752, 1.442695
    %v754 = vpow.pop %v753
    %v755 = vadd.f32 %v754, 1.0
    %v756 = vrcp.pop %v755
    %v757 = vmul.f32 1.0, %v756
    %v758 = vmul.f32 %v750, %v517
    %v759 = vmul.f32 %v744, %v751
    %v760 = vadd.f32 %v758, %v759
    %v761 = vtanh.pop %v760
    %v762 = vmul.f32 %v757, %v761
    %763 = vst [vmem:[#allocation2 + $0x1] sm:$0x1] %v762
    %v764 = vld [vmem:[#allocation7] sm:$0xff]
    %v765 = vld [vmem:[#allocation7 + $0x8] sm:$0xff]
    %v766 = vld [vmem:[#allocation7 + $0x10] sm:$0xff]
    %v767 = vld [vmem:[#allocation7 + $0x18] sm:$0xff]
    %v768 = vld [vmem:[#allocation7 + $0x20] sm:$0xff]
    %v769 = vld [vmem:[#allocation7 + $0x28] sm:$0xff]
    %v770 = vld [vmem:[#allocation7 + $0x30] sm:$0xff]
    %v771 = vld [vmem:[#allocation7 + $0x38] sm:$0xff]
    %v772 = vld [vmem:[#allocation7 + $0x40] sm:$0xff]
    %v773 = vld [vmem:[#allocation7 + $0x48] sm:$0xff]
    %v774 = vld [vmem:[#allocation7 + $0x50] sm:$0xff]
    %v775 = vld [vmem:[#allocation7 + $0x58] sm:$0xff]
    %v776 = vld [vmem:[#allocation7 + $0x60] sm:$0xff]
    %v777 = vld [vmem:[#allocation7 + $0x68] sm:$0xff]
    %v778 = vld [vmem:[#allocation7 + $0x70] sm:$0xff]
    %v779 = vld [vmem:[#allocation7 + $0x78] sm:$0xff]
    %v780 = vld [vmem:[#allocation7 + $0x80] sm:$0xff]
    %v781 = vld [vmem:[#allocation7 + $0x88] sm:$0xff]
    %v782 = vld [vmem:[#allocation7 + $0x90] sm:$0xff]
    %v783 = vld [vmem:[#allocation7 + $0x98] sm:$0xff]
    %v784 = vld [vmem:[#allocation7 + $0xa0] sm:$0xff]
    %v785 = vld [vmem:[#allocation7 + $0xa8] sm:$0xff]
    %v786 = vld [vmem:[#allocation7 + $0xb0] sm:$0xff]
    %v787 = vld [vmem:[#allocation7 + $0xb8] sm:$0xff]
    %v788 = vld [vmem:[#allocation7 + $0xc0] sm:$0xff]
    %v789 = vld [vmem:[#allocation7 + $0xc8] sm:$0xff]
    %v790 = vld [vmem:[#allocation7 + $0xd0] sm:$0xff]
    %v791 = vld [vmem:[#allocation7 + $0xd8] sm:$0xff]
    %v792 = vld [vmem:[#allocation7 + $0xe0] sm:$0xff]
    %v793 = vld [vmem:[#allocation7 + $0xe8] sm:$0xff]
    %v794 = vld [vmem:[#allocation7 + $0xf0] sm:$0xff]
    %v795 = vld [vmem:[#allocation7 + $0xf8] sm:$0xff]
    %v796 = vld [vmem:[#allocation7 + $0x100] sm:$0xff]
    %v797 = vld [vmem:[#allocation7 + $0x108] sm:$0xff]
    %v798 = vld [vmem:[#allocation7 + $0x110] sm:$0xff]
    %v799 = vld [vmem:[#allocation7 + $0x118] sm:$0xff]
    %v800 = vld [vmem:[#allocation7 + $0x120] sm:$0xff]
    %v801 = vld [vmem:[#allocation7 + $0x128] sm:$0xff]
    %v802 = vld [vmem:[#allocation7 + $0x130] sm:$0xff]
    %v803 = vld [vmem:[#allocation7 + $0x138] sm:$0xff]
    %v804 = vld [vmem:[#allocation7 + $0x140] sm:$0xff]
    %v805 = vld [vmem:[#allocation7 + $0x148] sm:$0xff]
    %v806 = vld [vmem:[#allocation7 + $0x150] sm:$0xff]
    %v807 = vld [vmem:[#allocation7 + $0x158] sm:$0xff]
    %v808 = vld [vmem:[#allocation7 + $0x160] sm:$0xff]
    %v809 = vld [vmem:[#allocation7 + $0x168] sm:$0xff]
    %v810 = vld [vmem:[#allocation7 + $0x170] sm:$0xff]
    %v811 = vld [vmem:[#allocation7 + $0x178] sm:$0xff]
    %v812 = vld [vmem:[#allocation7 + $0x180] sm:$0xff]
    %v813 = vld [vmem:[#allocation7 + $0x188] sm:$0xff]
    %v814 = vld [vmem:[#allocation7 + $0x190] sm:$0xff]
    %v815 = vld [vmem:[#allocation7 + $0x198] sm:$0xff]
    %v816 = vld [vmem:[#allocation7 + $0x1a0] sm:$0xff]
    %v817 = vld [vmem:[#allocation7 + $0x1a8] sm:$0xff]
    %v818 = vld [vmem:[#allocation7 + $0x1b0] sm:$0xff]
    %v819 = vld [vmem:[#allocation7 + $0x1b8] sm:$0xff]
    %v820 = vld [vmem:[#allocation7 + $0x1c0] sm:$0xff]
    %v821 = vld [vmem:[#allocation7 + $0x1c8] sm:$0xff]
    %v822 = vld [vmem:[#allocation7 + $0x1d0] sm:$0xff]
    %v823 = vld [vmem:[#allocation7 + $0x1d8] sm:$0xff]
    %v824 = vld [vmem:[#allocation7 + $0x1e0] sm:$0xff]
    %v825 = vld [vmem:[#allocation7 + $0x1e8] sm:$0xff]
    %v826 = vld [vmem:[#allocation7 + $0x1f0] sm:$0xff]
    %v827 = vld [vmem:[#allocation7 + $0x1f8] sm:$0xff]
    %v828 = vrot.slane %v215, 2
    %v829 = vrot.slane %v217, 2
    %v830 = vrot.slane %v286, 2
    %v831 = vrot.slane %v288, 2
    %836 = vmatprep.subr.mxu0 %v765
    %837 = vmatpush1.msra.mxu0 %v764
    %838 = vmatprep.subr.mxu0 %v769
    %839 = vmatpush1.msra.mxu0 %v768
    %840 = vmatprep.subr.mxu0 %v773
    %841 = vmatpush1.msra.mxu0 %v772
    %842 = vmatprep.subr.mxu0 %v777
    %843 = vmatpush1.msra.mxu0 %v776
    %844 = vmatprep.subr.mxu0 %v781
    %845 = vmatpush1.msra.mxu0 %v780
    %846 = vmatprep.subr.mxu0 %v785
    %847 = vmatpush1.msra.mxu0 %v784
    %848 = vmatprep.subr.mxu0 %v789
    %849 = vmatpush1.msra.mxu0 %v788
    %850 = vmatprep.subr.mxu0 %v793
    %851 = vmatpush1.msra.mxu0 %v792
    %852 = vmatprep.subr.mxu0 %v797
    %853 = vmatpush1.msra.mxu0 %v796
    %854 = vmatprep.subr.mxu0 %v801
    %855 = vmatpush1.msra.mxu0 %v800
    %856 = vmatprep.subr.mxu0 %v805
    %857 = vmatpush1.msra.mxu0 %v804
    %858 = vmatprep.subr.mxu0 %v809
    %859 = vmatpush1.msra.mxu0 %v808
    %860 = vmatprep.subr.mxu0 %v813
    %861 = vmatpush1.msra.mxu0 %v812
    %862 = vmatprep.subr.mxu0 %v817
    %863 = vmatpush1.msra.mxu0 %v816
    %864 = vmatprep.subr.mxu0 %v821
    %865 = vmatpush1.msra.mxu0 %v820
    %866 = vmatprep.subr.mxu0 %v825
    %867 = vmatpush1.msra.mxu0 %v824
    %868 = vmatprep.subr.mxu0 0.0
    %869 = vmatpush1.msra.mxu0 0.0
    %870 = vmatprep.subr.mxu0 0.0
    %871 = vmatpush1.msra.mxu0 0.0
    %872 = vmatprep.subr.mxu0 0.0
    %873 = vmatpush1.msra.mxu0 0.0
    %874 = vmatprep.subr.mxu0 0.0
    %875 = vmatpush1.msra.mxu0 0.0
    %876 = vmatprep.subr.mxu0 0.0
    %877 = vmatpush1.msra.mxu0 0.0
    %878 = vmatprep.subr.mxu0 0.0
    %879 = vmatpush1.msra.mxu0 0.0
    %880 = vmatprep.subr.mxu0 0.0
    %881 = vmatpush1.msra.mxu0 0.0
    %882 = vmatprep.subr.mxu0 0.0
    %883 = vmatpush1.msra.mxu0 0.0
    %884 = vmatprep.subr.mxu0 0.0
    %885 = vmatpush1.msra.mxu0 0.0
    %886 = vmatprep.subr.mxu0 0.0
    %887 = vmatpush1.msra.mxu0 0.0
    %888 = vmatprep.subr.mxu0 0.0
    %889 = vmatpush1.msra.mxu0 0.0
    %890 = vmatprep.subr.mxu0 0.0
    %891 = vmatpush1.msra.mxu0 0.0
    %892 = vmatprep.subr.mxu0 0.0
    %893 = vmatpush1.msra.mxu0 0.0
    %894 = vmatprep.subr.mxu0 0.0
    %895 = vmatpush1.msra.mxu0 0.0
    %896 = vmatprep.subr.mxu0 0.0
    %897 = vmatpush1.msra.mxu0 0.0
    %898 = vmatprep.subr.mxu0 0.0
    %899 = vmatpush1.msra.mxu0 0.0
    %900 = vmatprep.mubr.f32.mxu0 0.0
    %901 = vmatmul.mubr.f32.gmra.mrb[0].mxu0 %v762
    %v902 = vpop.f32.mrb[0].mxu0
    %v903 = vadd.f32 %v828, %v902
    %v904 = vpop.f32.mrb[0].mxu0
    %v905 = vadd.f32 %v829, %v904
    %906 = vdwg.mxu0
    %907 = vmatprep.subr.mxu0 %v767
    %908 = vmatpush1.msra.mxu0 %v766
    %909 = vmatprep.subr.mxu0 %v771
    %910 = vmatpush1.msra.mxu0 %v770
    %911 = vmatprep.subr.mxu0 %v775
    %912 = vmatpush1.msra.mxu0 %v774
    %913 = vmatprep.subr.mxu0 %v779
    %914 = vmatpush1.msra.mxu0 %v778
    %915 = vmatprep.subr.mxu0 %v783
    %916 = vmatpush1.msra.mxu0 %v782
    %917 = vmatprep.subr.mxu0 %v787
    %918 = vmatpush1.msra.mxu0 %v786
    %919 = vmatprep.subr.mxu0 %v791
    %920 = vmatpush1.msra.mxu0 %v790
    %921 = vmatprep.subr.mxu0 %v795
    %922 = vmatpush1.msra.mxu0 %v794
    %923 = vmatprep.subr.mxu0 %v799
    %924 = vmatpush1.msra.mxu0 %v798
    %925 = vmatprep.subr.mxu0 %v803
    %926 = vmatpush1.msra.mxu0 %v802
    %927 = vmatprep.subr.mxu0 %v807
    %928 = vmatpush1.msra.mxu0 %v806
    %929 = vmatprep.subr.mxu0 %v811
    %930 = vmatpush1.msra.mxu0 %v810
    %931 = vmatprep.subr.mxu0 %v815
    %932 = vmatpush1.msra.mxu0 %v814
    %933 = vmatprep.subr.mxu0 %v819
    %934 = vmatpush1.msra.mxu0 %v818
    %935 = vmatprep.subr.mxu0 %v823
    %936 = vmatpush1.msra.mxu0 %v822
    %937 = vmatprep.subr.mxu0 %v827
    %938 = vmatpush1.msra.mxu0 %v826
    %939 = vmatprep.subr.mxu0 0.0
    %940 = vmatpush1.msra.mxu0 0.0
    %941 = vmatprep.subr.mxu0 0.0
    %942 = vmatpush1.msra.mxu0 0.0
    %943 = vmatprep.subr.mxu0 0.0
    %944 = vmatpush1.msra.mxu0 0.0
    %945 = vmatprep.subr.mxu0 0.0
    %946 = vmatpush1.msra.mxu0 0.0
    %947 = vmatprep.subr.mxu0 0.0
    %948 = vmatpush1.msra.mxu0 0.0
    %949 = vmatprep.subr.mxu0 0.0
    %950 = vmatpush1.msra.mxu0 0.0
    %951 = vmatprep.subr.mxu0 0.0
    %952 = vmatpush1.msra.mxu0 0.0
    %953 = vmatprep.subr.mxu0 0.0
    %954 = vmatpush1.msra.mxu0 0.0
    %955 = vmatprep.subr.mxu0 0.0
    %956 = vmatpush1.msra.mxu0 0.0
    %957 = vmatprep.subr.mxu0 0.0
    %958 = vmatpush1.msra.mxu0 0.0
    %959 = vmatprep.subr.mxu0 0.0
    %960 = vmatpush1.msra.mxu0 0.0
    %961 = vmatprep.subr.mxu0 0.0
    %962 = vmatpush1.msra.mxu0 0.0
    %963 = vmatprep.subr.mxu0 0.0
    %964 = vmatpush1.msra.mxu0 0.0
    %965 = vmatprep.subr.mxu0 0.0
    %966 = vmatpush1.msra.mxu0 0.0
    %967 = vmatprep.subr.mxu0 0.0
    %968 = vmatpush1.msra.mxu0 0.0
    %969 = vmatprep.subr.mxu0 0.0
    %970 = vmatpush1.msra.mxu0 0.0
    %971 = vmatprep.mubr.f32.mxu0 0.0
    %972 = vmatmul.mubr.f32.gmra.mrb[0].mxu0 %v762
    %v973 = vpop.f32.mrb[0].mxu0
    %v974 = vadd.f32 %v830, %v973
    %v975 = vpop.f32.mrb[0].mxu0
    %v976 = vadd.f32 %v831, %v975
    %977 = vdwg.mxu0
    %v978 = vxor.u32 %v903, 2147483648
    %v979 = vmul.f32 %v978, 1.442695
    %v980 = vpow.pop %v979
    %v981 = vadd.f32 %v980, 1.0
    %v982 = vrcp.pop %v981
    %v983 = vmul.f32 1.0, %v982
    %v984 = vxor.u32 %v905, 2147483648
    %v985 = vmul.f32 %v984, 1.442695
    %v986 = vpow.pop %v985
    %v987 = vadd.f32 %v986, 1.0
    %v988 = vrcp.pop %v987
    %v989 = vmul.f32 1.0, %v988
    %v990 = vtanh.pop %v974
    %v991 = vxor.u32 %v976, 2147483648
    %v992 = vmul.f32 %v991, 1.442695
    %v993 = vpow.pop %v992
    %v994 = vadd.f32 %v993, 1.0
    %v995 = vrcp.pop %v994
    %v996 = vmul.f32 1.0, %v995
    %v997 = vmul.f32 %v989, %v760
    %v998 = vmul.f32 %v983, %v990
    %v999 = vadd.f32 %v997, %v998
    %v1000 = vtanh.pop %v999
    %v1001 = vmul.f32 %v996, %v1000
    %1002 = vst [vmem:[#allocation2 + $0x2] sm:$0x1] %v1001
    %v1003 = vld [vmem:[#allocation7] sm:$0xff]
    %v1004 = vld [vmem:[#allocation7 + $0x8] sm:$0xff]
    %v1005 = vld [vmem:[#allocation7 + $0x10] sm:$0xff]
    %v1006 = vld [vmem:[#allocation7 + $0x18] sm:$0xff]
    %v1007 = vld [vmem:[#allocation7 + $0x20] sm:$0xff]
    %v1008 = vld [vmem:[#allocation7 + $0x28] sm:$0xff]
    %v1009 = vld [vmem:[#allocation7 + $0x30] sm:$0xff]
    %v1010 = vld [vmem:[#allocation7 + $0x38] sm:$0xff]
    %v1011 = vld [vmem:[#allocation7 + $0x40] sm:$0xff]
    %v1012 = vld [vmem:[#allocation7 + $0x48] sm:$0xff]
    %v1013 = vld [vmem:[#allocation7 + $0x50] sm:$0xff]
    %v1014 = vld [vmem:[#allocation7 + $0x58] sm:$0xff]
    %v1015 = vld [vmem:[#allocation7 + $0x60] sm:$0xff]
    %v1016 = vld [vmem:[#allocation7 + $0x68] sm:$0xff]
    %v1017 = vld [vmem:[#allocation7 + $0x70] sm:$0xff]
    %v1018 = vld [vmem:[#allocation7 + $0x78] sm:$0xff]
    %v1019 = vld [vmem:[#allocation7 + $0x80] sm:$0xff]
    %v1020 = vld [vmem:[#allocation7 + $0x88] sm:$0xff]
    %v1021 = vld [vmem:[#allocation7 + $0x90] sm:$0xff]
    %v1022 = vld [vmem:[#allocation7 + $0x98] sm:$0xff]
    %v1023 = vld [vmem:[#allocation7 + $0xa0] sm:$0xff]
    %v1024 = vld [vmem:[#allocation7 + $0xa8] sm:$0xff]
    %v1025 = vld [vmem:[#allocation7 + $0xb0] sm:$0xff]
    %v1026 = vld [vmem:[#allocation7 + $0xb8] sm:$0xff]
    %v1027 = vld [vmem:[#allocation7 + $0xc0] sm:$0xff]
    %v1028 = vld [vmem:[#allocation7 + $0xc8] sm:$0xff]
    %v1029 = vld [vmem:[#allocation7 + $0xd0] sm:$0xff]
    %v1030 = vld [vmem:[#allocation7 + $0xd8] sm:$0xff]
    %v1031 = vld [vmem:[#allocation7 + $0xe0] sm:$0xff]
    %v1032 = vld [vmem:[#allocation7 + $0xe8] sm:$0xff]
    %v1033 = vld [vmem:[#allocation7 + $0xf0] sm:$0xff]
    %v1034 = vld [vmem:[#allocation7 + $0xf8] sm:$0xff]
    %v1035 = vld [vmem:[#allocation7 + $0x100] sm:$0xff]
    %v1036 = vld [vmem:[#allocation7 + $0x108] sm:$0xff]
    %v1037 = vld [vmem:[#allocation7 + $0x110] sm:$0xff]
    %v1038 = vld [vmem:[#allocation7 + $0x118] sm:$0xff]
    %v1039 = vld [vmem:[#allocation7 + $0x120] sm:$0xff]
    %v1040 = vld [vmem:[#allocation7 + $0x128] sm:$0xff]
    %v1041 = vld [vmem:[#allocation7 + $0x130] sm:$0xff]
    %v1042 = vld [vmem:[#allocation7 + $0x138] sm:$0xff]
    %v1043 = vld [vmem:[#allocation7 + $0x140] sm:$0xff]
    %v1044 = vld [vmem:[#allocation7 + $0x148] sm:$0xff]
    %v1045 = vld [vmem:[#allocation7 + $0x150] sm:$0xff]
    %v1046 = vld [vmem:[#allocation7 + $0x158] sm:$0xff]
    %v1047 = vld [vmem:[#allocation7 + $0x160] sm:$0xff]
    %v1048 = vld [vmem:[#allocation7 + $0x168] sm:$0xff]
    %v1049 = vld [vmem:[#allocation7 + $0x170] sm:$0xff]
    %v1050 = vld [vmem:[#allocation7 + $0x178] sm:$0xff]
    %v1051 = vld [vmem:[#allocation7 + $0x180] sm:$0xff]
    %v1052 = vld [vmem:[#allocation7 + $0x188] sm:$0xff]
    %v1053 = vld [vmem:[#allocation7 + $0x190] sm:$0xff]
    %v1054 = vld [vmem:[#allocation7 + $0x198] sm:$0xff]
    %v1055 = vld [vmem:[#allocation7 + $0x1a0] sm:$0xff]
    %v1056 = vld [vmem:[#allocation7 + $0x1a8] sm:$0xff]
    %v1057 = vld [vmem:[#allocation7 + $0x1b0] sm:$0xff]
    %v1058 = vld [vmem:[#allocation7 + $0x1b8] sm:$0xff]
    %v1059 = vld [vmem:[#allocation7 + $0x1c0] sm:$0xff]
    %v1060 = vld [vmem:[#allocation7 + $0x1c8] sm:$0xff]
    %v1061 = vld [vmem:[#allocation7 + $0x1d0] sm:$0xff]
    %v1062 = vld [vmem:[#allocation7 + $0x1d8] sm:$0xff]
    %v1063 = vld [vmem:[#allocation7 + $0x1e0] sm:$0xff]
    %v1064 = vld [vmem:[#allocation7 + $0x1e8] sm:$0xff]
    %v1065 = vld [vmem:[#allocation7 + $0x1f0] sm:$0xff]
    %v1066 = vld [vmem:[#allocation7 + $0x1f8] sm:$0xff]
    %v1067 = vrot.slane %v215, 3
    %v1068 = vrot.slane %v217, 3
    %v1069 = vrot.slane %v286, 3
    %v1070 = vrot.slane %v288, 3
    %1075 = vmatprep.subr.mxu0 %v1004
    %1076 = vmatpush1.msra.mxu0 %v1003
    %1077 = vmatprep.subr.mxu0 %v1008
    %1078 = vmatpush1.msra.mxu0 %v1007
    %1079 = vmatprep.subr.mxu0 %v1012
    %1080 = vmatpush1.msra.mxu0 %v1011
    %1081 = vmatprep.subr.mxu0 %v1016
    %1082 = vmatpush1.msra.mxu0 %v1015
    %1083 = vmatprep.subr.mxu0 %v1020
    %1084 = vmatpush1.msra.mxu0 %v1019
    %1085 = vmatprep.subr.mxu0 %v1024
    %1086 = vmatpush1.msra.mxu0 %v1023
    %1087 = vmatprep.subr.mxu0 %v1028
    %1088 = vmatpush1.msra.mxu0 %v1027
    %1089 = vmatprep.subr.mxu0 %v1032
    %1090 = vmatpush1.msra.mxu0 %v1031
    %1091 = vmatprep.subr.mxu0 %v1036
    %1092 = vmatpush1.msra.mxu0 %v1035
    %1093 = vmatprep.subr.mxu0 %v1040
    %1094 = vmatpush1.msra.mxu0 %v1039
    %1095 = vmatprep.subr.mxu0 %v1044
    %1096 = vmatpush1.msra.mxu0 %v1043
    %1097 = vmatprep.subr.mxu0 %v1048
    %1098 = vmatpush1.msra.mxu0 %v1047
    %1099 = vmatprep.subr.mxu0 %v1052
    %1100 = vmatpush1.msra.mxu0 %v1051
    %1101 = vmatprep.subr.mxu0 %v1056
    %1102 = vmatpush1.msra.mxu0 %v1055
    %1103 = vmatprep.subr.mxu0 %v1060
    %1104 = vmatpush1.msra.mxu0 %v1059
    %1105 = vmatprep.subr.mxu0 %v1064
    %1106 = vmatpush1.msra.mxu0 %v1063
    %1107 = vmatprep.subr.mxu0 0.0
    %1108 = vmatpush1.msra.mxu0 0.0
    %1109 = vmatprep.subr.mxu0 0.0
    %1110 = vmatpush1.msra.mxu0 0.0
    %1111 = vmatprep.subr.mxu0 0.0
    %1112 = vmatpush1.msra.mxu0 0.0
    %1113 = vmatprep.subr.mxu0 0.0
    %1114 = vmatpush1.msra.mxu0 0.0
    %1115 = vmatprep.subr.mxu0 0.0
    %1116 = vmatpush1.msra.mxu0 0.0
    %1117 = vmatprep.subr.mxu0 0.0
    %1118 = vmatpush1.msra.mxu0 0.0
    %1119 = vmatprep.subr.mxu0 0.0
    %1120 = vmatpush1.msra.mxu0 0.0
    %1121 = vmatprep.subr.mxu0 0.0
    %1122 = vmatpush1.msra.mxu0 0.0
    %1123 = vmatprep.subr.mxu0 0.0
    %1124 = vmatpush1.msra.mxu0 0.0
    %1125 = vmatprep.subr.mxu0 0.0
    %1126 = vmatpush1.msra.mxu0 0.0
    %1127 = vmatprep.subr.mxu0 0.0
    %1128 = vmatpush1.msra.mxu0 0.0
    %1129 = vmatprep.subr.mxu0 0.0
    %1130 = vmatpush1.msra.mxu0 0.0
    %1131 = vmatprep.subr.mxu0 0.0
    %1132 = vmatpush1.msra.mxu0 0.0
    %1133 = vmatprep.subr.mxu0 0.0
    %1134 = vmatpush1.msra.mxu0 0.0
    %1135 = vmatprep.subr.mxu0 0.0
    %1136 = vmatpush1.msra.mxu0 0.0
    %1137 = vmatprep.subr.mxu0 0.0
    %1138 = vmatpush1.msra.mxu0 0.0
    %1139 = vmatprep.mubr.f32.mxu0 0.0
    %1140 = vmatmul.mubr.f32.gmra.mrb[0].mxu0 %v1001
    %v1141 = vpop.f32.mrb[0].mxu0
    %v1142 = vadd.f32 %v1067, %v1141
    %v1143 = vpop.f32.mrb[0].mxu0
    %v1144 = vadd.f32 %v1068, %v1143
    %1145 = vdwg.mxu0
    %1146 = vmatprep.subr.mxu0 %v1006
    %1147 = vmatpush1.msra.mxu0 %v1005
    %1148 = vmatprep.subr.mxu0 %v1010
    %1149 = vmatpush1.msra.mxu0 %v1009
    %1150 = vmatprep.subr.mxu0 %v1014
    %1151 = vmatpush1.msra.mxu0 %v1013
    %1152 = vmatprep.subr.mxu0 %v1018
    %1153 = vmatpush1.msra.mxu0 %v1017
    %1154 = vmatprep.subr.mxu0 %v1022
    %1155 = vmatpush1.msra.mxu0 %v1021
    %1156 = vmatprep.subr.mxu0 %v1026
    %1157 = vmatpush1.msra.mxu0 %v1025
    %1158 = vmatprep.subr.mxu0 %v1030
    %1159 = vmatpush1.msra.mxu0 %v1029
    %1160 = vmatprep.subr.mxu0 %v1034
    %1161 = vmatpush1.msra.mxu0 %v1033
    %1162 = vmatprep.subr.mxu0 %v1038
    %1163 = vmatpush1.msra.mxu0 %v1037
    %1164 = vmatprep.subr.mxu0 %v1042
    %1165 = vmatpush1.msra.mxu0 %v1041
    %1166 = vmatprep.subr.mxu0 %v1046
    %1167 = vmatpush1.msra.mxu0 %v1045
    %1168 = vmatprep.subr.mxu0 %v1050
    %1169 = vmatpush1.msra.mxu0 %v1049
    %1170 = vmatprep.subr.mxu0 %v1054
    %1171 = vmatpush1.msra.mxu0 %v1053
    %1172 = vmatprep.subr.mxu0 %v1058
    %1173 = vmatpush1.msra.mxu0 %v1057
    %1174 = vmatprep.subr.mxu0 %v1062
    %1175 = vmatpush1.msra.mxu0 %v1061
    %1176 = vmatprep.subr.mxu0 %v1066
    %1177 = vmatpush1.msra.mxu0 %v1065
    %1178 = vmatprep.subr.mxu0 0.0
    %1179 = vmatpush1.msra.mxu0 0.0
    %1180 = vmatprep.subr.mxu0 0.0
    %1181 = vmatpush1.msra.mxu0 0.0
    %1182 = vmatprep.subr.mxu0 0.0
    %1183 = vmatpush1.msra.mxu0 0.0
    %1184 = vmatprep.subr.mxu0 0.0
    %1185 = vmatpush1.msra.mxu0 0.0
    %1186 = vmatprep.subr.mxu0 0.0
    %1187 = vmatpush1.msra.mxu0 0.0
    %1188 = vmatprep.subr.mxu0 0.0
    %1189 = vmatpush1.msra.mxu0 0.0
    %1190 = vmatprep.subr.mxu0 0.0
    %1191 = vmatpush1.msra.mxu0 0.0
    %1192 = vmatprep.subr.mxu0 0.0
    %1193 = vmatpush1.msra.mxu0 0.0
    %1194 = vmatprep.subr.mxu0 0.0
    %1195 = vmatpush1.msra.mxu0 0.0
    %1196 = vmatprep.subr.mxu0 0.0
    %1197 = vmatpush1.msra.mxu0 0.0
    %1198 = vmatprep.subr.mxu0 0.0
    %1199 = vmatpush1.msra.mxu0 0.0
    %1200 = vmatprep.subr.mxu0 0.0
    %1201 = vmatpush1.msra.mxu0 0.0
    %1202 = vmatprep.subr.mxu0 0.0
    %1203 = vmatpush1.msra.mxu0 0.0
    %1204 = vmatprep.subr.mxu0 0.0
    %1205 = vmatpush1.msra.mxu0 0.0
    %1206 = vmatprep.subr.mxu0 0.0
    %1207 = vmatpush1.msra.mxu0 0.0
    %1208 = vmatprep.subr.mxu0 0.0
    %1209 = vmatpush1.msra.mxu0 0.0
    %1210 = vmatprep.mubr.f32.mxu0 0.0
    %1211 = vmatmul.mubr.f32.gmra.mrb[0].mxu0 %v1001
    %v1212 = vpop.f32.mrb[0].mxu0
    %v1213 = vadd.f32 %v1069, %v1212
    %v1214 = vpop.f32.mrb[0].mxu0
    %v1215 = vadd.f32 %v1070, %v1214
    %1216 = vdwg.mxu0
    %v1217 = vxor.u32 %v1142, 2147483648
    %v1218 = vmul.f32 %v1217, 1.442695
    %v1219 = vpow.pop %v1218
    %v1220 = vadd.f32 %v1219, 1.0
    %v1221 = vrcp.pop %v1220
    %v1222 = vmul.f32 1.0, %v1221
    %v1223 = vxor.u32 %v1144, 2147483648
    %v1224 = vmul.f32 %v1223, 1.442695
    %v1225 = vpow.pop %v1224
    %v1226 = vadd.f32 %v1225, 1.0
    %v1227 = vrcp.pop %v1226
    %v1228 = vmul.f32 1.0, %v1227
    %v1229 = vtanh.pop %v1213
    %v1230 = vxor.u32 %v1215, 2147483648
    %v1231 = vmul.f32 %v1230, 1.442695
    %v1232 = vpow.pop %v1231
    %v1233 = vadd.f32 %v1232, 1.0
    %v1234 = vrcp.pop %v1233
    %v1235 = vmul.f32 1.0, %v1234
    %v1236 = vmul.f32 %v1228, %v999
    %v1237 = vmul.f32 %v1222, %v1229
    %v1238 = vadd.f32 %v1236, %v1237
    %v1239 = vtanh.pop %v1238
    %v1240 = vmul.f32 %v1235, %v1239
    %1241 = vst [vmem:[#allocation2 + $0x3] sm:$0x1] %v1240
    %v1242 = vld [vmem:[#allocation7] sm:$0xff]
    %v1243 = vld [vmem:[#allocation7 + $0x8] sm:$0xff]
    %v1244 = vld [vmem:[#allocation7 + $0x10] sm:$0xff]
    %v1245 = vld [vmem:[#allocation7 + $0x18] sm:$0xff]
    %v1246 = vld [vmem:[#allocation7 + $0x20] sm:$0xff]
    %v1247 = vld [vmem:[#allocation7 + $0x28] sm:$0xff]
    %v1248 = vld [vmem:[#allocation7 + $0x30] sm:$0xff]
    %v1249 = vld [vmem:[#allocation7 + $0x38] sm:$0xff]
    %v1250 = vld [vmem:[#allocation7 + $0x40] sm:$0xff]
    %v1251 = vld [vmem:[#allocation7 + $0x48] sm:$0xff]
    %v1252 = vld [vmem:[#allocation7 + $0x50] sm:$0xff]
    %v1253 = vld [vmem:[#allocation7 + $0x58] sm:$0xff]
    %v1254 = vld [vmem:[#allocation7 + $0x60] sm:$0xff]
    %v1255 = vld [vmem:[#allocation7 + $0x68] sm:$0xff]
    %v1256 = vld [vmem:[#allocation7 + $0x70] sm:$0xff]
    %v1257 = vld [vmem:[#allocation7 + $0x78] sm:$0xff]
    %v1258 = vld [vmem:[#allocation7 + $0x80] sm:$0xff]
    %v1259 = vld [vmem:[#allocation7 + $0x88] sm:$0xff]
    %v1260 = vld [vmem:[#allocation7 + $0x90] sm:$0xff]
    %v1261 = vld [vmem:[#allocation7 + $0x98] sm:$0xff]
    %v1262 = vld [vmem:[#allocation7 + $0xa0] sm:$0xff]
    %v1263 = vld [vmem:[#allocation7 + $0xa8] sm:$0xff]
    %v1264 = vld [vmem:[#allocation7 + $0xb0] sm:$0xff]
    %v1265 = vld [vmem:[#allocation7 + $0xb8] sm:$0xff]
    %v1266 = vld [vmem:[#allocation7 + $0xc0] sm:$0xff]
    %v1267 = vld [vmem:[#allocation7 + $0xc8] sm:$0xff]
    %v1268 = vld [vmem:[#allocation7 + $0xd0] sm:$0xff]
    %v1269 = vld [vmem:[#allocation7 + $0xd8] sm:$0xff]
    %v1270 = vld [vmem:[#allocation7 + $0xe0] sm:$0xff]
    %v1271 = vld [vmem:[#allocation7 + $0xe8] sm:$0xff]
    %v1272 = vld [vmem:[#allocation7 + $0xf0] sm:$0xff]
    %v1273 = vld [vmem:[#allocation7 + $0xf8] sm:$0xff]
    %v1274 = vld [vmem:[#allocation7 + $0x100] sm:$0xff]
    %v1275 = vld [vmem:[#allocation7 + $0x108] sm:$0xff]
    %v1276 = vld [vmem:[#allocation7 + $0x110] sm:$0xff]
    %v1277 = vld [vmem:[#allocation7 + $0x118] sm:$0xff]
    %v1278 = vld [vmem:[#allocation7 + $0x120] sm:$0xff]
    %v1279 = vld [vmem:[#allocation7 + $0x128] sm:$0xff]
    %v1280 = vld [vmem:[#allocation7 + $0x130] sm:$0xff]
    %v1281 = vld [vmem:[#allocation7 + $0x138] sm:$0xff]
    %v1282 = vld [vmem:[#allocation7 + $0x140] sm:$0xff]
    %v1283 = vld [vmem:[#allocation7 + $0x148] sm:$0xff]
    %v1284 = vld [vmem:[#allocation7 + $0x150] sm:$0xff]
    %v1285 = vld [vmem:[#allocation7 + $0x158] sm:$0xff]
    %v1286 = vld [vmem:[#allocation7 + $0x160] sm:$0xff]
    %v1287 = vld [vmem:[#allocation7 + $0x168] sm:$0xff]
    %v1288 = vld [vmem:[#allocation7 + $0x170] sm:$0xff]
    %v1289 = vld [vmem:[#allocation7 + $0x178] sm:$0xff]
    %v1290 = vld [vmem:[#allocation7 + $0x180] sm:$0xff]
    %v1291 = vld [vmem:[#allocation7 + $0x188] sm:$0xff]
    %v1292 = vld [vmem:[#allocation7 + $0x190] sm:$0xff]
    %v1293 = vld [vmem:[#allocation7 + $0x198] sm:$0xff]
    %v1294 = vld [vmem:[#allocation7 + $0x1a0] sm:$0xff]
    %v1295 = vld [vmem:[#allocation7 + $0x1a8] sm:$0xff]
    %v1296 = vld [vmem:[#allocation7 + $0x1b0] sm:$0xff]
    %v1297 = vld [vmem:[#allocation7 + $0x1b8] sm:$0xff]
    %v1298 = vld [vmem:[#allocation7 + $0x1c0] sm:$0xff]
    %v1299 = vld [vmem:[#allocation7 + $0x1c8] sm:$0xff]
    %v1300 = vld [vmem:[#allocation7 + $0x1d0] sm:$0xff]
    %v1301 = vld [vmem:[#allocation7 + $0x1d8] sm:$0xff]
    %v1302 = vld [vmem:[#allocation7 + $0x1e0] sm:$0xff]
    %v1303 = vld [vmem:[#allocation7 + $0x1e8] sm:$0xff]
    %v1304 = vld [vmem:[#allocation7 + $0x1f0] sm:$0xff]
    %v1305 = vld [vmem:[#allocation7 + $0x1f8] sm:$0xff]
    %v1306 = vrot.slane %v215, 4
    %v1307 = vrot.slane %v217, 4
    %v1308 = vrot.slane %v286, 4
    %v1309 = vrot.slane %v288, 4
    %1314 = vmatprep.subr.mxu0 %v1243
    %1315 = vmatpush1.msra.mxu0 %v1242
    %1316 = vmatprep.subr.mxu0 %v1247
    %1317 = vmatpush1.msra.mxu0 %v1246
    %1318 = vmatprep.subr.mxu0 %v1251
    %1319 = vmatpush1.msra.mxu0 %v1250
    %1320 = vmatprep.subr.mxu0 %v1255
    %1321 = vmatpush1.msra.mxu0 %v1254
    %1322 = vmatprep.subr.mxu0 %v1259
    %1323 = vmatpush1.msra.mxu0 %v1258
    %1324 = vmatprep.subr.mxu0 %v1263
    %1325 = vmatpush1.msra.mxu0 %v1262
    %1326 = vmatprep.subr.mxu0 %v1267
    %1327 = vmatpush1.msra.mxu0 %v1266
    %1328 = vmatprep.subr.mxu0 %v1271
    %1329 = vmatpush1.msra.mxu0 %v1270
    %1330 = vmatprep.subr.mxu0 %v1275
    %1331 = vmatpush1.msra.mxu0 %v1274
    %1332 = vmatprep.subr.mxu0 %v1279
    %1333 = vmatpush1.msra.mxu0 %v1278
    %1334 = vmatprep.subr.mxu0 %v1283
    %1335 = vmatpush1.msra.mxu0 %v1282
    %1336 = vmatprep.subr.mxu0 %v1287
    %1337 = vmatpush1.msra.mxu0 %v1286
    %1338 = vmatprep.subr.mxu0 %v1291
    %1339 = vmatpush1.msra.mxu0 %v1290
    %1340 = vmatprep.subr.mxu0 %v1295
    %1341 = vmatpush1.msra.mxu0 %v1294
    %1342 = vmatprep.subr.mxu0 %v1299
    %1343 = vmatpush1.msra.mxu0 %v1298
    %1344 = vmatprep.subr.mxu0 %v1303
    %1345 = vmatpush1.msra.mxu0 %v1302
    %1346 = vmatprep.subr.mxu0 0.0
    %1347 = vmatpush1.msra.mxu0 0.0
    %1348 = vmatprep.subr.mxu0 0.0
    %1349 = vmatpush1.msra.mxu0 0.0
    %1350 = vmatprep.subr.mxu0 0.0
    %1351 = vmatpush1.msra.mxu0 0.0
    %1352 = vmatprep.subr.mxu0 0.0
    %1353 = vmatpush1.msra.mxu0 0.0
    %1354 = vmatprep.subr.mxu0 0.0
    %1355 = vmatpush1.msra.mxu0 0.0
    %1356 = vmatprep.subr.mxu0 0.0
    %1357 = vmatpush1.msra.mxu0 0.0
    %1358 = vmatprep.subr.mxu0 0.0
    %1359 = vmatpush1.msra.mxu0 0.0
    %1360 = vmatprep.subr.mxu0 0.0
    %1361 = vmatpush1.msra.mxu0 0.0
    %1362 = vmatprep.subr.mxu0 0.0
    %1363 = vmatpush1.msra.mxu0 0.0
    %1364 = vmatprep.subr.mxu0 0.0
    %1365 = vmatpush1.msra.mxu0 0.0
    %1366 = vmatprep.subr.mxu0 0.0
    %1367 = vmatpush1.msra.mxu0 0.0
    %1368 = vmatprep.subr.mxu0 0.0
    %1369 = vmatpush1.msra.mxu0 0.0
    %1370 = vmatprep.subr.mxu0 0.0
    %1371 = vmatpush1.msra.mxu0 0.0
    %1372 = vmatprep.subr.mxu0 0.0
    %1373 = vmatpush1.msra.mxu0 0.0
    %1374 = vmatprep.subr.mxu0 0.0
    %1375 = vmatpush1.msra.mxu0 0.0
    %1376 = vmatprep.subr.mxu0 0.0
    %1377 = vmatpush1.msra.mxu0 0.0
    %1378 = vmatprep.mubr.f32.mxu0 0.0
    %1379 = vmatmul.mubr.f32.gmra.mrb[0].mxu0 %v1240
    %v1380 = vpop.f32.mrb[0].mxu0
    %v1381 = vadd.f32 %v1306, %v1380
    %v1382 = vpop.f32.mrb[0].mxu0
    %v1383 = vadd.f32 %v1307, %v1382
    %1384 = vdwg.mxu0
    %1385 = vmatprep.subr.mxu0 %v1245
    %1386 = vmatpush1.msra.mxu0 %v1244
    %1387 = vmatprep.subr.mxu0 %v1249
    %1388 = vmatpush1.msra.mxu0 %v1248
    %1389 = vmatprep.subr.mxu0 %v1253
    %1390 = vmatpush1.msra.mxu0 %v1252
    %1391 = vmatprep.subr.mxu0 %v1257
    %1392 = vmatpush1.msra.mxu0 %v1256
    %1393 = vmatprep.subr.mxu0 %v1261
    %1394 = vmatpush1.msra.mxu0 %v1260
    %1395 = vmatprep.subr.mxu0 %v1265
    %1396 = vmatpush1.msra.mxu0 %v1264
    %1397 = vmatprep.subr.mxu0 %v1269
    %1398 = vmatpush1.msra.mxu0 %v1268
    %1399 = vmatprep.subr.mxu0 %v1273
    %1400 = vmatpush1.msra.mxu0 %v1272
    %1401 = vmatprep.subr.mxu0 %v1277
    %1402 = vmatpush1.msra.mxu0 %v1276
    %1403 = vmatprep.subr.mxu0 %v1281
    %1404 = vmatpush1.msra.mxu0 %v1280
    %1405 = vmatprep.subr.mxu0 %v1285
    %1406 = vmatpush1.msra.mxu0 %v1284
    %1407 = vmatprep.subr.mxu0 %v1289
    %1408 = vmatpush1.msra.mxu0 %v1288
    %1409 = vmatprep.subr.mxu0 %v1293
    %1410 = vmatpush1.msra.mxu0 %v1292
    %1411 = vmatprep.subr.mxu0 %v1297
    %1412 = vmatpush1.msra.mxu0 %v1296
    %1413 = vmatprep.subr.mxu0 %v1301
    %1414 = vmatpush1.msra.mxu0 %v1300
    %1415 = vmatprep.subr.mxu0 %v1305
    %1416 = vmatpush1.msra.mxu0 %v1304
    %1417 = vmatprep.subr.mxu0 0.0
    %1418 = vmatpush1.msra.mxu0 0.0
    %1419 = vmatprep.subr.mxu0 0.0
    %1420 = vmatpush1.msra.mxu0 0.0
    %1421 = vmatprep.subr.mxu0 0.0
    %1422 = vmatpush1.msra.mxu0 0.0
    %1423 = vmatprep.subr.mxu0 0.0
    %1424 = vmatpush1.msra.mxu0 0.0
    %1425 = vmatprep.subr.mxu0 0.0
    %1426 = vmatpush1.msra.mxu0 0.0
    %1427 = vmatprep.subr.mxu0 0.0
    %1428 = vmatpush1.msra.mxu0 0.0
    %1429 = vmatprep.subr.mxu0 0.0
    %1430 = vmatpush1.msra.mxu0 0.0
    %1431 = vmatprep.subr.mxu0 0.0
    %1432 = vmatpush1.msra.mxu0 0.0
    %1433 = vmatprep.subr.mxu0 0.0
    %1434 = vmatpush1.msra.mxu0 0.0
    %1435 = vmatprep.subr.mxu0 0.0
    %1436 = vmatpush1.msra.mxu0 0.0
    %1437 = vmatprep.subr.mxu0 0.0
    %1438 = vmatpush1.msra.mxu0 0.0
    %1439 = vmatprep.subr.mxu0 0.0
    %1440 = vmatpush1.msra.mxu0 0.0
    %1441 = vmatprep.subr.mxu0 0.0
    %1442 = vmatpush1.msra.mxu0 0.0
    %1443 = vmatprep.subr.mxu0 0.0
    %1444 = vmatpush1.msra.mxu0 0.0
    %1445 = vmatprep.subr.mxu0 0.0
    %1446 = vmatpush1.msra.mxu0 0.0
    %1447 = vmatprep.subr.mxu0 0.0
    %1448 = vmatpush1.msra.mxu0 0.0
    %1449 = vmatprep.mubr.f32.mxu0 0.0
    %1450 = vmatmul.mubr.f32.gmra.mrb[0].mxu0 %v1240
    %v1451 = vpop.f32.mrb[0].mxu0
    %v1452 = vadd.f32 %v1308, %v1451
    %v1453 = vpop.f32.mrb[0].mxu0
    %v1454 = vadd.f32 %v1309, %v1453
    %1455 = vdwg.mxu0
    %v1456 = vxor.u32 %v1381, 2147483648
    %v1457 = vmul.f32 %v1456, 1.442695
    %v1458 = vpow.pop %v1457
    %v1459 = vadd.f32 %v1458, 1.0
    %v1460 = vrcp.pop %v1459
    %v1461 = vmul.f32 1.0, %v1460
    %v1462 = vxor.u32 %v1383, 2147483648
    %v1463 = vmul.f32 %v1462, 1.442695
    %v1464 = vpow.pop %v1463
    %v1465 = vadd.f32 %v1464, 1.0
    %v1466 = vrcp.pop %v1465
    %v1467 = vmul.f32 1.0, %v1466
    %v1468 = vtanh.pop %v1452
    %v1469 = vxor.u32 %v1454, 2147483648
    %v1470 = vmul.f32 %v1469, 1.442695
    %v1471 = vpow.pop %v1470
    %v1472 = vadd.f32 %v1471, 1.0
    %v1473 = vrcp.pop %v1472
    %v1474 = vmul.f32 1.0, %v1473
    %v1475 = vmul.f32 %v1467, %v1238
    %v1476 = vmul.f32 %v1461, %v1468
    %v1477 = vadd.f32 %v1475, %v1476
    %v1478 = vtanh.pop %v1477
    %v1479 = vmul.f32 %v1474, %v1478
    %1480 = vst [vmem:[#allocation2 + $0x4] sm:$0x1] %v1479
    %v1481 = vld [vmem:[#allocation7] sm:$0xff]
    %v1482 = vld [vmem:[#allocation7 + $0x8] sm:$0xff]
    %v1483 = vld [vmem:[#allocation7 + $0x10] sm:$0xff]
    %v1484 = vld [vmem:[#allocation7 + $0x18] sm:$0xff]
    %v1485 = vld [vmem:[#allocation7 + $0x20] sm:$0xff]
    %v1486 = vld [vmem:[#allocation7 + $0x28] sm:$0xff]
    %v1487 = vld [vmem:[#allocation7 + $0x30] sm:$0xff]
    %v1488 = vld [vmem:[#allocation7 + $0x38] sm:$0xff]
    %v1489 = vld [vmem:[#allocation7 + $0x40] sm:$0xff]
    %v1490 = vld [vmem:[#allocation7 + $0x48] sm:$0xff]
    %v1491 = vld [vmem:[#allocation7 + $0x50] sm:$0xff]
    %v1492 = vld [vmem:[#allocation7 + $0x58] sm:$0xff]
    %v1493 = vld [vmem:[#allocation7 + $0x60] sm:$0xff]
    %v1494 = vld [vmem:[#allocation7 + $0x68] sm:$0xff]
    %v1495 = vld [vmem:[#allocation7 + $0x70] sm:$0xff]
    %v1496 = vld [vmem:[#allocation7 + $0x78] sm:$0xff]
    %v1497 = vld [vmem:[#allocation7 + $0x80] sm:$0xff]
    %v1498 = vld [vmem:[#allocation7 + $0x88] sm:$0xff]
    %v1499 = vld [vmem:[#allocation7 + $0x90] sm:$0xff]
    %v1500 = vld [vmem:[#allocation7 + $0x98] sm:$0xff]
    %v1501 = vld [vmem:[#allocation7 + $0xa0] sm:$0xff]
    %v1502 = vld [vmem:[#allocation7 + $0xa8] sm:$0xff]
    %v1503 = vld [vmem:[#allocation7 + $0xb0] sm:$0xff]
    %v1504 = vld [vmem:[#allocation7 + $0xb8] sm:$0xff]
    %v1505 = vld [vmem:[#allocation7 + $0xc0] sm:$0xff]
    %v1506 = vld [vmem:[#allocation7 + $0xc8] sm:$0xff]
    %v1507 = vld [vmem:[#allocation7 + $0xd0] sm:$0xff]
    %v1508 = vld [vmem:[#allocation7 + $0xd8] sm:$0xff]
    %v1509 = vld [vmem:[#allocation7 + $0xe0] sm:$0xff]
    %v1510 = vld [vmem:[#allocation7 + $0xe8] sm:$0xff]
    %v1511 = vld [vmem:[#allocation7 + $0xf0] sm:$0xff]
    %v1512 = vld [vmem:[#allocation7 + $0xf8] sm:$0xff]
    %v1513 = vld [vmem:[#allocation7 + $0x100] sm:$0xff]
    %v1514 = vld [vmem:[#allocation7 + $0x108] sm:$0xff]
    %v1515 = vld [vmem:[#allocation7 + $0x110] sm:$0xff]
    %v1516 = vld [vmem:[#allocation7 + $0x118] sm:$0xff]
    %v1517 = vld [vmem:[#allocation7 + $0x120] sm:$0xff]
    %v1518 = vld [vmem:[#allocation7 + $0x128] sm:$0xff]
    %v1519 = vld [vmem:[#allocation7 + $0x130] sm:$0xff]
    %v1520 = vld [vmem:[#allocation7 + $0x138] sm:$0xff]
    %v1521 = vld [vmem:[#allocation7 + $0x140] sm:$0xff]
    %v1522 = vld [vmem:[#allocation7 + $0x148] sm:$0xff]
    %v1523 = vld [vmem:[#allocation7 + $0x150] sm:$0xff]
    %v1524 = vld [vmem:[#allocation7 + $0x158] sm:$0xff]
    %v1525 = vld [vmem:[#allocation7 + $0x160] sm:$0xff]
    %v1526 = vld [vmem:[#allocation7 + $0x168] sm:$0xff]
    %v1527 = vld [vmem:[#allocation7 + $0x170] sm:$0xff]
    %v1528 = vld [vmem:[#allocation7 + $0x178] sm:$0xff]
    %v1529 = vld [vmem:[#allocation7 + $0x180] sm:$0xff]
    %v1530 = vld [vmem:[#allocation7 + $0x188] sm:$0xff]
    %v1531 = vld [vmem:[#allocation7 + $0x190] sm:$0xff]
    %v1532 = vld [vmem:[#allocation7 + $0x198] sm:$0xff]
    %v1533 = vld [vmem:[#allocation7 + $0x1a0] sm:$0xff]
    %v1534 = vld [vmem:[#allocation7 + $0x1a8] sm:$0xff]
    %v1535 = vld [vmem:[#allocation7 + $0x1b0] sm:$0xff]
    %v1536 = vld [vmem:[#allocation7 + $0x1b8] sm:$0xff]
    %v1537 = vld [vmem:[#allocation7 + $0x1c0] sm:$0xff]
    %v1538 = vld [vmem:[#allocation7 + $0x1c8] sm:$0xff]
    %v1539 = vld [vmem:[#allocation7 + $0x1d0] sm:$0xff]
    %v1540 = vld [vmem:[#allocation7 + $0x1d8] sm:$0xff]
    %v1541 = vld [vmem:[#allocation7 + $0x1e0] sm:$0xff]
    %v1542 = vld [vmem:[#allocation7 + $0x1e8] sm:$0xff]
    %v1543 = vld [vmem:[#allocation7 + $0x1f0] sm:$0xff]
    %v1544 = vld [vmem:[#allocation7 + $0x1f8] sm:$0xff]
    %v1545 = vrot.slane %v215, 5
    %v1546 = vrot.slane %v217, 5
    %v1547 = vrot.slane %v286, 5
    %v1548 = vrot.slane %v288, 5
    %1553 = vmatprep.subr.mxu0 %v1482
    %1554 = vmatpush1.msra.mxu0 %v1481
    %1555 = vmatprep.subr.mxu0 %v1486
    %1556 = vmatpush1.msra.mxu0 %v1485
    %1557 = vmatprep.subr.mxu0 %v1490
    %1558 = vmatpush1.msra.mxu0 %v1489
    %1559 = vmatprep.subr.mxu0 %v1494
    %1560 = vmatpush1.msra.mxu0 %v1493
    %1561 = vmatprep.subr.mxu0 %v1498
    %1562 = vmatpush1.msra.mxu0 %v1497
    %1563 = vmatprep.subr.mxu0 %v1502
    %1564 = vmatpush1.msra.mxu0 %v1501
    %1565 = vmatprep.subr.mxu0 %v1506
    %1566 = vmatpush1.msra.mxu0 %v1505
    %1567 = vmatprep.subr.mxu0 %v1510
    %1568 = vmatpush1.msra.mxu0 %v1509
    %1569 = vmatprep.subr.mxu0 %v1514
    %1570 = vmatpush1.msra.mxu0 %v1513
    %1571 = vmatprep.subr.mxu0 %v1518
    %1572 = vmatpush1.msra.mxu0 %v1517
    %1573 = vmatprep.subr.mxu0 %v1522
    %1574 = vmatpush1.msra.mxu0 %v1521
    %1575 = vmatprep.subr.mxu0 %v1526
    %1576 = vmatpush1.msra.mxu0 %v1525
    %1577 = vmatprep.subr.mxu0 %v1530
    %1578 = vmatpush1.msra.mxu0 %v1529
    %1579 = vmatprep.subr.mxu0 %v1534
    %1580 = vmatpush1.msra.mxu0 %v1533
    %1581 = vmatprep.subr.mxu0 %v1538
    %1582 = vmatpush1.msra.mxu0 %v1537
    %1583 = vmatprep.subr.mxu0 %v1542
    %1584 = vmatpush1.msra.mxu0 %v1541
    %1585 = vmatprep.subr.mxu0 0.0
    %1586 = vmatpush1.msra.mxu0 0.0
    %1587 = vmatprep.subr.mxu0 0.0
    %1588 = vmatpush1.msra.mxu0 0.0
    %1589 = vmatprep.subr.mxu0 0.0
    %1590 = vmatpush1.msra.mxu0 0.0
    %1591 = vmatprep.subr.mxu0 0.0
    %1592 = vmatpush1.msra.mxu0 0.0
    %1593 = vmatprep.subr.mxu0 0.0
    %1594 = vmatpush1.msra.mxu0 0.0
    %1595 = vmatprep.subr.mxu0 0.0
    %1596 = vmatpush1.msra.mxu0 0.0
    %1597 = vmatprep.subr.mxu0 0.0
    %1598 = vmatpush1.msra.mxu0 0.0
    %1599 = vmatprep.subr.mxu0 0.0
    %1600 = vmatpush1.msra.mxu0 0.0
    %1601 = vmatprep.subr.mxu0 0.0
    %1602 = vmatpush1.msra.mxu0 0.0
    %1603 = vmatprep.subr.mxu0 0.0
    %1604 = vmatpush1.msra.mxu0 0.0
    %1605 = vmatprep.subr.mxu0 0.0
    %1606 = vmatpush1.msra.mxu0 0.0
    %1607 = vmatprep.subr.mxu0 0.0
    %1608 = vmatpush1.msra.mxu0 0.0
    %1609 = vmatprep.subr.mxu0 0.0
    %1610 = vmatpush1.msra.mxu0 0.0
    %1611 = vmatprep.subr.mxu0 0.0
    %1612 = vmatpush1.msra.mxu0 0.0
    %1613 = vmatprep.subr.mxu0 0.0
    %1614 = vmatpush1.msra.mxu0 0.0
    %1615 = vmatprep.subr.mxu0 0.0
    %1616 = vmatpush1.msra.mxu0 0.0
    %1617 = vmatprep.mubr.f32.mxu0 0.0
    %1618 = vmatmul.mubr.f32.gmra.mrb[0].mxu0 %v1479
    %v1619 = vpop.f32.mrb[0].mxu0
    %v1620 = vadd.f32 %v1545, %v1619
    %v1621 = vpop.f32.mrb[0].mxu0
    %v1622 = vadd.f32 %v1546, %v1621
    %1623 = vdwg.mxu0
    %1624 = vmatprep.subr.mxu0 %v1484
    %1625 = vmatpush1.msra.mxu0 %v1483
    %1626 = vmatprep.subr.mxu0 %v1488
    %1627 = vmatpush1.msra.mxu0 %v1487
    %1628 = vmatprep.subr.mxu0 %v1492
    %1629 = vmatpush1.msra.mxu0 %v1491
    %1630 = vmatprep.subr.mxu0 %v1496
    %1631 = vmatpush1.msra.mxu0 %v1495
    %1632 = vmatprep.subr.mxu0 %v1500
    %1633 = vmatpush1.msra.mxu0 %v1499
    %1634 = vmatprep.subr.mxu0 %v1504
    %1635 = vmatpush1.msra.mxu0 %v1503
    %1636 = vmatprep.subr.mxu0 %v1508
    %1637 = vmatpush1.msra.mxu0 %v1507
    %1638 = vmatprep.subr.mxu0 %v1512
    %1639 = vmatpush1.msra.mxu0 %v1511
    %1640 = vmatprep.subr.mxu0 %v1516
    %1641 = vmatpush1.msra.mxu0 %v1515
    %1642 = vmatprep.subr.mxu0 %v1520
    %1643 = vmatpush1.msra.mxu0 %v1519
    %1644 = vmatprep.subr.mxu0 %v1524
    %1645 = vmatpush1.msra.mxu0 %v1523
    %1646 = vmatprep.subr.mxu0 %v1528
    %1647 = vmatpush1.msra.mxu0 %v1527
    %1648 = vmatprep.subr.mxu0 %v1532
    %1649 = vmatpush1.msra.mxu0 %v1531
    %1650 = vmatprep.subr.mxu0 %v1536
    %1651 = vmatpush1.msra.mxu0 %v1535
    %1652 = vmatprep.subr.mxu0 %v1540
    %1653 = vmatpush1.msra.mxu0 %v1539
    %1654 = vmatprep.subr.mxu0 %v1544
    %1655 = vmatpush1.msra.mxu0 %v1543
    %1656 = vmatprep.subr.mxu0 0.0
    %1657 = vmatpush1.msra.mxu0 0.0
    %1658 = vmatprep.subr.mxu0 0.0
    %1659 = vmatpush1.msra.mxu0 0.0
    %1660 = vmatprep.subr.mxu0 0.0
    %1661 = vmatpush1.msra.mxu0 0.0
    %1662 = vmatprep.subr.mxu0 0.0
    %1663 = vmatpush1.msra.mxu0 0.0
    %1664 = vmatprep.subr.mxu0 0.0
    %1665 = vmatpush1.msra.mxu0 0.0
    %1666 = vmatprep.subr.mxu0 0.0
    %1667 = vmatpush1.msra.mxu0 0.0
    %1668 = vmatprep.subr.mxu0 0.0
    %1669 = vmatpush1.msra.mxu0 0.0
    %1670 = vmatprep.subr.mxu0 0.0
    %1671 = vmatpush1.msra.mxu0 0.0
    %1672 = vmatprep.subr.mxu0 0.0
    %1673 = vmatpush1.msra.mxu0 0.0
    %1674 = vmatprep.subr.mxu0 0.0
    %1675 = vmatpush1.msra.mxu0 0.0
    %1676 = vmatprep.subr.mxu0 0.0
    %1677 = vmatpush1.msra.mxu0 0.0
    %1678 = vmatprep.subr.mxu0 0.0
    %1679 = vmatpush1.msra.mxu0 0.0
    %1680 = vmatprep.subr.mxu0 0.0
    %1681 = vmatpush1.msra.mxu0 0.0
    %1682 = vmatprep.subr.mxu0 0.0
    %1683 = vmatpush1.msra.mxu0 0.0
    %1684 = vmatprep.subr.mxu0 0.0
    %1685 = vmatpush1.msra.mxu0 0.0
    %1686 = vmatprep.subr.mxu0 0.0
    %1687 = vmatpush1.msra.mxu0 0.0
    %1688 = vmatprep.mubr.f32.mxu0 0.0
    %1689 = vmatmul.mubr.f32.gmra.mrb[0].mxu0 %v1479
    %v1690 = vpop.f32.mrb[0].mxu0
    %v1691 = vadd.f32 %v1547, %v1690
    %v1692 = vpop.f32.mrb[0].mxu0
    %v1693 = vadd.f32 %v1548, %v1692
    %1694 = vdwg.mxu0
    %v1695 = vxor.u32 %v1620, 2147483648
    %v1696 = vmul.f32 %v1695, 1.442695
    %v1697 = vpow.pop %v1696
    %v1698 = vadd.f32 %v1697, 1.0
    %v1699 = vrcp.pop %v1698
    %v1700 = vmul.f32 1.0, %v1699
    %v1701 = vxor.u32 %v1622, 2147483648
    %v1702 = vmul.f32 %v1701, 1.442695
    %v1703 = vpow.pop %v1702
    %v1704 = vadd.f32 %v1703, 1.0
    %v1705 = vrcp.pop %v1704
    %v1706 = vmul.f32 1.0, %v1705
    %v1707 = vtanh.pop %v1691
    %v1708 = vxor.u32 %v1693, 2147483648
    %v1709 = vmul.f32 %v1708, 1.442695
    %v1710 = vpow.pop %v1709
    %v1711 = vadd.f32 %v1710, 1.0
    %v1712 = vrcp.pop %v1711
    %v1713 = vmul.f32 1.0, %v1712
    %v1714 = vmul.f32 %v1706, %v1477
    %v1715 = vmul.f32 %v1700, %v1707
    %v1716 = vadd.f32 %v1714, %v1715
    %v1717 = vtanh.pop %v1716
    %v1718 = vmul.f32 %v1713, %v1717
    %1719 = vst [vmem:[#allocation2 + $0x5] sm:$0x1] %v1718
    %v1720 = vld [vmem:[#allocation7] sm:$0xff]
    %v1721 = vld [vmem:[#allocation7 + $0x8] sm:$0xff]
    %v1722 = vld [vmem:[#allocation7 + $0x10] sm:$0xff]
    %v1723 = vld [vmem:[#allocation7 + $0x18] sm:$0xff]
    %v1724 = vld [vmem:[#allocation7 + $0x20] sm:$0xff]
    %v1725 = vld [vmem:[#allocation7 + $0x28] sm:$0xff]
    %v1726 = vld [vmem:[#allocation7 + $0x30] sm:$0xff]
    %v1727 = vld [vmem:[#allocation7 + $0x38] sm:$0xff]
    %v1728 = vld [vmem:[#allocation7 + $0x40] sm:$0xff]
    %v1729 = vld [vmem:[#allocation7 + $0x48] sm:$0xff]
    %v1730 = vld [vmem:[#allocation7 + $0x50] sm:$0xff]
    %v1731 = vld [vmem:[#allocation7 + $0x58] sm:$0xff]
    %v1732 = vld [vmem:[#allocation7 + $0x60] sm:$0xff]
    %v1733 = vld [vmem:[#allocation7 + $0x68] sm:$0xff]
    %v1734 = vld [vmem:[#allocation7 + $0x70] sm:$0xff]
    %v1735 = vld [vmem:[#allocation7 + $0x78] sm:$0xff]
    %v1736 = vld [vmem:[#allocation7 + $0x80] sm:$0xff]
    %v1737 = vld [vmem:[#allocation7 + $0x88] sm:$0xff]
    %v1738 = vld [vmem:[#allocation7 + $0x90] sm:$0xff]
    %v1739 = vld [vmem:[#allocation7 + $0x98] sm:$0xff]
    %v1740 = vld [vmem:[#allocation7 + $0xa0] sm:$0xff]
    %v1741 = vld [vmem:[#allocation7 + $0xa8] sm:$0xff]
    %v1742 = vld [vmem:[#allocation7 + $0xb0] sm:$0xff]
    %v1743 = vld [vmem:[#allocation7 + $0xb8] sm:$0xff]
    %v1744 = vld [vmem:[#allocation7 + $0xc0] sm:$0xff]
    %v1745 = vld [vmem:[#allocation7 + $0xc8] sm:$0xff]
    %v1746 = vld [vmem:[#allocation7 + $0xd0] sm:$0xff]
    %v1747 = vld [vmem:[#allocation7 + $0xd8] sm:$0xff]
    %v1748 = vld [vmem:[#allocation7 + $0xe0] sm:$0xff]
    %v1749 = vld [vmem:[#allocation7 + $0xe8] sm:$0xff]
    %v1750 = vld [vmem:[#allocation7 + $0xf0] sm:$0xff]
    %v1751 = vld [vmem:[#allocation7 + $0xf8] sm:$0xff]
    %v1752 = vld [vmem:[#allocation7 + $0x100] sm:$0xff]
    %v1753 = vld [vmem:[#allocation7 + $0x108] sm:$0xff]
    %v1754 = vld [vmem:[#allocation7 + $0x110] sm:$0xff]
    %v1755 = vld [vmem:[#allocation7 + $0x118] sm:$0xff]
    %v1756 = vld [vmem:[#allocation7 + $0x120] sm:$0xff]
    %v1757 = vld [vmem:[#allocation7 + $0x128] sm:$0xff]
    %v1758 = vld [vmem:[#allocation7 + $0x130] sm:$0xff]
    %v1759 = vld [vmem:[#allocation7 + $0x138] sm:$0xff]
    %v1760 = vld [vmem:[#allocation7 + $0x140] sm:$0xff]
    %v1761 = vld [vmem:[#allocation7 + $0x148] sm:$0xff]
    %v1762 = vld [vmem:[#allocation7 + $0x150] sm:$0xff]
    %v1763 = vld [vmem:[#allocation7 + $0x158] sm:$0xff]
    %v1764 = vld [vmem:[#allocation7 + $0x160] sm:$0xff]
    %v1765 = vld [vmem:[#allocation7 + $0x168] sm:$0xff]
    %v1766 = vld [vmem:[#allocation7 + $0x170] sm:$0xff]
    %v1767 = vld [vmem:[#allocation7 + $0x178] sm:$0xff]
    %v1768 = vld [vmem:[#allocation7 + $0x180] sm:$0xff]
    %v1769 = vld [vmem:[#allocation7 + $0x188] sm:$0xff]
    %v1770 = vld [vmem:[#allocation7 + $0x190] sm:$0xff]
    %v1771 = vld [vmem:[#allocation7 + $0x198] sm:$0xff]
    %v1772 = vld [vmem:[#allocation7 + $0x1a0] sm:$0xff]
    %v1773 = vld [vmem:[#allocation7 + $0x1a8] sm:$0xff]
    %v1774 = vld [vmem:[#allocation7 + $0x1b0] sm:$0xff]
    %v1775 = vld [vmem:[#allocation7 + $0x1b8] sm:$0xff]
    %v1776 = vld [vmem:[#allocation7 + $0x1c0] sm:$0xff]
    %v1777 = vld [vmem:[#allocation7 + $0x1c8] sm:$0xff]
    %v1778 = vld [vmem:[#allocation7 + $0x1d0] sm:$0xff]
    %v1779 = vld [vmem:[#allocation7 + $0x1d8] sm:$0xff]
    %v1780 = vld [vmem:[#allocation7 + $0x1e0] sm:$0xff]
    %v1781 = vld [vmem:[#allocation7 + $0x1e8] sm:$0xff]
    %v1782 = vld [vmem:[#allocation7 + $0x1f0] sm:$0xff]
    %v1783 = vld [vmem:[#allocation7 + $0x1f8] sm:$0xff]
    %v1784 = vrot.slane %v215, 6
    %v1785 = vrot.slane %v217, 6
    %v1786 = vrot.slane %v286, 6
    %v1787 = vrot.slane %v288, 6
    %1792 = vmatprep.subr.mxu0 %v1721
    %1793 = vmatpush1.msra.mxu0 %v1720
    %1794 = vmatprep.subr.mxu0 %v1725
    %1795 = vmatpush1.msra.mxu0 %v1724
    %1796 = vmatprep.subr.mxu0 %v1729
    %1797 = vmatpush1.msra.mxu0 %v1728
    %1798 = vmatprep.subr.mxu0 %v1733
    %1799 = vmatpush1.msra.mxu0 %v1732
    %1800 = vmatprep.subr.mxu0 %v1737
    %1801 = vmatpush1.msra.mxu0 %v1736
    %1802 = vmatprep.subr.mxu0 %v1741
    %1803 = vmatpush1.msra.mxu0 %v1740
    %1804 = vmatprep.subr.mxu0 %v1745
    %1805 = vmatpush1.msra.mxu0 %v1744
    %1806 = vmatprep.subr.mxu0 %v1749
    %1807 = vmatpush1.msra.mxu0 %v1748
    %1808 = vmatprep.subr.mxu0 %v1753
    %1809 = vmatpush1.msra.mxu0 %v1752
    %1810 = vmatprep.subr.mxu0 %v1757
    %1811 = vmatpush1.msra.mxu0 %v1756
    %1812 = vmatprep.subr.mxu0 %v1761
    %1813 = vmatpush1.msra.mxu0 %v1760
    %1814 = vmatprep.subr.mxu0 %v1765
    %1815 = vmatpush1.msra.mxu0 %v1764
    %1816 = vmatprep.subr.mxu0 %v1769
    %1817 = vmatpush1.msra.mxu0 %v1768
    %1818 = vmatprep.subr.mxu0 %v1773
    %1819 = vmatpush1.msra.mxu0 %v1772
    %1820 = vmatprep.subr.mxu0 %v1777
    %1821 = vmatpush1.msra.mxu0 %v1776
    %1822 = vmatprep.subr.mxu0 %v1781
    %1823 = vmatpush1.msra.mxu0 %v1780
    %1824 = vmatprep.subr.mxu0 0.0
    %1825 = vmatpush1.msra.mxu0 0.0
    %1826 = vmatprep.subr.mxu0 0.0
    %1827 = vmatpush1.msra.mxu0 0.0
    %1828 = vmatprep.subr.mxu0 0.0
    %1829 = vmatpush1.msra.mxu0 0.0
    %1830 = vmatprep.subr.mxu0 0.0
    %1831 = vmatpush1.msra.mxu0 0.0
    %1832 = vmatprep.subr.mxu0 0.0
    %1833 = vmatpush1.msra.mxu0 0.0
    %1834 = vmatprep.subr.mxu0 0.0
    %1835 = vmatpush1.msra.mxu0 0.0
    %1836 = vmatprep.subr.mxu0 0.0
    %1837 = vmatpush1.msra.mxu0 0.0
    %1838 = vmatprep.subr.mxu0 0.0
    %1839 = vmatpush1.msra.mxu0 0.0
    %1840 = vmatprep.subr.mxu0 0.0
    %1841 = vmatpush1.msra.mxu0 0.0
    %1842 = vmatprep.subr.mxu0 0.0
    %1843 = vmatpush1.msra.mxu0 0.0
    %1844 = vmatprep.subr.mxu0 0.0
    %1845 = vmatpush1.msra.mxu0 0.0
    %1846 = vmatprep.subr.mxu0 0.0
    %1847 = vmatpush1.msra.mxu0 0.0
    %1848 = vmatprep.subr.mxu0 0.0
    %1849 = vmatpush1.msra.mxu0 0.0
    %1850 = vmatprep.subr.mxu0 0.0
    %1851 = vmatpush1.msra.mxu0 0.0
    %1852 = vmatprep.subr.mxu0 0.0
    %1853 = vmatpush1.msra.mxu0 0.0
    %1854 = vmatprep.subr.mxu0 0.0
    %1855 = vmatpush1.msra.mxu0 0.0
    %1856 = vmatprep.mubr.f32.mxu0 0.0
    %1857 = vmatmul.mubr.f32.gmra.mrb[0].mxu0 %v1718
    %v1858 = vpop.f32.mrb[0].mxu0
    %v1859 = vadd.f32 %v1784, %v1858
    %v1860 = vpop.f32.mrb[0].mxu0
    %v1861 = vadd.f32 %v1785, %v1860
    %1862 = vdwg.mxu0
    %1863 = vmatprep.subr.mxu0 %v1723
    %1864 = vmatpush1.msra.mxu0 %v1722
    %1865 = vmatprep.subr.mxu0 %v1727
    %1866 = vmatpush1.msra.mxu0 %v1726
    %1867 = vmatprep.subr.mxu0 %v1731
    %1868 = vmatpush1.msra.mxu0 %v1730
    %1869 = vmatprep.subr.mxu0 %v1735
    %1870 = vmatpush1.msra.mxu0 %v1734
    %1871 = vmatprep.subr.mxu0 %v1739
    %1872 = vmatpush1.msra.mxu0 %v1738
    %1873 = vmatprep.subr.mxu0 %v1743
    %1874 = vmatpush1.msra.mxu0 %v1742
    %1875 = vmatprep.subr.mxu0 %v1747
    %1876 = vmatpush1.msra.mxu0 %v1746
    %1877 = vmatprep.subr.mxu0 %v1751
    %1878 = vmatpush1.msra.mxu0 %v1750
    %1879 = vmatprep.subr.mxu0 %v1755
    %1880 = vmatpush1.msra.mxu0 %v1754
    %1881 = vmatprep.subr.mxu0 %v1759
    %1882 = vmatpush1.msra.mxu0 %v1758
    %1883 = vmatprep.subr.mxu0 %v1763
    %1884 = vmatpush1.msra.mxu0 %v1762
    %1885 = vmatprep.subr.mxu0 %v1767
    %1886 = vmatpush1.msra.mxu0 %v1766
    %1887 = vmatprep.subr.mxu0 %v1771
    %1888 = vmatpush1.msra.mxu0 %v1770
    %1889 = vmatprep.subr.mxu0 %v1775
    %1890 = vmatpush1.msra.mxu0 %v1774
    %1891 = vmatprep.subr.mxu0 %v1779
    %1892 = vmatpush1.msra.mxu0 %v1778
    %1893 = vmatprep.subr.mxu0 %v1783
    %1894 = vmatpush1.msra.mxu0 %v1782
    %1895 = vmatprep.subr.mxu0 0.0
    %1896 = vmatpush1.msra.mxu0 0.0
    %1897 = vmatprep.subr.mxu0 0.0
    %1898 = vmatpush1.msra.mxu0 0.0
    %1899 = vmatprep.subr.mxu0 0.0
    %1900 = vmatpush1.msra.mxu0 0.0
    %1901 = vmatprep.subr.mxu0 0.0
    %1902 = vmatpush1.msra.mxu0 0.0
    %1903 = vmatprep.subr.mxu0 0.0
    %1904 = vmatpush1.msra.mxu0 0.0
    %1905 = vmatprep.subr.mxu0 0.0
    %1906 = vmatpush1.msra.mxu0 0.0
    %1907 = vmatprep.subr.mxu0 0.0
    %1908 = vmatpush1.msra.mxu0 0.0
    %1909 = vmatprep.subr.mxu0 0.0
    %1910 = vmatpush1.msra.mxu0 0.0
    %1911 = vmatprep.subr.mxu0 0.0
    %1912 = vmatpush1.msra.mxu0 0.0
    %1913 = vmatprep.subr.mxu0 0.0
    %1914 = vmatpush1.msra.mxu0 0.0
    %1915 = vmatprep.subr.mxu0 0.0
    %1916 = vmatpush1.msra.mxu0 0.0
    %1917 = vmatprep.subr.mxu0 0.0
    %1918 = vmatpush1.msra.mxu0 0.0
    %1919 = vmatprep.subr.mxu0 0.0
    %1920 = vmatpush1.msra.mxu0 0.0
    %1921 = vmatprep.subr.mxu0 0.0
    %1922 = vmatpush1.msra.mxu0 0.0
    %1923 = vmatprep.subr.mxu0 0.0
    %1924 = vmatpush1.msra.mxu0 0.0
    %1925 = vmatprep.subr.mxu0 0.0
    %1926 = vmatpush1.msra.mxu0 0.0
    %1927 = vmatprep.mubr.f32.mxu0 0.0
    %1928 = vmatmul.mubr.f32.gmra.mrb[0].mxu0 %v1718
    %v1929 = vpop.f32.mrb[0].mxu0
    %v1930 = vadd.f32 %v1786, %v1929
    %v1931 = vpop.f32.mrb[0].mxu0
    %v1932 = vadd.f32 %v1787, %v1931
    %1933 = vdwg.mxu0
    %v1934 = vxor.u32 %v1859, 2147483648
    %v1935 = vmul.f32 %v1934, 1.442695
    %v1936 = vpow.pop %v1935
    %v1937 = vadd.f32 %v1936, 1.0
    %v1938 = vrcp.pop %v1937
    %v1939 = vmul.f32 1.0, %v1938
    %v1940 = vxor.u32 %v1861, 2147483648
    %v1941 = vmul.f32 %v1940, 1.442695
    %v1942 = vpow.pop %v1941
    %v1943 = vadd.f32 %v1942, 1.0
    %v1944 = vrcp.pop %v1943
    %v1945 = vmul.f32 1.0, %v1944
    %v1946 = vtanh.pop %v1930
    %v1947 = vxor.u32 %v1932, 2147483648
    %v1948 = vmul.f32 %v1947, 1.442695
    %v1949 = vpow.pop %v1948
    %v1950 = vadd.f32 %v1949, 1.0
    %v1951 = vrcp.pop %v1950
    %v1952 = vmul.f32 1.0, %v1951
    %v1953 = vmul.f32 %v1945, %v1716
    %v1954 = vmul.f32 %v1939, %v1946
    %v1955 = vadd.f32 %v1953, %v1954
    %v1956 = vtanh.pop %v1955
    %v1957 = vmul.f32 %v1952, %v1956
    %1958 = vst [vmem:[#allocation2 + $0x6] sm:$0x1] %v1957
    %v1959 = vld [vmem:[#allocation7] sm:$0xff]
    %v1960 = vld [vmem:[#allocation7 + $0x8] sm:$0xff]
    %v1961 = vld [vmem:[#allocation7 + $0x10] sm:$0xff]
    %v1962 = vld [vmem:[#allocation7 + $0x18] sm:$0xff]
    %v1963 = vld [vmem:[#allocation7 + $0x20] sm:$0xff]
    %v1964 = vld [vmem:[#allocation7 + $0x28] sm:$0xff]
    %v1965 = vld [vmem:[#allocation7 + $0x30] sm:$0xff]
    %v1966 = vld [vmem:[#allocation7 + $0x38] sm:$0xff]
    %v1967 = vld [vmem:[#allocation7 + $0x40] sm:$0xff]
    %v1968 = vld [vmem:[#allocation7 + $0x48] sm:$0xff]
    %v1969 = vld [vmem:[#allocation7 + $0x50] sm:$0xff]
    %v1970 = vld [vmem:[#allocation7 + $0x58] sm:$0xff]
    %v1971 = vld [vmem:[#allocation7 + $0x60] sm:$0xff]
    %v1972 = vld [vmem:[#allocation7 + $0x68] sm:$0xff]
    %v1973 = vld [vmem:[#allocation7 + $0x70] sm:$0xff]
    %v1974 = vld [vmem:[#allocation7 + $0x78] sm:$0xff]
    %v1975 = vld [vmem:[#allocation7 + $0x80] sm:$0xff]
    %v1976 = vld [vmem:[#allocation7 + $0x88] sm:$0xff]
    %v1977 = vld [vmem:[#allocation7 + $0x90] sm:$0xff]
    %v1978 = vld [vmem:[#allocation7 + $0x98] sm:$0xff]
    %v1979 = vld [vmem:[#allocation7 + $0xa0] sm:$0xff]
    %v1980 = vld [vmem:[#allocation7 + $0xa8] sm:$0xff]
    %v1981 = vld [vmem:[#allocation7 + $0xb0] sm:$0xff]
    %v1982 = vld [vmem:[#allocation7 + $0xb8] sm:$0xff]
    %v1983 = vld [vmem:[#allocation7 + $0xc0] sm:$0xff]
    %v1984 = vld [vmem:[#allocation7 + $0xc8] sm:$0xff]
    %v1985 = vld [vmem:[#allocation7 + $0xd0] sm:$0xff]
    %v1986 = vld [vmem:[#allocation7 + $0xd8] sm:$0xff]
    %v1987 = vld [vmem:[#allocation7 + $0xe0] sm:$0xff]
    %v1988 = vld [vmem:[#allocation7 + $0xe8] sm:$0xff]
    %v1989 = vld [vmem:[#allocation7 + $0xf0] sm:$0xff]
    %v1990 = vld [vmem:[#allocation7 + $0xf8] sm:$0xff]
    %v1991 = vld [vmem:[#allocation7 + $0x100] sm:$0xff]
    %v1992 = vld [vmem:[#allocation7 + $0x108] sm:$0xff]
    %v1993 = vld [vmem:[#allocation7 + $0x110] sm:$0xff]
    %v1994 = vld [vmem:[#allocation7 + $0x118] sm:$0xff]
    %v1995 = vld [vmem:[#allocation7 + $0x120] sm:$0xff]
    %v1996 = vld [vmem:[#allocation7 + $0x128] sm:$0xff]
    %v1997 = vld [vmem:[#allocation7 + $0x130] sm:$0xff]
    %v1998 = vld [vmem:[#allocation7 + $0x138] sm:$0xff]
    %v1999 = vld [vmem:[#allocation7 + $0x140] sm:$0xff]
    %v2000 = vld [vmem:[#allocation7 + $0x148] sm:$0xff]
    %v2001 = vld [vmem:[#allocation7 + $0x150] sm:$0xff]
    %v2002 = vld [vmem:[#allocation7 + $0x158] sm:$0xff]
    %v2003 = vld [vmem:[#allocation7 + $0x160] sm:$0xff]
    %v2004 = vld [vmem:[#allocation7 + $0x168] sm:$0xff]
    %v2005 = vld [vmem:[#allocation7 + $0x170] sm:$0xff]
    %v2006 = vld [vmem:[#allocation7 + $0x178] sm:$0xff]
    %v2007 = vld [vmem:[#allocation7 + $0x180] sm:$0xff]
    %v2008 = vld [vmem:[#allocation7 + $0x188] sm:$0xff]
    %v2009 = vld [vmem:[#allocation7 + $0x190] sm:$0xff]
    %v2010 = vld [vmem:[#allocation7 + $0x198] sm:$0xff]
    %v2011 = vld [vmem:[#allocation7 + $0x1a0] sm:$0xff]
    %v2012 = vld [vmem:[#allocation7 + $0x1a8] sm:$0xff]
    %v2013 = vld [vmem:[#allocation7 + $0x1b0] sm:$0xff]
    %v2014 = vld [vmem:[#allocation7 + $0x1b8] sm:$0xff]
    %v2015 = vld [vmem:[#allocation7 + $0x1c0] sm:$0xff]
    %v2016 = vld [vmem:[#allocation7 + $0x1c8] sm:$0xff]
    %v2017 = vld [vmem:[#allocation7 + $0x1d0] sm:$0xff]
    %v2018 = vld [vmem:[#allocation7 + $0x1d8] sm:$0xff]
    %v2019 = vld [vmem:[#allocation7 + $0x1e0] sm:$0xff]
    %v2020 = vld [vmem:[#allocation7 + $0x1e8] sm:$0xff]
    %v2021 = vld [vmem:[#allocation7 + $0x1f0] sm:$0xff]
    %v2022 = vld [vmem:[#allocation7 + $0x1f8] sm:$0xff]
    %v2023 = vrot.slane %v215, 7
    %v2024 = vrot.slane %v217, 7
    %v2025 = vrot.slane %v286, 7
    %v2026 = vrot.slane %v288, 7
    %2031 = vmatprep.subr.mxu0 %v1960
    %2032 = vmatpush1.msra.mxu0 %v1959
    %2033 = vmatprep.subr.mxu0 %v1964
    %2034 = vmatpush1.msra.mxu0 %v1963
    %2035 = vmatprep.subr.mxu0 %v1968
    %2036 = vmatpush1.msra.mxu0 %v1967
    %2037 = vmatprep.subr.mxu0 %v1972
    %2038 = vmatpush1.msra.mxu0 %v1971
    %2039 = vmatprep.subr.mxu0 %v1976
    %2040 = vmatpush1.msra.mxu0 %v1975
    %2041 = vmatprep.subr.mxu0 %v1980
    %2042 = vmatpush1.msra.mxu0 %v1979
    %2043 = vmatprep.subr.mxu0 %v1984
    %2044 = vmatpush1.msra.mxu0 %v1983
    %2045 = vmatprep.subr.mxu0 %v1988
    %2046 = vmatpush1.msra.mxu0 %v1987
    %2047 = vmatprep.subr.mxu0 %v1992
    %2048 = vmatpush1.msra.mxu0 %v1991
    %2049 = vmatprep.subr.mxu0 %v1996
    %2050 = vmatpush1.msra.mxu0 %v1995
    %2051 = vmatprep.subr.mxu0 %v2000
    %2052 = vmatpush1.msra.mxu0 %v1999
    %2053 = vmatprep.subr.mxu0 %v2004
    %2054 = vmatpush1.msra.mxu0 %v2003
    %2055 = vmatprep.subr.mxu0 %v2008
    %2056 = vmatpush1.msra.mxu0 %v2007
    %2057 = vmatprep.subr.mxu0 %v2012
    %2058 = vmatpush1.msra.mxu0 %v2011
    %2059 = vmatprep.subr.mxu0 %v2016
    %2060 = vmatpush1.msra.mxu0 %v2015
    %2061 = vmatprep.subr.mxu0 %v2020
    %2062 = vmatpush1.msra.mxu0 %v2019
    %2063 = vmatprep.subr.mxu0 0.0
    %2064 = vmatpush1.msra.mxu0 0.0
    %2065 = vmatprep.subr.mxu0 0.0
    %2066 = vmatpush1.msra.mxu0 0.0
    %2067 = vmatprep.subr.mxu0 0.0
    %2068 = vmatpush1.msra.mxu0 0.0
    %2069 = vmatprep.subr.mxu0 0.0
    %2070 = vmatpush1.msra.mxu0 0.0
    %2071 = vmatprep.subr.mxu0 0.0
    %2072 = vmatpush1.msra.mxu0 0.0
    %2073 = vmatprep.subr.mxu0 0.0
    %2074 = vmatpush1.msra.mxu0 0.0
    %2075 = vmatprep.subr.mxu0 0.0
    %2076 = vmatpush1.msra.mxu0 0.0
    %2077 = vmatprep.subr.mxu0 0.0
    %2078 = vmatpush1.msra.mxu0 0.0
    %2079 = vmatprep.subr.mxu0 0.0
    %2080 = vmatpush1.msra.mxu0 0.0
    %2081 = vmatprep.subr.mxu0 0.0
    %2082 = vmatpush1.msra.mxu0 0.0
    %2083 = vmatprep.subr.mxu0 0.0
    %2084 = vmatpush1.msra.mxu0 0.0
    %2085 = vmatprep.subr.mxu0 0.0
    %2086 = vmatpush1.msra.mxu0 0.0
    %2087 = vmatprep.subr.mxu0 0.0
    %2088 = vmatpush1.msra.mxu0 0.0
    %2089 = vmatprep.subr.mxu0 0.0
    %2090 = vmatpush1.msra.mxu0 0.0
    %2091 = vmatprep.subr.mxu0 0.0
    %2092 = vmatpush1.msra.mxu0 0.0
    %2093 = vmatprep.subr.mxu0 0.0
    %2094 = vmatpush1.msra.mxu0 0.0
    %2095 = vmatprep.mubr.f32.mxu0 0.0
    %2096 = vmatmul.mubr.f32.gmra.mrb[0].mxu0 %v1957
    %v2097 = vpop.f32.mrb[0].mxu0
    %v2098 = vadd.f32 %v2023, %v2097
    %v2099 = vpop.f32.mrb[0].mxu0
    %v2100 = vadd.f32 %v2024, %v2099
    %2101 = vdwg.mxu0
    %2102 = vmatprep.subr.mxu0 %v1962
    %2103 = vmatpush1.msra.mxu0 %v1961
    %2104 = vmatprep.subr.mxu0 %v1966
    %2105 = vmatpush1.msra.mxu0 %v1965
    %2106 = vmatprep.subr.mxu0 %v1970
    %2107 = vmatpush1.msra.mxu0 %v1969
    %2108 = vmatprep.subr.mxu0 %v1974
    %2109 = vmatpush1.msra.mxu0 %v1973
    %2110 = vmatprep.subr.mxu0 %v1978
    %2111 = vmatpush1.msra.mxu0 %v1977
    %2112 = vmatprep.subr.mxu0 %v1982
    %2113 = vmatpush1.msra.mxu0 %v1981
    %2114 = vmatprep.subr.mxu0 %v1986
    %2115 = vmatpush1.msra.mxu0 %v1985
    %2116 = vmatprep.subr.mxu0 %v1990
    %2117 = vmatpush1.msra.mxu0 %v1989
    %2118 = vmatprep.subr.mxu0 %v1994
    %2119 = vmatpush1.msra.mxu0 %v1993
    %2120 = vmatprep.subr.mxu0 %v1998
    %2121 = vmatpush1.msra.mxu0 %v1997
    %2122 = vmatprep.subr.mxu0 %v2002
    %2123 = vmatpush1.msra.mxu0 %v2001
    %2124 = vmatprep.subr.mxu0 %v2006
    %2125 = vmatpush1.msra.mxu0 %v2005
    %2126 = vmatprep.subr.mxu0 %v2010
    %2127 = vmatpush1.msra.mxu0 %v2009
    %2128 = vmatprep.subr.mxu0 %v2014
    %2129 = vmatpush1.msra.mxu0 %v2013
    %2130 = vmatprep.subr.mxu0 %v2018
    %2131 = vmatpush1.msra.mxu0 %v2017
    %2132 = vmatprep.subr.mxu0 %v2022
    %2133 = vmatpush1.msra.mxu0 %v2021
    %2134 = vmatprep.subr.mxu0 0.0
    %2135 = vmatpush1.msra.mxu0 0.0
    %2136 = vmatprep.subr.mxu0 0.0
    %2137 = vmatpush1.msra.mxu0 0.0
    %2138 = vmatprep.subr.mxu0 0.0
    %2139 = vmatpush1.msra.mxu0 0.0
    %2140 = vmatprep.subr.mxu0 0.0
    %2141 = vmatpush1.msra.mxu0 0.0
    %2142 = vmatprep.subr.mxu0 0.0
    %2143 = vmatpush1.msra.mxu0 0.0
    %2144 = vmatprep.subr.mxu0 0.0
    %2145 = vmatpush1.msra.mxu0 0.0
    %2146 = vmatprep.subr.mxu0 0.0
    %2147 = vmatpush1.msra.mxu0 0.0
    %2148 = vmatprep.subr.mxu0 0.0
    %2149 = vmatpush1.msra.mxu0 0.0
    %2150 = vmatprep.subr.mxu0 0.0
    %2151 = vmatpush1.msra.mxu0 0.0
    %2152 = vmatprep.subr.mxu0 0.0
    %2153 = vmatpush1.msra.mxu0 0.0
    %2154 = vmatprep.subr.mxu0 0.0
    %2155 = vmatpush1.msra.mxu0 0.0
    %2156 = vmatprep.subr.mxu0 0.0
    %2157 = vmatpush1.msra.mxu0 0.0
    %2158 = vmatprep.subr.mxu0 0.0
    %2159 = vmatpush1.msra.mxu0 0.0
    %2160 = vmatprep.subr.mxu0 0.0
    %2161 = vmatpush1.msra.mxu0 0.0
    %2162 = vmatprep.subr.mxu0 0.0
    %2163 = vmatpush1.msra.mxu0 0.0
    %2164 = vmatprep.subr.mxu0 0.0
    %2165 = vmatpush1.msra.mxu0 0.0
    %2166 = vmatprep.mubr.f32.mxu0 0.0
    %2167 = vmatmul.mubr.f32.gmra.mrb[0].mxu0 %v1957
    %v2168 = vpop.f32.mrb[0].mxu0
    %v2169 = vadd.f32 %v2025, %v2168
    %v2170 = vpop.f32.mrb[0].mxu0
    %v2171 = vadd.f32 %v2026, %v2170
    %2172 = vdwg.mxu0
    %v2173 = vxor.u32 %v2098, 2147483648
    %v2174 = vmul.f32 %v2173, 1.442695
    %v2175 = vpow.pop %v2174
    %v2176 = vadd.f32 %v2175, 1.0
    %v2177 = vrcp.pop %v2176
    %v2178 = vmul.f32 1.0, %v2177
    %v2179 = vxor.u32 %v2100, 2147483648
    %v2180 = vmul.f32 %v2179, 1.442695
    %v2181 = vpow.pop %v2180
    %v2182 = vadd.f32 %v2181, 1.0
    %v2183 = vrcp.pop %v2182
    %v2184 = vmul.f32 1.0, %v2183
    %v2185 = vtanh.pop %v2169
    %v2186 = vxor.u32 %v2171, 2147483648
    %v2187 = vmul.f32 %v2186, 1.442695
    %v2188 = vpow.pop %v2187
    %v2189 = vadd.f32 %v2188, 1.0
    %v2190 = vrcp.pop %v2189
    %v2191 = vmul.f32 1.0, %v2190
    %v2192 = vmul.f32 %v2184, %v1955
    %v2193 = vmul.f32 %v2178, %v2185
    %v2194 = vadd.f32 %v2192, %v2193
    %v2195 = vtanh.pop %v2194
    %v2196 = vmul.f32 %v2191, %v2195
    %2197 = vst [vmem:[#allocation2 + $0x7] sm:$0x1] %v2196
    %v2198 = vld [vmem:[#allocation2] sm:$0xff]
    %v2199 = vld [vmem:[#allocation10] sm:$0xff]
    %v2200 = vld [vmem:[#allocation10 + $0x8] sm:$0xff]
    %v2201 = vld [vmem:[#allocation10 + $0x10] sm:$0xff]
    %v2202 = vld [vmem:[#allocation10 + $0x18] sm:$0xff]
    %v2203 = vld [vmem:[#allocation10 + $0x20] sm:$0xff]
    %v2204 = vld [vmem:[#allocation10 + $0x28] sm:$0xff]
    %v2205 = vld [vmem:[#allocation10 + $0x30] sm:$0xff]
    %v2206 = vld [vmem:[#allocation10 + $0x38] sm:$0xff]
    %v2207 = vld [vmem:[#allocation10 + $0x40] sm:$0xff]
    %v2208 = vld [vmem:[#allocation10 + $0x48] sm:$0xff]
    %v2209 = vld [vmem:[#allocation10 + $0x50] sm:$0xff]
    %v2210 = vld [vmem:[#allocation10 + $0x58] sm:$0xff]
    %v2211 = vld [vmem:[#allocation10 + $0x60] sm:$0xff]
    %v2212 = vld [vmem:[#allocation10 + $0x68] sm:$0xff]
    %v2213 = vld [vmem:[#allocation10 + $0x70] sm:$0xff]
    %v2214 = vld [vmem:[#allocation10 + $0x78] sm:$0xff]
    %v2215 = vld [vmem:[#allocation10 + $0x80] sm:$0xff]
    %v2216 = vld [vmem:[#allocation10 + $0x88] sm:$0xff]
    %v2217 = vld [vmem:[#allocation10 + $0x90] sm:$0xff]
    %v2218 = vld [vmem:[#allocation10 + $0x98] sm:$0xff]
    %v2219 = vld [vmem:[#allocation10 + $0xa0] sm:$0xff]
    %v2220 = vld [vmem:[#allocation10 + $0xa8] sm:$0xff]
    %v2221 = vld [vmem:[#allocation10 + $0xb0] sm:$0xff]
    %v2222 = vld [vmem:[#allocation10 + $0xb8] sm:$0xff]
    %v2223 = vld [vmem:[#allocation10 + $0xc0] sm:$0xff]
    %v2224 = vld [vmem:[#allocation10 + $0xc8] sm:$0xff]
    %v2225 = vld [vmem:[#allocation10 + $0xd0] sm:$0xff]
    %v2226 = vld [vmem:[#allocation10 + $0xd8] sm:$0xff]
    %v2227 = vld [vmem:[#allocation10 + $0xe0] sm:$0xff]
    %v2228 = vld [vmem:[#allocation10 + $0xe8] sm:$0xff]
    %v2229 = vld [vmem:[#allocation10 + $0xf0] sm:$0xff]
    %v2230 = vld [vmem:[#allocation10 + $0xf8] sm:$0xff]
    %v2231 = vld [vmem:[#allocation10 + $0x100] sm:$0xff]
    %v2232 = vld [vmem:[#allocation10 + $0x108] sm:$0xff]
    %v2233 = vld [vmem:[#allocation10 + $0x110] sm:$0xff]
    %v2234 = vld [vmem:[#allocation10 + $0x118] sm:$0xff]
    %v2235 = vld [vmem:[#allocation10 + $0x120] sm:$0xff]
    %v2236 = vld [vmem:[#allocation10 + $0x128] sm:$0xff]
    %v2237 = vld [vmem:[#allocation10 + $0x130] sm:$0xff]
    %v2238 = vld [vmem:[#allocation10 + $0x138] sm:$0xff]
    %v2239 = vld [vmem:[#allocation10 + $0x140] sm:$0xff]
    %v2240 = vld [vmem:[#allocation10 + $0x148] sm:$0xff]
    %v2241 = vld [vmem:[#allocation10 + $0x150] sm:$0xff]
    %v2242 = vld [vmem:[#allocation10 + $0x158] sm:$0xff]
    %v2243 = vld [vmem:[#allocation10 + $0x160] sm:$0xff]
    %v2244 = vld [vmem:[#allocation10 + $0x168] sm:$0xff]
    %v2245 = vld [vmem:[#allocation10 + $0x170] sm:$0xff]
    %v2246 = vld [vmem:[#allocation10 + $0x178] sm:$0xff]
    %v2247 = vld [vmem:[#allocation10 + $0x180] sm:$0xff]
    %v2248 = vld [vmem:[#allocation10 + $0x188] sm:$0xff]
    %v2249 = vld [vmem:[#allocation10 + $0x190] sm:$0xff]
    %v2250 = vld [vmem:[#allocation10 + $0x198] sm:$0xff]
    %v2251 = vld [vmem:[#allocation10 + $0x1a0] sm:$0xff]
    %v2252 = vld [vmem:[#allocation10 + $0x1a8] sm:$0xff]
    %v2253 = vld [vmem:[#allocation10 + $0x1b0] sm:$0xff]
    %v2254 = vld [vmem:[#allocation10 + $0x1b8] sm:$0xff]
    %v2255 = vld [vmem:[#allocation10 + $0x1c0] sm:$0xff]
    %v2256 = vld [vmem:[#allocation10 + $0x1c8] sm:$0xff]
    %v2257 = vld [vmem:[#allocation10 + $0x1d0] sm:$0xff]
    %v2258 = vld [vmem:[#allocation10 + $0x1d8] sm:$0xff]
    %v2259 = vld [vmem:[#allocation10 + $0x1e0] sm:$0xff]
    %v2260 = vld [vmem:[#allocation10 + $0x1e8] sm:$0xff]
    %v2261 = vld [vmem:[#allocation10 + $0x1f0] sm:$0xff]
    %v2262 = vld [vmem:[#allocation10 + $0x1f8] sm:$0xff]
    %v2263 = vld [vmem:[%s6] sm:$0xf]
    %v2265 = vlaneseq
    %v2266 = vshrl.u32 %v2265, 7
    %v2267 = vsub.s32 0, %v2266
    %v2268 = vrot.slane %v2263, %v2267
    %v2269 = vlaneseq
    %v2270 = vshrl.u32 %v2269, 7
    %v2271 = vsub.s32 1, %v2270
    %v2272 = vrot.slane %v2263, %v2271
    %v2273 = vlaneseq
    %v2274 = vshrl.u32 %v2273, 7
    %v2275 = vsub.s32 2, %v2274
    %v2276 = vrot.slane %v2263, %v2275
    %v2277 = vlaneseq
    %v2278 = vshrl.u32 %v2277, 7
    %v2279 = vsub.s32 3, %v2278
    %v2280 = vrot.slane %v2263, %v2279
    %2285 = vmatprep.subr.mxu0 %v2200
    %2286 = vmatpush1.msra.mxu0 %v2199
    %2287 = vmatprep.subr.mxu0 %v2204
    %2288 = vmatpush1.msra.mxu0 %v2203
    %2289 = vmatprep.subr.mxu0 %v2208
    %2290 = vmatpush1.msra.mxu0 %v2207
    %2291 = vmatprep.subr.mxu0 %v2212
    %2292 = vmatpush1.msra.mxu0 %v2211
    %2293 = vmatprep.subr.mxu0 %v2216
    %2294 = vmatpush1.msra.mxu0 %v2215
    %2295 = vmatprep.subr.mxu0 %v2220
    %2296 = vmatpush1.msra.mxu0 %v2219
    %2297 = vmatprep.subr.mxu0 %v2224
    %2298 = vmatpush1.msra.mxu0 %v2223
    %2299 = vmatprep.subr.mxu0 %v2228
    %2300 = vmatpush1.msra.mxu0 %v2227
    %2301 = vmatprep.subr.mxu0 %v2232
    %2302 = vmatpush1.msra.mxu0 %v2231
    %2303 = vmatprep.subr.mxu0 %v2236
    %2304 = vmatpush1.msra.mxu0 %v2235
    %2305 = vmatprep.subr.mxu0 %v2240
    %2306 = vmatpush1.msra.mxu0 %v2239
    %2307 = vmatprep.subr.mxu0 %v2244
    %2308 = vmatpush1.msra.mxu0 %v2243
    %2309 = vmatprep.subr.mxu0 %v2248
    %2310 = vmatpush1.msra.mxu0 %v2247
    %2311 = vmatprep.subr.mxu0 %v2252
    %2312 = vmatpush1.msra.mxu0 %v2251
    %2313 = vmatprep.subr.mxu0 %v2256
    %2314 = vmatpush1.msra.mxu0 %v2255
    %2315 = vmatprep.subr.mxu0 %v2260
    %2316 = vmatpush1.msra.mxu0 %v2259
    %2317 = vmatprep.subr.mxu0 0.0
    %2318 = vmatpush1.msra.mxu0 0.0
    %2319 = vmatprep.subr.mxu0 0.0
    %2320 = vmatpush1.msra.mxu0 0.0
    %2321 = vmatprep.subr.mxu0 0.0
    %2322 = vmatpush1.msra.mxu0 0.0
    %2323 = vmatprep.subr.mxu0 0.0
    %2324 = vmatpush1.msra.mxu0 0.0
    %2325 = vmatprep.subr.mxu0 0.0
    %2326 = vmatpush1.msra.mxu0 0.0
    %2327 = vmatprep.subr.mxu0 0.0
    %2328 = vmatpush1.msra.mxu0 0.0
    %2329 = vmatprep.subr.mxu0 0.0
    %2330 = vmatpush1.msra.mxu0 0.0
    %2331 = vmatprep.subr.mxu0 0.0
    %2332 = vmatpush1.msra.mxu0 0.0
    %2333 = vmatprep.subr.mxu0 0.0
    %2334 = vmatpush1.msra.mxu0 0.0
    %2335 = vmatprep.subr.mxu0 0.0
    %2336 = vmatpush1.msra.mxu0 0.0
    %2337 = vmatprep.subr.mxu0 0.0
    %2338 = vmatpush1.msra.mxu0 0.0
    %2339 = vmatprep.subr.mxu0 0.0
    %2340 = vmatpush1.msra.mxu0 0.0
    %2341 = vmatprep.subr.mxu0 0.0
    %2342 = vmatpush1.msra.mxu0 0.0
    %2343 = vmatprep.subr.mxu0 0.0
    %2344 = vmatpush1.msra.mxu0 0.0
    %2345 = vmatprep.subr.mxu0 0.0
    %2346 = vmatpush1.msra.mxu0 0.0
    %2347 = vmatprep.subr.mxu0 0.0
    %2348 = vmatpush1.msra.mxu0 0.0
    %2349 = vmatprep.mubr.f32.mxu0 0.0
    %2350 = vmatmul.mubr.f32.gmra.mrb[0].mxu0 %v2198
    %v2351 = vpop.f32.mrb[0].mxu0
    %v2352 = vadd.f32 %v2268, %v2351
    %v2353 = vpop.f32.mrb[0].mxu0
    %v2354 = vadd.f32 %v2272, %v2353
    %2355 = vdwg.mxu0
    %2356 = vmatprep.subr.mxu0 %v2202
    %2357 = vmatpush1.msra.mxu0 %v2201
    %2358 = vmatprep.subr.mxu0 %v2206
    %2359 = vmatpush1.msra.mxu0 %v2205
    %2360 = vmatprep.subr.mxu0 %v2210
    %2361 = vmatpush1.msra.mxu0 %v2209
    %2362 = vmatprep.subr.mxu0 %v2214
    %2363 = vmatpush1.msra.mxu0 %v2213
    %2364 = vmatprep.subr.mxu0 %v2218
    %2365 = vmatpush1.msra.mxu0 %v2217
    %2366 = vmatprep.subr.mxu0 %v2222
    %2367 = vmatpush1.msra.mxu0 %v2221
    %2368 = vmatprep.subr.mxu0 %v2226
    %2369 = vmatpush1.msra.mxu0 %v2225
    %2370 = vmatprep.subr.mxu0 %v2230
    %2371 = vmatpush1.msra.mxu0 %v2229
    %2372 = vmatprep.subr.mxu0 %v2234
    %2373 = vmatpush1.msra.mxu0 %v2233
    %2374 = vmatprep.subr.mxu0 %v2238
    %2375 = vmatpush1.msra.mxu0 %v2237
    %2376 = vmatprep.subr.mxu0 %v2242
    %2377 = vmatpush1.msra.mxu0 %v2241
    %2378 = vmatprep.subr.mxu0 %v2246
    %2379 = vmatpush1.msra.mxu0 %v2245
    %2380 = vmatprep.subr.mxu0 %v2250
    %2381 = vmatpush1.msra.mxu0 %v2249
    %2382 = vmatprep.subr.mxu0 %v2254
    %2383 = vmatpush1.msra.mxu0 %v2253
    %2384 = vmatprep.subr.mxu0 %v2258
    %2385 = vmatpush1.msra.mxu0 %v2257
    %2386 = vmatprep.subr.mxu0 %v2262
    %2387 = vmatpush1.msra.mxu0 %v2261
    %2388 = vmatprep.subr.mxu0 0.0
    %2389 = vmatpush1.msra.mxu0 0.0
    %2390 = vmatprep.subr.mxu0 0.0
    %2391 = vmatpush1.msra.mxu0 0.0
    %2392 = vmatprep.subr.mxu0 0.0
    %2393 = vmatpush1.msra.mxu0 0.0
    %2394 = vmatprep.subr.mxu0 0.0
    %2395 = vmatpush1.msra.mxu0 0.0
    %2396 = vmatprep.subr.mxu0 0.0
    %2397 = vmatpush1.msra.mxu0 0.0
    %2398 = vmatprep.subr.mxu0 0.0
    %2399 = vmatpush1.msra.mxu0 0.0
    %2400 = vmatprep.subr.mxu0 0.0
    %2401 = vmatpush1.msra.mxu0 0.0
    %2402 = vmatprep.subr.mxu0 0.0
    %2403 = vmatpush1.msra.mxu0 0.0
    %2404 = vmatprep.subr.mxu0 0.0
    %2405 = vmatpush1.msra.mxu0 0.0
    %2406 = vmatprep.subr.mxu0 0.0
    %2407 = vmatpush1.msra.mxu0 0.0
    %2408 = vmatprep.subr.mxu0 0.0
    %2409 = vmatpush1.msra.mxu0 0.0
    %2410 = vmatprep.subr.mxu0 0.0
    %2411 = vmatpush1.msra.mxu0 0.0
    %2412 = vmatprep.subr.mxu0 0.0
    %2413 = vmatpush1.msra.mxu0 0.0
    %2414 = vmatprep.subr.mxu0 0.0
    %2415 = vmatpush1.msra.mxu0 0.0
    %2416 = vmatprep.subr.mxu0 0.0
    %2417 = vmatpush1.msra.mxu0 0.0
    %2418 = vmatprep.subr.mxu0 0.0
    %2419 = vmatpush1.msra.mxu0 0.0
    %2420 = vmatprep.mubr.f32.mxu0 0.0
    %2421 = vmatmul.mubr.f32.gmra.mrb[0].mxu0 %v2198
    %v2422 = vpop.f32.mrb[0].mxu0
    %v2423 = vadd.f32 %v2276, %v2422
    %v2424 = vpop.f32.mrb[0].mxu0
    %v2425 = vadd.f32 %v2280, %v2424
    %2426 = vdwg.mxu0
    %v2427 = vld [vmem:[#allocation12] sm:$0xff]
    %v2428 = vld [vmem:[#allocation12 + $0x8] sm:$0xff]
    %v2429 = vld [vmem:[#allocation12 + $0x10] sm:$0xff]
    %v2430 = vld [vmem:[#allocation12 + $0x18] sm:$0xff]
    %v2431 = vld [vmem:[#allocation12 + $0x20] sm:$0xff]
    %v2432 = vld [vmem:[#allocation12 + $0x28] sm:$0xff]
    %v2433 = vld [vmem:[#allocation12 + $0x30] sm:$0xff]
    %v2434 = vld [vmem:[#allocation12 + $0x38] sm:$0xff]
    %v2435 = vld [vmem:[#allocation12 + $0x40] sm:$0xff]
    %v2436 = vld [vmem:[#allocation12 + $0x48] sm:$0xff]
    %v2437 = vld [vmem:[#allocation12 + $0x50] sm:$0xff]
    %v2438 = vld [vmem:[#allocation12 + $0x58] sm:$0xff]
    %v2439 = vld [vmem:[#allocation12 + $0x60] sm:$0xff]
    %v2440 = vld [vmem:[#allocation12 + $0x68] sm:$0xff]
    %v2441 = vld [vmem:[#allocation12 + $0x70] sm:$0xff]
    %v2442 = vld [vmem:[#allocation12 + $0x78] sm:$0xff]
    %v2443 = vld [vmem:[#allocation12 + $0x80] sm:$0xff]
    %v2444 = vld [vmem:[#allocation12 + $0x88] sm:$0xff]
    %v2445 = vld [vmem:[#allocation12 + $0x90] sm:$0xff]
    %v2446 = vld [vmem:[#allocation12 + $0x98] sm:$0xff]
    %v2447 = vld [vmem:[#allocation12 + $0xa0] sm:$0xff]
    %v2448 = vld [vmem:[#allocation12 + $0xa8] sm:$0xff]
    %v2449 = vld [vmem:[#allocation12 + $0xb0] sm:$0xff]
    %v2450 = vld [vmem:[#allocation12 + $0xb8] sm:$0xff]
    %v2451 = vld [vmem:[#allocation12 + $0xc0] sm:$0xff]
    %v2452 = vld [vmem:[#allocation12 + $0xc8] sm:$0xff]
    %v2453 = vld [vmem:[#allocation12 + $0xd0] sm:$0xff]
    %v2454 = vld [vmem:[#allocation12 + $0xd8] sm:$0xff]
    %v2455 = vld [vmem:[#allocation12 + $0xe0] sm:$0xff]
    %v2456 = vld [vmem:[#allocation12 + $0xe8] sm:$0xff]
    %v2457 = vld [vmem:[#allocation12 + $0xf0] sm:$0xff]
    %v2458 = vld [vmem:[#allocation12 + $0xf8] sm:$0xff]
    %v2459 = vld [vmem:[#allocation12 + $0x100] sm:$0xff]
    %v2460 = vld [vmem:[#allocation12 + $0x108] sm:$0xff]
    %v2461 = vld [vmem:[#allocation12 + $0x110] sm:$0xff]
    %v2462 = vld [vmem:[#allocation12 + $0x118] sm:$0xff]
    %v2463 = vld [vmem:[#allocation12 + $0x120] sm:$0xff]
    %v2464 = vld [vmem:[#allocation12 + $0x128] sm:$0xff]
    %v2465 = vld [vmem:[#allocation12 + $0x130] sm:$0xff]
    %v2466 = vld [vmem:[#allocation12 + $0x138] sm:$0xff]
    %v2467 = vld [vmem:[#allocation12 + $0x140] sm:$0xff]
    %v2468 = vld [vmem:[#allocation12 + $0x148] sm:$0xff]
    %v2469 = vld [vmem:[#allocation12 + $0x150] sm:$0xff]
    %v2470 = vld [vmem:[#allocation12 + $0x158] sm:$0xff]
    %v2471 = vld [vmem:[#allocation12 + $0x160] sm:$0xff]
    %v2472 = vld [vmem:[#allocation12 + $0x168] sm:$0xff]
    %v2473 = vld [vmem:[#allocation12 + $0x170] sm:$0xff]
    %v2474 = vld [vmem:[#allocation12 + $0x178] sm:$0xff]
    %v2475 = vld [vmem:[#allocation12 + $0x180] sm:$0xff]
    %v2476 = vld [vmem:[#allocation12 + $0x188] sm:$0xff]
    %v2477 = vld [vmem:[#allocation12 + $0x190] sm:$0xff]
    %v2478 = vld [vmem:[#allocation12 + $0x198] sm:$0xff]
    %v2479 = vld [vmem:[#allocation12 + $0x1a0] sm:$0xff]
    %v2480 = vld [vmem:[#allocation12 + $0x1a8] sm:$0xff]
    %v2481 = vld [vmem:[#allocation12 + $0x1b0] sm:$0xff]
    %v2482 = vld [vmem:[#allocation12 + $0x1b8] sm:$0xff]
    %v2483 = vld [vmem:[#allocation12 + $0x1c0] sm:$0xff]
    %v2484 = vld [vmem:[#allocation12 + $0x1c8] sm:$0xff]
    %v2485 = vld [vmem:[#allocation12 + $0x1d0] sm:$0xff]
    %v2486 = vld [vmem:[#allocation12 + $0x1d8] sm:$0xff]
    %v2487 = vld [vmem:[#allocation12 + $0x1e0] sm:$0xff]
    %v2488 = vld [vmem:[#allocation12 + $0x1e8] sm:$0xff]
    %v2489 = vld [vmem:[#allocation12 + $0x1f0] sm:$0xff]
    %v2490 = vld [vmem:[#allocation12 + $0x1f8] sm:$0xff]
    %2491 = vmatprep.subr.mxu0 %v2428
    %2492 = vmatpush1.msra.mxu0 %v2427
    %2493 = vmatprep.subr.mxu0 %v2432
    %2494 = vmatpush1.msra.mxu0 %v2431
    %2495 = vmatprep.subr.mxu0 %v2436
    %2496 = vmatpush1.msra.mxu0 %v2435
    %2497 = vmatprep.subr.mxu0 %v2440
    %2498 = vmatpush1.msra.mxu0 %v2439
    %2499 = vmatprep.subr.mxu0 %v2444
    %2500 = vmatpush1.msra.mxu0 %v2443
    %2501 = vmatprep.subr.mxu0 %v2448
    %2502 = vmatpush1.msra.mxu0 %v2447
    %2503 = vmatprep.subr.mxu0 %v2452
    %2504 = vmatpush1.msra.mxu0 %v2451
    %2505 = vmatprep.subr.mxu0 %v2456
    %2506 = vmatpush1.msra.mxu0 %v2455
    %2507 = vmatprep.subr.mxu0 %v2460
    %2508 = vmatpush1.msra.mxu0 %v2459
    %2509 = vmatprep.subr.mxu0 %v2464
    %2510 = vmatpush1.msra.mxu0 %v2463
    %2511 = vmatprep.subr.mxu0 %v2468
    %2512 = vmatpush1.msra.mxu0 %v2467
    %2513 = vmatprep.subr.mxu0 %v2472
    %2514 = vmatpush1.msra.mxu0 %v2471
    %2515 = vmatprep.subr.mxu0 %v2476
    %2516 = vmatpush1.msra.mxu0 %v2475
    %2517 = vmatprep.subr.mxu0 %v2480
    %2518 = vmatpush1.msra.mxu0 %v2479
    %2519 = vmatprep.subr.mxu0 %v2484
    %2520 = vmatpush1.msra.mxu0 %v2483
    %2521 = vmatprep.subr.mxu0 %v2488
    %2522 = vmatpush1.msra.mxu0 %v2487
    %2523 = vmatprep.subr.mxu0 0.0
    %2524 = vmatpush1.msra.mxu0 0.0
    %2525 = vmatprep.subr.mxu0 0.0
    %2526 = vmatpush1.msra.mxu0 0.0
    %2527 = vmatprep.subr.mxu0 0.0
    %2528 = vmatpush1.msra.mxu0 0.0
    %2529 = vmatprep.subr.mxu0 0.0
    %2530 = vmatpush1.msra.mxu0 0.0
    %2531 = vmatprep.subr.mxu0 0.0
    %2532 = vmatpush1.msra.mxu0 0.0
    %2533 = vmatprep.subr.mxu0 0.0
    %2534 = vmatpush1.msra.mxu0 0.0
    %2535 = vmatprep.subr.mxu0 0.0
    %2536 = vmatpush1.msra.mxu0 0.0
    %2537 = vmatprep.subr.mxu0 0.0
    %2538 = vmatpush1.msra.mxu0 0.0
    %2539 = vmatprep.subr.mxu0 0.0
    %2540 = vmatpush1.msra.mxu0 0.0
    %2541 = vmatprep.subr.mxu0 0.0
    %2542 = vmatpush1.msra.mxu0 0.0
    %2543 = vmatprep.subr.mxu0 0.0
    %2544 = vmatpush1.msra.mxu0 0.0
    %2545 = vmatprep.subr.mxu0 0.0
    %2546 = vmatpush1.msra.mxu0 0.0
    %2547 = vmatprep.subr.mxu0 0.0
    %2548 = vmatpush1.msra.mxu0 0.0
    %2549 = vmatprep.subr.mxu0 0.0
    %2550 = vmatpush1.msra.mxu0 0.0
    %2551 = vmatprep.subr.mxu0 0.0
    %2552 = vmatpush1.msra.mxu0 0.0
    %2553 = vmatprep.subr.mxu0 0.0
    %2554 = vmatpush1.msra.mxu0 0.0
    %2555 = vmatprep.mubr.f32.mxu0 0.0
    %2556 = vmatmul.mubr.f32.gmra.mrb[0].mxu0 0.0
    %v2557 = vpop.f32.mrb[0].mxu0
    %v2558 = vadd.f32 %v2352, %v2557
    %v2559 = vpop.f32.mrb[0].mxu0
    %v2560 = vadd.f32 %v2354, %v2559
    %2561 = vdwg.mxu0
    %2562 = vmatprep.subr.mxu0 %v2430
    %2563 = vmatpush1.msra.mxu0 %v2429
    %2564 = vmatprep.subr.mxu0 %v2434
    %2565 = vmatpush1.msra.mxu0 %v2433
    %2566 = vmatprep.subr.mxu0 %v2438
    %2567 = vmatpush1.msra.mxu0 %v2437
    %2568 = vmatprep.subr.mxu0 %v2442
    %2569 = vmatpush1.msra.mxu0 %v2441
    %2570 = vmatprep.subr.mxu0 %v2446
    %2571 = vmatpush1.msra.mxu0 %v2445
    %2572 = vmatprep.subr.mxu0 %v2450
    %2573 = vmatpush1.msra.mxu0 %v2449
    %2574 = vmatprep.subr.mxu0 %v2454
    %2575 = vmatpush1.msra.mxu0 %v2453
    %2576 = vmatprep.subr.mxu0 %v2458
    %2577 = vmatpush1.msra.mxu0 %v2457
    %2578 = vmatprep.subr.mxu0 %v2462
    %2579 = vmatpush1.msra.mxu0 %v2461
    %2580 = vmatprep.subr.mxu0 %v2466
    %2581 = vmatpush1.msra.mxu0 %v2465
    %2582 = vmatprep.subr.mxu0 %v2470
    %2583 = vmatpush1.msra.mxu0 %v2469
    %2584 = vmatprep.subr.mxu0 %v2474
    %2585 = vmatpush1.msra.mxu0 %v2473
    %2586 = vmatprep.subr.mxu0 %v2478
    %2587 = vmatpush1.msra.mxu0 %v2477
    %2588 = vmatprep.subr.mxu0 %v2482
    %2589 = vmatpush1.msra.mxu0 %v2481
    %2590 = vmatprep.subr.mxu0 %v2486
    %2591 = vmatpush1.msra.mxu0 %v2485
    %2592 = vmatprep.subr.mxu0 %v2490
    %2593 = vmatpush1.msra.mxu0 %v2489
    %2594 = vmatprep.subr.mxu0 0.0
    %2595 = vmatpush1.msra.mxu0 0.0
    %2596 = vmatprep.subr.mxu0 0.0
    %2597 = vmatpush1.msra.mxu0 0.0
    %2598 = vmatprep.subr.mxu0 0.0
    %2599 = vmatpush1.msra.mxu0 0.0
    %2600 = vmatprep.subr.mxu0 0.0
    %2601 = vmatpush1.msra.mxu0 0.0
    %2602 = vmatprep.subr.mxu0 0.0
    %2603 = vmatpush1.msra.mxu0 0.0
    %2604 = vmatprep.subr.mxu0 0.0
    %2605 = vmatpush1.msra.mxu0 0.0
    %2606 = vmatprep.subr.mxu0 0.0
    %2607 = vmatpush1.msra.mxu0 0.0
    %2608 = vmatprep.subr.mxu0 0.0
    %2609 = vmatpush1.msra.mxu0 0.0
    %2610 = vmatprep.subr.mxu0 0.0
    %2611 = vmatpush1.msra.mxu0 0.0
    %2612 = vmatprep.subr.mxu0 0.0
    %2613 = vmatpush1.msra.mxu0 0.0
    %2614 = vmatprep.subr.mxu0 0.0
    %2615 = vmatpush1.msra.mxu0 0.0
    %2616 = vmatprep.subr.mxu0 0.0
    %2617 = vmatpush1.msra.mxu0 0.0
    %2618 = vmatprep.subr.mxu0 0.0
    %2619 = vmatpush1.msra.mxu0 0.0
    %2620 = vmatprep.subr.mxu0 0.0
    %2621 = vmatpush1.msra.mxu0 0.0
    %2622 = vmatprep.subr.mxu0 0.0
    %2623 = vmatpush1.msra.mxu0 0.0
    %2624 = vmatprep.subr.mxu0 0.0
    %2625 = vmatpush1.msra.mxu0 0.0
    %2626 = vmatprep.mubr.f32.mxu0 0.0
    %2627 = vmatmul.mubr.f32.gmra.mrb[0].mxu0 0.0
    %v2628 = vpop.f32.mrb[0].mxu0
    %v2629 = vadd.f32 %v2423, %v2628
    %v2630 = vpop.f32.mrb[0].mxu0
    %v2631 = vadd.f32 %v2425, %v2630
    %2632 = vdwg.mxu0
    %v2633 = vxor.u32 %v2558, 2147483648
    %v2634 = vmul.f32 %v2633, 1.442695
    %v2635 = vpow.pop %v2634
    %v2636 = vadd.f32 %v2635, 1.0
    %v2637 = vrcp.pop %v2636
    %v2638 = vmul.f32 1.0, %v2637
    %v2639 = vxor.u32 %v2560, 2147483648
    %v2640 = vmul.f32 %v2639, 1.442695
    %v2641 = vpow.pop %v2640
    %v2642 = vadd.f32 %v2641, 1.0
    %v2643 = vrcp.pop %v2642
    %v2644 = vmul.f32 1.0, %v2643
    %v2645 = vtanh.pop %v2629
    %v2646 = vxor.u32 %v2631, 2147483648
    %v2647 = vmul.f32 %v2646, 1.442695
    %v2648 = vpow.pop %v2647
    %v2649 = vadd.f32 %v2648, 1.0
    %v2650 = vrcp.pop %v2649
    %v2651 = vmul.f32 1.0, %v2650
    %v2652 = vmul.f32 %v2644, 0.0
    %v2653 = vmul.f32 %v2638, %v2645
    %v2654 = vadd.f32 %v2652, %v2653
    %v2655 = vtanh.pop %v2654
    %v2656 = vmul.f32 %v2651, %v2655
    %2657 = vst [vmem:[#allocation3] sm:$0x1] %v2656
    %v2658 = vld [vmem:[#allocation12] sm:$0xff]
    %v2659 = vld [vmem:[#allocation12 + $0x8] sm:$0xff]
    %v2660 = vld [vmem:[#allocation12 + $0x10] sm:$0xff]
    %v2661 = vld [vmem:[#allocation12 + $0x18] sm:$0xff]
    %v2662 = vld [vmem:[#allocation12 + $0x20] sm:$0xff]
    %v2663 = vld [vmem:[#allocation12 + $0x28] sm:$0xff]
    %v2664 = vld [vmem:[#allocation12 + $0x30] sm:$0xff]
    %v2665 = vld [vmem:[#allocation12 + $0x38] sm:$0xff]
    %v2666 = vld [vmem:[#allocation12 + $0x40] sm:$0xff]
    %v2667 = vld [vmem:[#allocation12 + $0x48] sm:$0xff]
    %v2668 = vld [vmem:[#allocation12 + $0x50] sm:$0xff]
    %v2669 = vld [vmem:[#allocation12 + $0x58] sm:$0xff]
    %v2670 = vld [vmem:[#allocation12 + $0x60] sm:$0xff]
    %v2671 = vld [vmem:[#allocation12 + $0x68] sm:$0xff]
    %v2672 = vld [vmem:[#allocation12 + $0x70] sm:$0xff]
    %v2673 = vld [vmem:[#allocation12 + $0x78] sm:$0xff]
    %v2674 = vld [vmem:[#allocation12 + $0x80] sm:$0xff]
    %v2675 = vld [vmem:[#allocation12 + $0x88] sm:$0xff]
    %v2676 = vld [vmem:[#allocation12 + $0x90] sm:$0xff]
    %v2677 = vld [vmem:[#allocation12 + $0x98] sm:$0xff]
    %v2678 = vld [vmem:[#allocation12 + $0xa0] sm:$0xff]
    %v2679 = vld [vmem:[#allocation12 + $0xa8] sm:$0xff]
    %v2680 = vld [vmem:[#allocation12 + $0xb0] sm:$0xff]
    %v2681 = vld [vmem:[#allocation12 + $0xb8] sm:$0xff]
    %v2682 = vld [vmem:[#allocation12 + $0xc0] sm:$0xff]
    %v2683 = vld [vmem:[#allocation12 + $0xc8] sm:$0xff]
    %v2684 = vld [vmem:[#allocation12 + $0xd0] sm:$0xff]
    %v2685 = vld [vmem:[#allocation12 + $0xd8] sm:$0xff]
    %v2686 = vld [vmem:[#allocation12 + $0xe0] sm:$0xff]
    %v2687 = vld [vmem:[#allocation12 + $0xe8] sm:$0xff]
    %v2688 = vld [vmem:[#allocation12 + $0xf0] sm:$0xff]
    %v2689 = vld [vmem:[#allocation12 + $0xf8] sm:$0xff]
    %v2690 = vld [vmem:[#allocation12 + $0x100] sm:$0xff]
    %v2691 = vld [vmem:[#allocation12 + $0x108] sm:$0xff]
    %v2692 = vld [vmem:[#allocation12 + $0x110] sm:$0xff]
    %v2693 = vld [vmem:[#allocation12 + $0x118] sm:$0xff]
    %v2694 = vld [vmem:[#allocation12 + $0x120] sm:$0xff]
    %v2695 = vld [vmem:[#allocation12 + $0x128] sm:$0xff]
    %v2696 = vld [vmem:[#allocation12 + $0x130] sm:$0xff]
    %v2697 = vld [vmem:[#allocation12 + $0x138] sm:$0xff]
    %v2698 = vld [vmem:[#allocation12 + $0x140] sm:$0xff]
    %v2699 = vld [vmem:[#allocation12 + $0x148] sm:$0xff]
    %v2700 = vld [vmem:[#allocation12 + $0x150] sm:$0xff]
    %v2701 = vld [vmem:[#allocation12 + $0x158] sm:$0xff]
    %v2702 = vld [vmem:[#allocation12 + $0x160] sm:$0xff]
    %v2703 = vld [vmem:[#allocation12 + $0x168] sm:$0xff]
    %v2704 = vld [vmem:[#allocation12 + $0x170] sm:$0xff]
    %v2705 = vld [vmem:[#allocation12 + $0x178] sm:$0xff]
    %v2706 = vld [vmem:[#allocation12 + $0x180] sm:$0xff]
    %v2707 = vld [vmem:[#allocation12 + $0x188] sm:$0xff]
    %v2708 = vld [vmem:[#allocation12 + $0x190] sm:$0xff]
    %v2709 = vld [vmem:[#allocation12 + $0x198] sm:$0xff]
    %v2710 = vld [vmem:[#allocation12 + $0x1a0] sm:$0xff]
    %v2711 = vld [vmem:[#allocation12 + $0x1a8] sm:$0xff]
    %v2712 = vld [vmem:[#allocation12 + $0x1b0] sm:$0xff]
    %v2713 = vld [vmem:[#allocation12 + $0x1b8] sm:$0xff]
    %v2714 = vld [vmem:[#allocation12 + $0x1c0] sm:$0xff]
    %v2715 = vld [vmem:[#allocation12 + $0x1c8] sm:$0xff]
    %v2716 = vld [vmem:[#allocation12 + $0x1d0] sm:$0xff]
    %v2717 = vld [vmem:[#allocation12 + $0x1d8] sm:$0xff]
    %v2718 = vld [vmem:[#allocation12 + $0x1e0] sm:$0xff]
    %v2719 = vld [vmem:[#allocation12 + $0x1e8] sm:$0xff]
    %v2720 = vld [vmem:[#allocation12 + $0x1f0] sm:$0xff]
    %v2721 = vld [vmem:[#allocation12 + $0x1f8] sm:$0xff]
    %v2726 = vrot.slane %v2352, 1
    %v2727 = vrot.slane %v2354, 1
    %v2728 = vrot.slane %v2423, 1
    %v2729 = vrot.slane %v2425, 1
    %2734 = vmatprep.subr.mxu0 %v2659
    %2735 = vmatpush1.msra.mxu0 %v2658
    %2736 = vmatprep.subr.mxu0 %v2663
    %2737 = vmatpush1.msra.mxu0 %v2662
    %2738 = vmatprep.subr.mxu0 %v2667
    %2739 = vmatpush1.msra.mxu0 %v2666
    %2740 = vmatprep.subr.mxu0 %v2671
    %2741 = vmatpush1.msra.mxu0 %v2670
    %2742 = vmatprep.subr.mxu0 %v2675
    %2743 = vmatpush1.msra.mxu0 %v2674
    %2744 = vmatprep.subr.mxu0 %v2679
    %2745 = vmatpush1.msra.mxu0 %v2678
    %2746 = vmatprep.subr.mxu0 %v2683
    %2747 = vmatpush1.msra.mxu0 %v2682
    %2748 = vmatprep.subr.mxu0 %v2687
    %2749 = vmatpush1.msra.mxu0 %v2686
    %2750 = vmatprep.subr.mxu0 %v2691
    %2751 = vmatpush1.msra.mxu0 %v2690
    %2752 = vmatprep.subr.mxu0 %v2695
    %2753 = vmatpush1.msra.mxu0 %v2694
    %2754 = vmatprep.subr.mxu0 %v2699
    %2755 = vmatpush1.msra.mxu0 %v2698
    %2756 = vmatprep.subr.mxu0 %v2703
    %2757 = vmatpush1.msra.mxu0 %v2702
    %2758 = vmatprep.subr.mxu0 %v2707
    %2759 = vmatpush1.msra.mxu0 %v2706
    %2760 = vmatprep.subr.mxu0 %v2711
    %2761 = vmatpush1.msra.mxu0 %v2710
    %2762 = vmatprep.subr.mxu0 %v2715
    %2763 = vmatpush1.msra.mxu0 %v2714
    %2764 = vmatprep.subr.mxu0 %v2719
    %2765 = vmatpush1.msra.mxu0 %v2718
    %2766 = vmatprep.subr.mxu0 0.0
    %2767 = vmatpush1.msra.mxu0 0.0
    %2768 = vmatprep.subr.mxu0 0.0
    %2769 = vmatpush1.msra.mxu0 0.0
    %2770 = vmatprep.subr.mxu0 0.0
    %2771 = vmatpush1.msra.mxu0 0.0
    %2772 = vmatprep.subr.mxu0 0.0
    %2773 = vmatpush1.msra.mxu0 0.0
    %2774 = vmatprep.subr.mxu0 0.0
    %2775 = vmatpush1.msra.mxu0 0.0
    %2776 = vmatprep.subr.mxu0 0.0
    %2777 = vmatpush1.msra.mxu0 0.0
    %2778 = vmatprep.subr.mxu0 0.0
    %2779 = vmatpush1.msra.mxu0 0.0
    %2780 = vmatprep.subr.mxu0 0.0
    %2781 = vmatpush1.msra.mxu0 0.0
    %2782 = vmatprep.subr.mxu0 0.0
    %2783 = vmatpush1.msra.mxu0 0.0
    %2784 = vmatprep.subr.mxu0 0.0
    %2785 = vmatpush1.msra.mxu0 0.0
    %2786 = vmatprep.subr.mxu0 0.0
    %2787 = vmatpush1.msra.mxu0 0.0
    %2788 = vmatprep.subr.mxu0 0.0
    %2789 = vmatpush1.msra.mxu0 0.0
    %2790 = vmatprep.subr.mxu0 0.0
    %2791 = vmatpush1.msra.mxu0 0.0
    %2792 = vmatprep.subr.mxu0 0.0
    %2793 = vmatpush1.msra.mxu0 0.0
    %2794 = vmatprep.subr.mxu0 0.0
    %2795 = vmatpush1.msra.mxu0 0.0
    %2796 = vmatprep.subr.mxu0 0.0
    %2797 = vmatpush1.msra.mxu0 0.0
    %2798 = vmatprep.mubr.f32.mxu0 0.0
    %2799 = vmatmul.mubr.f32.gmra.mrb[0].mxu0 %v2656
    %v2800 = vpop.f32.mrb[0].mxu0
    %v2801 = vadd.f32 %v2726, %v2800
    %v2802 = vpop.f32.mrb[0].mxu0
    %v2803 = vadd.f32 %v2727, %v2802
    %2804 = vdwg.mxu0
    %2805 = vmatprep.subr.mxu0 %v2661
    %2806 = vmatpush1.msra.mxu0 %v2660
    %2807 = vmatprep.subr.mxu0 %v2665
    %2808 = vmatpush1.msra.mxu0 %v2664
    %2809 = vmatprep.subr.mxu0 %v2669
    %2810 = vmatpush1.msra.mxu0 %v2668
    %2811 = vmatprep.subr.mxu0 %v2673
    %2812 = vmatpush1.msra.mxu0 %v2672
    %2813 = vmatprep.subr.mxu0 %v2677
    %2814 = vmatpush1.msra.mxu0 %v2676
    %2815 = vmatprep.subr.mxu0 %v2681
    %2816 = vmatpush1.msra.mxu0 %v2680
    %2817 = vmatprep.subr.mxu0 %v2685
    %2818 = vmatpush1.msra.mxu0 %v2684
    %2819 = vmatprep.subr.mxu0 %v2689
    %2820 = vmatpush1.msra.mxu0 %v2688
    %2821 = vmatprep.subr.mxu0 %v2693
    %2822 = vmatpush1.msra.mxu0 %v2692
    %2823 = vmatprep.subr.mxu0 %v2697
    %2824 = vmatpush1.msra.mxu0 %v2696
    %2825 = vmatprep.subr.mxu0 %v2701
    %2826 = vmatpush1.msra.mxu0 %v2700
    %2827 = vmatprep.subr.mxu0 %v2705
    %2828 = vmatpush1.msra.mxu0 %v2704
    %2829 = vmatprep.subr.mxu0 %v2709
    %2830 = vmatpush1.msra.mxu0 %v2708
    %2831 = vmatprep.subr.mxu0 %v2713
    %2832 = vmatpush1.msra.mxu0 %v2712
    %2833 = vmatprep.subr.mxu0 %v2717
    %2834 = vmatpush1.msra.mxu0 %v2716
    %2835 = vmatprep.subr.mxu0 %v2721
    %2836 = vmatpush1.msra.mxu0 %v2720
    %2837 = vmatprep.subr.mxu0 0.0
    %2838 = vmatpush1.msra.mxu0 0.0
    %2839 = vmatprep.subr.mxu0 0.0
    %2840 = vmatpush1.msra.mxu0 0.0
    %2841 = vmatprep.subr.mxu0 0.0
    %2842 = vmatpush1.msra.mxu0 0.0
    %2843 = vmatprep.subr.mxu0 0.0
    %2844 = vmatpush1.msra.mxu0 0.0
    %2845 = vmatprep.subr.mxu0 0.0
    %2846 = vmatpush1.msra.mxu0 0.0
    %2847 = vmatprep.subr.mxu0 0.0
    %2848 = vmatpush1.msra.mxu0 0.0
    %2849 = vmatprep.subr.mxu0 0.0
    %2850 = vmatpush1.msra.mxu0 0.0
    %2851 = vmatprep.subr.mxu0 0.0
    %2852 = vmatpush1.msra.mxu0 0.0
    %2853 = vmatprep.subr.mxu0 0.0
    %2854 = vmatpush1.msra.mxu0 0.0
    %2855 = vmatprep.subr.mxu0 0.0
    %2856 = vmatpush1.msra.mxu0 0.0
    %2857 = vmatprep.subr.mxu0 0.0
    %2858 = vmatpush1.msra.mxu0 0.0
    %2859 = vmatprep.subr.mxu0 0.0
    %2860 = vmatpush1.msra.mxu0 0.0
    %2861 = vmatprep.subr.mxu0 0.0
    %2862 = vmatpush1.msra.mxu0 0.0
    %2863 = vmatprep.subr.mxu0 0.0
    %2864 = vmatpush1.msra.mxu0 0.0
    %2865 = vmatprep.subr.mxu0 0.0
    %2866 = vmatpush1.msra.mxu0 0.0
    %2867 = vmatprep.subr.mxu0 0.0
    %2868 = vmatpush1.msra.mxu0 0.0
    %2869 = vmatprep.mubr.f32.mxu0 0.0
    %2870 = vmatmul.mubr.f32.gmra.mrb[0].mxu0 %v2656
    %v2871 = vpop.f32.mrb[0].mxu0
    %v2872 = vadd.f32 %v2728, %v2871
    %v2873 = vpop.f32.mrb[0].mxu0
    %v2874 = vadd.f32 %v2729, %v2873
    %2875 = vdwg.mxu0
    %v2876 = vxor.u32 %v2801, 2147483648
    %v2877 = vmul.f32 %v2876, 1.442695
    %v2878 = vpow.pop %v2877
    %v2879 = vadd.f32 %v2878, 1.0
    %v2880 = vrcp.pop %v2879
    %v2881 = vmul.f32 1.0, %v2880
    %v2882 = vxor.u32 %v2803, 2147483648
    %v2883 = vmul.f32 %v2882, 1.442695
    %v2884 = vpow.pop %v2883
    %v2885 = vadd.f32 %v2884, 1.0
    %v2886 = vrcp.pop %v2885
    %v2887 = vmul.f32 1.0, %v2886
    %v2888 = vtanh.pop %v2872
    %v2889 = vxor.u32 %v2874, 2147483648
    %v2890 = vmul.f32 %v2889, 1.442695
    %v2891 = vpow.pop %v2890
    %v2892 = vadd.f32 %v2891, 1.0
    %v2893 = vrcp.pop %v2892
    %v2894 = vmul.f32 1.0, %v2893
    %v2895 = vmul.f32 %v2887, %v2654
    %v2896 = vmul.f32 %v2881, %v2888
    %v2897 = vadd.f32 %v2895, %v2896
    %v2898 = vtanh.pop %v2897
    %v2899 = vmul.f32 %v2894, %v2898
    %2900 = vst [vmem:[#allocation3 + $0x1] sm:$0x1] %v2899
    %v2901 = vld [vmem:[#allocation12] sm:$0xff]
    %v2902 = vld [vmem:[#allocation12 + $0x8] sm:$0xff]
    %v2903 = vld [vmem:[#allocation12 + $0x10] sm:$0xff]
    %v2904 = vld [vmem:[#allocation12 + $0x18] sm:$0xff]
    %v2905 = vld [vmem:[#allocation12 + $0x20] sm:$0xff]
    %v2906 = vld [vmem:[#allocation12 + $0x28] sm:$0xff]
    %v2907 = vld [vmem:[#allocation12 + $0x30] sm:$0xff]
    %v2908 = vld [vmem:[#allocation12 + $0x38] sm:$0xff]
    %v2909 = vld [vmem:[#allocation12 + $0x40] sm:$0xff]
    %v2910 = vld [vmem:[#allocation12 + $0x48] sm:$0xff]
    %v2911 = vld [vmem:[#allocation12 + $0x50] sm:$0xff]
    %v2912 = vld [vmem:[#allocation12 + $0x58] sm:$0xff]
    %v2913 = vld [vmem:[#allocation12 + $0x60] sm:$0xff]
    %v2914 = vld [vmem:[#allocation12 + $0x68] sm:$0xff]
    %v2915 = vld [vmem:[#allocation12 + $0x70] sm:$0xff]
    %v2916 = vld [vmem:[#allocation12 + $0x78] sm:$0xff]
    %v2917 = vld [vmem:[#allocation12 + $0x80] sm:$0xff]
    %v2918 = vld [vmem:[#allocation12 + $0x88] sm:$0xff]
    %v2919 = vld [vmem:[#allocation12 + $0x90] sm:$0xff]
    %v2920 = vld [vmem:[#allocation12 + $0x98] sm:$0xff]
    %v2921 = vld [vmem:[#allocation12 + $0xa0] sm:$0xff]
    %v2922 = vld [vmem:[#allocation12 + $0xa8] sm:$0xff]
    %v2923 = vld [vmem:[#allocation12 + $0xb0] sm:$0xff]
    %v2924 = vld [vmem:[#allocation12 + $0xb8] sm:$0xff]
    %v2925 = vld [vmem:[#allocation12 + $0xc0] sm:$0xff]
    %v2926 = vld [vmem:[#allocation12 + $0xc8] sm:$0xff]
    %v2927 = vld [vmem:[#allocation12 + $0xd0] sm:$0xff]
    %v2928 = vld [vmem:[#allocation12 + $0xd8] sm:$0xff]
    %v2929 = vld [vmem:[#allocation12 + $0xe0] sm:$0xff]
    %v2930 = vld [vmem:[#allocation12 + $0xe8] sm:$0xff]
    %v2931 = vld [vmem:[#allocation12 + $0xf0] sm:$0xff]
    %v2932 = vld [vmem:[#allocation12 + $0xf8] sm:$0xff]
    %v2933 = vld [vmem:[#allocation12 + $0x100] sm:$0xff]
    %v2934 = vld [vmem:[#allocation12 + $0x108] sm:$0xff]
    %v2935 = vld [vmem:[#allocation12 + $0x110] sm:$0xff]
    %v2936 = vld [vmem:[#allocation12 + $0x118] sm:$0xff]
    %v2937 = vld [vmem:[#allocation12 + $0x120] sm:$0xff]
    %v2938 = vld [vmem:[#allocation12 + $0x128] sm:$0xff]
    %v2939 = vld [vmem:[#allocation12 + $0x130] sm:$0xff]
    %v2940 = vld [vmem:[#allocation12 + $0x138] sm:$0xff]
    %v2941 = vld [vmem:[#allocation12 + $0x140] sm:$0xff]
    %v2942 = vld [vmem:[#allocation12 + $0x148] sm:$0xff]
    %v2943 = vld [vmem:[#allocation12 + $0x150] sm:$0xff]
    %v2944 = vld [vmem:[#allocation12 + $0x158] sm:$0xff]
    %v2945 = vld [vmem:[#allocation12 + $0x160] sm:$0xff]
    %v2946 = vld [vmem:[#allocation12 + $0x168] sm:$0xff]
    %v2947 = vld [vmem:[#allocation12 + $0x170] sm:$0xff]
    %v2948 = vld [vmem:[#allocation12 + $0x178] sm:$0xff]
    %v2949 = vld [vmem:[#allocation12 + $0x180] sm:$0xff]
    %v2950 = vld [vmem:[#allocation12 + $0x188] sm:$0xff]
    %v2951 = vld [vmem:[#allocation12 + $0x190] sm:$0xff]
    %v2952 = vld [vmem:[#allocation12 + $0x198] sm:$0xff]
    %v2953 = vld [vmem:[#allocation12 + $0x1a0] sm:$0xff]
    %v2954 = vld [vmem:[#allocation12 + $0x1a8] sm:$0xff]
    %v2955 = vld [vmem:[#allocation12 + $0x1b0] sm:$0xff]
    %v2956 = vld [vmem:[#allocation12 + $0x1b8] sm:$0xff]
    %v2957 = vld [vmem:[#allocation12 + $0x1c0] sm:$0xff]
    %v2958 = vld [vmem:[#allocation12 + $0x1c8] sm:$0xff]
    %v2959 = vld [vmem:[#allocation12 + $0x1d0] sm:$0xff]
    %v2960 = vld [vmem:[#allocation12 + $0x1d8] sm:$0xff]
    %v2961 = vld [vmem:[#allocation12 + $0x1e0] sm:$0xff]
    %v2962 = vld [vmem:[#allocation12 + $0x1e8] sm:$0xff]
    %v2963 = vld [vmem:[#allocation12 + $0x1f0] sm:$0xff]
    %v2964 = vld [vmem:[#allocation12 + $0x1f8] sm:$0xff]
    %v2965 = vrot.slane %v2352, 2
    %v2966 = vrot.slane %v2354, 2
    %v2967 = vrot.slane %v2423, 2
    %v2968 = vrot.slane %v2425, 2
    %2973 = vmatprep.subr.mxu0 %v2902
    %2974 = vmatpush1.msra.mxu0 %v2901
    %2975 = vmatprep.subr.mxu0 %v2906
    %2976 = vmatpush1.msra.mxu0 %v2905
    %2977 = vmatprep.subr.mxu0 %v2910
    %2978 = vmatpush1.msra.mxu0 %v2909
    %2979 = vmatprep.subr.mxu0 %v2914
    %2980 = vmatpush1.msra.mxu0 %v2913
    %2981 = vmatprep.subr.mxu0 %v2918
    %2982 = vmatpush1.msra.mxu0 %v2917
    %2983 = vmatprep.subr.mxu0 %v2922
    %2984 = vmatpush1.msra.mxu0 %v2921
    %2985 = vmatprep.subr.mxu0 %v2926
    %2986 = vmatpush1.msra.mxu0 %v2925
    %2987 = vmatprep.subr.mxu0 %v2930
    %2988 = vmatpush1.msra.mxu0 %v2929
    %2989 = vmatprep.subr.mxu0 %v2934
    %2990 = vmatpush1.msra.mxu0 %v2933
    %2991 = vmatprep.subr.mxu0 %v2938
    %2992 = vmatpush1.msra.mxu0 %v2937
    %2993 = vmatprep.subr.mxu0 %v2942
    %2994 = vmatpush1.msra.mxu0 %v2941
    %2995 = vmatprep.subr.mxu0 %v2946
    %2996 = vmatpush1.msra.mxu0 %v2945
    %2997 = vmatprep.subr.mxu0 %v2950
    %2998 = vmatpush1.msra.mxu0 %v2949
    %2999 = vmatprep.subr.mxu0 %v2954
    %3000 = vmatpush1.msra.mxu0 %v2953
    %3001 = vmatprep.subr.mxu0 %v2958
    %3002 = vmatpush1.msra.mxu0 %v2957
    %3003 = vmatprep.subr.mxu0 %v2962
    %3004 = vmatpush1.msra.mxu0 %v2961
    %3005 = vmatprep.subr.mxu0 0.0
    %3006 = vmatpush1.msra.mxu0 0.0
    %3007 = vmatprep.subr.mxu0 0.0
    %3008 = vmatpush1.msra.mxu0 0.0
    %3009 = vmatprep.subr.mxu0 0.0
    %3010 = vmatpush1.msra.mxu0 0.0
    %3011 = vmatprep.subr.mxu0 0.0
    %3012 = vmatpush1.msra.mxu0 0.0
    %3013 = vmatprep.subr.mxu0 0.0
    %3014 = vmatpush1.msra.mxu0 0.0
    %3015 = vmatprep.subr.mxu0 0.0
    %3016 = vmatpush1.msra.mxu0 0.0
    %3017 = vmatprep.subr.mxu0 0.0
    %3018 = vmatpush1.msra.mxu0 0.0
    %3019 = vmatprep.subr.mxu0 0.0
    %3020 = vmatpush1.msra.mxu0 0.0
    %3021 = vmatprep.subr.mxu0 0.0
    %3022 = vmatpush1.msra.mxu0 0.0
    %3023 = vmatprep.subr.mxu0 0.0
    %3024 = vmatpush1.msra.mxu0 0.0
    %3025 = vmatprep.subr.mxu0 0.0
    %3026 = vmatpush1.msra.mxu0 0.0
    %3027 = vmatprep.subr.mxu0 0.0
    %3028 = vmatpush1.msra.mxu0 0.0
    %3029 = vmatprep.subr.mxu0 0.0
    %3030 = vmatpush1.msra.mxu0 0.0
    %3031 = vmatprep.subr.mxu0 0.0
    %3032 = vmatpush1.msra.mxu0 0.0
    %3033 = vmatprep.subr.mxu0 0.0
    %3034 = vmatpush1.msra.mxu0 0.0
    %3035 = vmatprep.subr.mxu0 0.0
    %3036 = vmatpush1.msra.mxu0 0.0
    %3037 = vmatprep.mubr.f32.mxu0 0.0
    %3038 = vmatmul.mubr.f32.gmra.mrb[0].mxu0 %v2899
    %v3039 = vpop.f32.mrb[0].mxu0
    %v3040 = vadd.f32 %v2965, %v3039
    %v3041 = vpop.f32.mrb[0].mxu0
    %v3042 = vadd.f32 %v2966, %v3041
    %3043 = vdwg.mxu0
    %3044 = vmatprep.subr.mxu0 %v2904
    %3045 = vmatpush1.msra.mxu0 %v2903
    %3046 = vmatprep.subr.mxu0 %v2908
    %3047 = vmatpush1.msra.mxu0 %v2907
    %3048 = vmatprep.subr.mxu0 %v2912
    %3049 = vmatpush1.msra.mxu0 %v2911
    %3050 = vmatprep.subr.mxu0 %v2916
    %3051 = vmatpush1.msra.mxu0 %v2915
    %3052 = vmatprep.subr.mxu0 %v2920
    %3053 = vmatpush1.msra.mxu0 %v2919
    %3054 = vmatprep.subr.mxu0 %v2924
    %3055 = vmatpush1.msra.mxu0 %v2923
    %3056 = vmatprep.subr.mxu0 %v2928
    %3057 = vmatpush1.msra.mxu0 %v2927
    %3058 = vmatprep.subr.mxu0 %v2932
    %3059 = vmatpush1.msra.mxu0 %v2931
    %3060 = vmatprep.subr.mxu0 %v2936
    %3061 = vmatpush1.msra.mxu0 %v2935
    %3062 = vmatprep.subr.mxu0 %v2940
    %3063 = vmatpush1.msra.mxu0 %v2939
    %3064 = vmatprep.subr.mxu0 %v2944
    %3065 = vmatpush1.msra.mxu0 %v2943
    %3066 = vmatprep.subr.mxu0 %v2948
    %3067 = vmatpush1.msra.mxu0 %v2947
    %3068 = vmatprep.subr.mxu0 %v2952
    %3069 = vmatpush1.msra.mxu0 %v2951
    %3070 = vmatprep.subr.mxu0 %v2956
    %3071 = vmatpush1.msra.mxu0 %v2955
    %3072 = vmatprep.subr.mxu0 %v2960
    %3073 = vmatpush1.msra.mxu0 %v2959
    %3074 = vmatprep.subr.mxu0 %v2964
    %3075 = vmatpush1.msra.mxu0 %v2963
    %3076 = vmatprep.subr.mxu0 0.0
    %3077 = vmatpush1.msra.mxu0 0.0
    %3078 = vmatprep.subr.mxu0 0.0
    %3079 = vmatpush1.msra.mxu0 0.0
    %3080 = vmatprep.subr.mxu0 0.0
    %3081 = vmatpush1.msra.mxu0 0.0
    %3082 = vmatprep.subr.mxu0 0.0
    %3083 = vmatpush1.msra.mxu0 0.0
    %3084 = vmatprep.subr.mxu0 0.0
    %3085 = vmatpush1.msra.mxu0 0.0
    %3086 = vmatprep.subr.mxu0 0.0
    %3087 = vmatpush1.msra.mxu0 0.0
    %3088 = vmatprep.subr.mxu0 0.0
    %3089 = vmatpush1.msra.mxu0 0.0
    %3090 = vmatprep.subr.mxu0 0.0
    %3091 = vmatpush1.msra.mxu0 0.0
    %3092 = vmatprep.subr.mxu0 0.0
    %3093 = vmatpush1.msra.mxu0 0.0
    %3094 = vmatprep.subr.mxu0 0.0
    %3095 = vmatpush1.msra.mxu0 0.0
    %3096 = vmatprep.subr.mxu0 0.0
    %3097 = vmatpush1.msra.mxu0 0.0
    %3098 = vmatprep.subr.mxu0 0.0
    %3099 = vmatpush1.msra.mxu0 0.0
    %3100 = vmatprep.subr.mxu0 0.0
    %3101 = vmatpush1.msra.mxu0 0.0
    %3102 = vmatprep.subr.mxu0 0.0
    %3103 = vmatpush1.msra.mxu0 0.0
    %3104 = vmatprep.subr.mxu0 0.0
    %3105 = vmatpush1.msra.mxu0 0.0
    %3106 = vmatprep.subr.mxu0 0.0
    %3107 = vmatpush1.msra.mxu0 0.0
    %3108 = vmatprep.mubr.f32.mxu0 0.0
    %3109 = vmatmul.mubr.f32.gmra.mrb[0].mxu0 %v2899
    %v3110 = vpop.f32.mrb[0].mxu0
    %v3111 = vadd.f32 %v2967, %v3110
    %v3112 = vpop.f32.mrb[0].mxu0
    %v3113 = vadd.f32 %v2968, %v3112
    %3114 = vdwg.mxu0
    %v3115 = vxor.u32 %v3040, 2147483648
    %v3116 = vmul.f32 %v3115, 1.442695
    %v3117 = vpow.pop %v3116
    %v3118 = vadd.f32 %v3117, 1.0
    %v3119 = vrcp.pop %v3118
    %v3120 = vmul.f32 1.0, %v3119
    %v3121 = vxor.u32 %v3042, 2147483648
    %v3122 = vmul.f32 %v3121, 1.442695
    %v3123 = vpow.pop %v3122
    %v3124 = vadd.f32 %v3123, 1.0
    %v3125 = vrcp.pop %v3124
    %v3126 = vmul.f32 1.0, %v3125
    %v3127 = vtanh.pop %v3111
    %v3128 = vxor.u32 %v3113, 2147483648
    %v3129 = vmul.f32 %v3128, 1.442695
    %v3130 = vpow.pop %v3129
    %v3131 = vadd.f32 %v3130, 1.0
    %v3132 = vrcp.pop %v3131
    %v3133 = vmul.f32 1.0, %v3132
    %v3134 = vmul.f32 %v3126, %v2897
    %v3135 = vmul.f32 %v3120, %v3127
    %v3136 = vadd.f32 %v3134, %v3135
    %v3137 = vtanh.pop %v3136
    %v3138 = vmul.f32 %v3133, %v3137
    %3139 = vst [vmem:[#allocation3 + $0x2] sm:$0x1] %v3138
    %v3140 = vld [vmem:[#allocation12] sm:$0xff]
    %v3141 = vld [vmem:[#allocation12 + $0x8] sm:$0xff]
    %v3142 = vld [vmem:[#allocation12 + $0x10] sm:$0xff]
    %v3143 = vld [vmem:[#allocation12 + $0x18] sm:$0xff]
    %v3144 = vld [vmem:[#allocation12 + $0x20] sm:$0xff]
    %v3145 = vld [vmem:[#allocation12 + $0x28] sm:$0xff]
    %v3146 = vld [vmem:[#allocation12 + $0x30] sm:$0xff]
    %v3147 = vld [vmem:[#allocation12 + $0x38] sm:$0xff]
    %v3148 = vld [vmem:[#allocation12 + $0x40] sm:$0xff]
    %v3149 = vld [vmem:[#allocation12 + $0x48] sm:$0xff]
    %v3150 = vld [vmem:[#allocation12 + $0x50] sm:$0xff]
    %v3151 = vld [vmem:[#allocation12 + $0x58] sm:$0xff]
    %v3152 = vld [vmem:[#allocation12 + $0x60] sm:$0xff]
    %v3153 = vld [vmem:[#allocation12 + $0x68] sm:$0xff]
    %v3154 = vld [vmem:[#allocation12 + $0x70] sm:$0xff]
    %v3155 = vld [vmem:[#allocation12 + $0x78] sm:$0xff]
    %v3156 = vld [vmem:[#allocation12 + $0x80] sm:$0xff]
    %v3157 = vld [vmem:[#allocation12 + $0x88] sm:$0xff]
    %v3158 = vld [vmem:[#allocation12 + $0x90] sm:$0xff]
    %v3159 = vld [vmem:[#allocation12 + $0x98] sm:$0xff]
    %v3160 = vld [vmem:[#allocation12 + $0xa0] sm:$0xff]
    %v3161 = vld [vmem:[#allocation12 + $0xa8] sm:$0xff]
    %v3162 = vld [vmem:[#allocation12 + $0xb0] sm:$0xff]
    %v3163 = vld [vmem:[#allocation12 + $0xb8] sm:$0xff]
    %v3164 = vld [vmem:[#allocation12 + $0xc0] sm:$0xff]
    %v3165 = vld [vmem:[#allocation12 + $0xc8] sm:$0xff]
    %v3166 = vld [vmem:[#allocation12 + $0xd0] sm:$0xff]
    %v3167 = vld [vmem:[#allocation12 + $0xd8] sm:$0xff]
    %v3168 = vld [vmem:[#allocation12 + $0xe0] sm:$0xff]
    %v3169 = vld [vmem:[#allocation12 + $0xe8] sm:$0xff]
    %v3170 = vld [vmem:[#allocation12 + $0xf0] sm:$0xff]
    %v3171 = vld [vmem:[#allocation12 + $0xf8] sm:$0xff]
    %v3172 = vld [vmem:[#allocation12 + $0x100] sm:$0xff]
    %v3173 = vld [vmem:[#allocation12 + $0x108] sm:$0xff]
    %v3174 = vld [vmem:[#allocation12 + $0x110] sm:$0xff]
    %v3175 = vld [vmem:[#allocation12 + $0x118] sm:$0xff]
    %v3176 = vld [vmem:[#allocation12 + $0x120] sm:$0xff]
    %v3177 = vld [vmem:[#allocation12 + $0x128] sm:$0xff]
    %v3178 = vld [vmem:[#allocation12 + $0x130] sm:$0xff]
    %v3179 = vld [vmem:[#allocation12 + $0x138] sm:$0xff]
    %v3180 = vld [vmem:[#allocation12 + $0x140] sm:$0xff]
    %v3181 = vld [vmem:[#allocation12 + $0x148] sm:$0xff]
    %v3182 = vld [vmem:[#allocation12 + $0x150] sm:$0xff]
    %v3183 = vld [vmem:[#allocation12 + $0x158] sm:$0xff]
    %v3184 = vld [vmem:[#allocation12 + $0x160] sm:$0xff]
    %v3185 = vld [vmem:[#allocation12 + $0x168] sm:$0xff]
    %v3186 = vld [vmem:[#allocation12 + $0x170] sm:$0xff]
    %v3187 = vld [vmem:[#allocation12 + $0x178] sm:$0xff]
    %v3188 = vld [vmem:[#allocation12 + $0x180] sm:$0xff]
    %v3189 = vld [vmem:[#allocation12 + $0x188] sm:$0xff]
    %v3190 = vld [vmem:[#allocation12 + $0x190] sm:$0xff]
    %v3191 = vld [vmem:[#allocation12 + $0x198] sm:$0xff]
    %v3192 = vld [vmem:[#allocation12 + $0x1a0] sm:$0xff]
    %v3193 = vld [vmem:[#allocation12 + $0x1a8] sm:$0xff]
    %v3194 = vld [vmem:[#allocation12 + $0x1b0] sm:$0xff]
    %v3195 = vld [vmem:[#allocation12 + $0x1b8] sm:$0xff]
    %v3196 = vld [vmem:[#allocation12 + $0x1c0] sm:$0xff]
    %v3197 = vld [vmem:[#allocation12 + $0x1c8] sm:$0xff]
    %v3198 = vld [vmem:[#allocation12 + $0x1d0] sm:$0xff]
    %v3199 = vld [vmem:[#allocation12 + $0x1d8] sm:$0xff]
    %v3200 = vld [vmem:[#allocation12 + $0x1e0] sm:$0xff]
    %v3201 = vld [vmem:[#allocation12 + $0x1e8] sm:$0xff]
    %v3202 = vld [vmem:[#allocation12 + $0x1f0] sm:$0xff]
    %v3203 = vld [vmem:[#allocation12 + $0x1f8] sm:$0xff]
    %v3204 = vrot.slane %v2352, 3
    %v3205 = vrot.slane %v2354, 3
    %v3206 = vrot.slane %v2423, 3
    %v3207 = vrot.slane %v2425, 3
    %3212 = vmatprep.subr.mxu0 %v3141
    %3213 = vmatpush1.msra.mxu0 %v3140
    %3214 = vmatprep.subr.mxu0 %v3145
    %3215 = vmatpush1.msra.mxu0 %v3144
    %3216 = vmatprep.subr.mxu0 %v3149
    %3217 = vmatpush1.msra.mxu0 %v3148
    %3218 = vmatprep.subr.mxu0 %v3153
    %3219 = vmatpush1.msra.mxu0 %v3152
    %3220 = vmatprep.subr.mxu0 %v3157
    %3221 = vmatpush1.msra.mxu0 %v3156
    %3222 = vmatprep.subr.mxu0 %v3161
    %3223 = vmatpush1.msra.mxu0 %v3160
    %3224 = vmatprep.subr.mxu0 %v3165
    %3225 = vmatpush1.msra.mxu0 %v3164
    %3226 = vmatprep.subr.mxu0 %v3169
    %3227 = vmatpush1.msra.mxu0 %v3168
    %3228 = vmatprep.subr.mxu0 %v3173
    %3229 = vmatpush1.msra.mxu0 %v3172
    %3230 = vmatprep.subr.mxu0 %v3177
    %3231 = vmatpush1.msra.mxu0 %v3176
    %3232 = vmatprep.subr.mxu0 %v3181
    %3233 = vmatpush1.msra.mxu0 %v3180
    %3234 = vmatprep.subr.mxu0 %v3185
    %3235 = vmatpush1.msra.mxu0 %v3184
    %3236 = vmatprep.subr.mxu0 %v3189
    %3237 = vmatpush1.msra.mxu0 %v3188
    %3238 = vmatprep.subr.mxu0 %v3193
    %3239 = vmatpush1.msra.mxu0 %v3192
    %3240 = vmatprep.subr.mxu0 %v3197
    %3241 = vmatpush1.msra.mxu0 %v3196
    %3242 = vmatprep.subr.mxu0 %v3201
    %3243 = vmatpush1.msra.mxu0 %v3200
    %3244 = vmatprep.subr.mxu0 0.0
    %3245 = vmatpush1.msra.mxu0 0.0
    %3246 = vmatprep.subr.mxu0 0.0
    %3247 = vmatpush1.msra.mxu0 0.0
    %3248 = vmatprep.subr.mxu0 0.0
    %3249 = vmatpush1.msra.mxu0 0.0
    %3250 = vmatprep.subr.mxu0 0.0
    %3251 = vmatpush1.msra.mxu0 0.0
    %3252 = vmatprep.subr.mxu0 0.0
    %3253 = vmatpush1.msra.mxu0 0.0
    %3254 = vmatprep.subr.mxu0 0.0
    %3255 = vmatpush1.msra.mxu0 0.0
    %3256 = vmatprep.subr.mxu0 0.0
    %3257 = vmatpush1.msra.mxu0 0.0
    %3258 = vmatprep.subr.mxu0 0.0
    %3259 = vmatpush1.msra.mxu0 0.0
    %3260 = vmatprep.subr.mxu0 0.0
    %3261 = vmatpush1.msra.mxu0 0.0
    %3262 = vmatprep.subr.mxu0 0.0
    %3263 = vmatpush1.msra.mxu0 0.0
    %3264 = vmatprep.subr.mxu0 0.0
    %3265 = vmatpush1.msra.mxu0 0.0
    %3266 = vmatprep.subr.mxu0 0.0
    %3267 = vmatpush1.msra.mxu0 0.0
    %3268 = vmatprep.subr.mxu0 0.0
    %3269 = vmatpush1.msra.mxu0 0.0
    %3270 = vmatprep.subr.mxu0 0.0
    %3271 = vmatpush1.msra.mxu0 0.0
    %3272 = vmatprep.subr.mxu0 0.0
    %3273 = vmatpush1.msra.mxu0 0.0
    %3274 = vmatprep.subr.mxu0 0.0
    %3275 = vmatpush1.msra.mxu0 0.0
    %3276 = vmatprep.mubr.f32.mxu0 0.0
    %3277 = vmatmul.mubr.f32.gmra.mrb[0].mxu0 %v3138
    %v3278 = vpop.f32.mrb[0].mxu0
    %v3279 = vadd.f32 %v3204, %v3278
    %v3280 = vpop.f32.mrb[0].mxu0
    %v3281 = vadd.f32 %v3205, %v3280
    %3282 = vdwg.mxu0
    %3283 = vmatprep.subr.mxu0 %v3143
    %3284 = vmatpush1.msra.mxu0 %v3142
    %3285 = vmatprep.subr.mxu0 %v3147
    %3286 = vmatpush1.msra.mxu0 %v3146
    %3287 = vmatprep.subr.mxu0 %v3151
    %3288 = vmatpush1.msra.mxu0 %v3150
    %3289 = vmatprep.subr.mxu0 %v3155
    %3290 = vmatpush1.msra.mxu0 %v3154
    %3291 = vmatprep.subr.mxu0 %v3159
    %3292 = vmatpush1.msra.mxu0 %v3158
    %3293 = vmatprep.subr.mxu0 %v3163
    %3294 = vmatpush1.msra.mxu0 %v3162
    %3295 = vmatprep.subr.mxu0 %v3167
    %3296 = vmatpush1.msra.mxu0 %v3166
    %3297 = vmatprep.subr.mxu0 %v3171
    %3298 = vmatpush1.msra.mxu0 %v3170
    %3299 = vmatprep.subr.mxu0 %v3175
    %3300 = vmatpush1.msra.mxu0 %v3174
    %3301 = vmatprep.subr.mxu0 %v3179
    %3302 = vmatpush1.msra.mxu0 %v3178
    %3303 = vmatprep.subr.mxu0 %v3183
    %3304 = vmatpush1.msra.mxu0 %v3182
    %3305 = vmatprep.subr.mxu0 %v3187
    %3306 = vmatpush1.msra.mxu0 %v3186
    %3307 = vmatprep.subr.mxu0 %v3191
    %3308 = vmatpush1.msra.mxu0 %v3190
    %3309 = vmatprep.subr.mxu0 %v3195
    %3310 = vmatpush1.msra.mxu0 %v3194
    %3311 = vmatprep.subr.mxu0 %v3199
    %3312 = vmatpush1.msra.mxu0 %v3198
    %3313 = vmatprep.subr.mxu0 %v3203
    %3314 = vmatpush1.msra.mxu0 %v3202
    %3315 = vmatprep.subr.mxu0 0.0
    %3316 = vmatpush1.msra.mxu0 0.0
    %3317 = vmatprep.subr.mxu0 0.0
    %3318 = vmatpush1.msra.mxu0 0.0
    %3319 = vmatprep.subr.mxu0 0.0
    %3320 = vmatpush1.msra.mxu0 0.0
    %3321 = vmatprep.subr.mxu0 0.0
    %3322 = vmatpush1.msra.mxu0 0.0
    %3323 = vmatprep.subr.mxu0 0.0
    %3324 = vmatpush1.msra.mxu0 0.0
    %3325 = vmatprep.subr.mxu0 0.0
    %3326 = vmatpush1.msra.mxu0 0.0
    %3327 = vmatprep.subr.mxu0 0.0
    %3328 = vmatpush1.msra.mxu0 0.0
    %3329 = vmatprep.subr.mxu0 0.0
    %3330 = vmatpush1.msra.mxu0 0.0
    %3331 = vmatprep.subr.mxu0 0.0
    %3332 = vmatpush1.msra.mxu0 0.0
    %3333 = vmatprep.subr.mxu0 0.0
    %3334 = vmatpush1.msra.mxu0 0.0
    %3335 = vmatprep.subr.mxu0 0.0
    %3336 = vmatpush1.msra.mxu0 0.0
    %3337 = vmatprep.subr.mxu0 0.0
    %3338 = vmatpush1.msra.mxu0 0.0
    %3339 = vmatprep.subr.mxu0 0.0
    %3340 = vmatpush1.msra.mxu0 0.0
    %3341 = vmatprep.subr.mxu0 0.0
    %3342 = vmatpush1.msra.mxu0 0.0
    %3343 = vmatprep.subr.mxu0 0.0
    %3344 = vmatpush1.msra.mxu0 0.0
    %3345 = vmatprep.subr.mxu0 0.0
    %3346 = vmatpush1.msra.mxu0 0.0
    %3347 = vmatprep.mubr.f32.mxu0 0.0
    %3348 = vmatmul.mubr.f32.gmra.mrb[0].mxu0 %v3138
    %v3349 = vpop.f32.mrb[0].mxu0
    %v3350 = vadd.f32 %v3206, %v3349
    %v3351 = vpop.f32.mrb[0].mxu0
    %v3352 = vadd.f32 %v3207, %v3351
    %3353 = vdwg.mxu0
    %v3354 = vxor.u32 %v3279, 2147483648
    %v3355 = vmul.f32 %v3354, 1.442695
    %v3356 = vpow.pop %v3355
    %v3357 = vadd.f32 %v3356, 1.0
    %v3358 = vrcp.pop %v3357
    %v3359 = vmul.f32 1.0, %v3358
    %v3360 = vxor.u32 %v3281, 2147483648
    %v3361 = vmul.f32 %v3360, 1.442695
    %v3362 = vpow.pop %v3361
    %v3363 = vadd.f32 %v3362, 1.0
    %v3364 = vrcp.pop %v3363
    %v3365 = vmul.f32 1.0, %v3364
    %v3366 = vtanh.pop %v3350
    %v3367 = vxor.u32 %v3352, 2147483648
    %v3368 = vmul.f32 %v3367, 1.442695
    %v3369 = vpow.pop %v3368
    %v3370 = vadd.f32 %v3369, 1.0
    %v3371 = vrcp.pop %v3370
    %v3372 = vmul.f32 1.0, %v3371
    %v3373 = vmul.f32 %v3365, %v3136
    %v3374 = vmul.f32 %v3359, %v3366
    %v3375 = vadd.f32 %v3373, %v3374
    %v3376 = vtanh.pop %v3375
    %v3377 = vmul.f32 %v3372, %v3376
    %3378 = vst [vmem:[#allocation3 + $0x3] sm:$0x1] %v3377
    %v3379 = vld [vmem:[#allocation12] sm:$0xff]
    %v3380 = vld [vmem:[#allocation12 + $0x8] sm:$0xff]
    %v3381 = vld [vmem:[#allocation12 + $0x10] sm:$0xff]
    %v3382 = vld [vmem:[#allocation12 + $0x18] sm:$0xff]
    %v3383 = vld [vmem:[#allocation12 + $0x20] sm:$0xff]
    %v3384 = vld [vmem:[#allocation12 + $0x28] sm:$0xff]
    %v3385 = vld [vmem:[#allocation12 + $0x30] sm:$0xff]
    %v3386 = vld [vmem:[#allocation12 + $0x38] sm:$0xff]
    %v3387 = vld [vmem:[#allocation12 + $0x40] sm:$0xff]
    %v3388 = vld [vmem:[#allocation12 + $0x48] sm:$0xff]
    %v3389 = vld [vmem:[#allocation12 + $0x50] sm:$0xff]
    %v3390 = vld [vmem:[#allocation12 + $0x58] sm:$0xff]
    %v3391 = vld [vmem:[#allocation12 + $0x60] sm:$0xff]
    %v3392 = vld [vmem:[#allocation12 + $0x68] sm:$0xff]
    %v3393 = vld [vmem:[#allocation12 + $0x70] sm:$0xff]
    %v3394 = vld [vmem:[#allocation12 + $0x78] sm:$0xff]
    %v3395 = vld [vmem:[#allocation12 + $0x80] sm:$0xff]
    %v3396 = vld [vmem:[#allocation12 + $0x88] sm:$0xff]
    %v3397 = vld [vmem:[#allocation12 + $0x90] sm:$0xff]
    %v3398 = vld [vmem:[#allocation12 + $0x98] sm:$0xff]
    %v3399 = vld [vmem:[#allocation12 + $0xa0] sm:$0xff]
    %v3400 = vld [vmem:[#allocation12 + $0xa8] sm:$0xff]
    %v3401 = vld [vmem:[#allocation12 + $0xb0] sm:$0xff]
    %v3402 = vld [vmem:[#allocation12 + $0xb8] sm:$0xff]
    %v3403 = vld [vmem:[#allocation12 + $0xc0] sm:$0xff]
    %v3404 = vld [vmem:[#allocation12 + $0xc8] sm:$0xff]
    %v3405 = vld [vmem:[#allocation12 + $0xd0] sm:$0xff]
    %v3406 = vld [vmem:[#allocation12 + $0xd8] sm:$0xff]
    %v3407 = vld [vmem:[#allocation12 + $0xe0] sm:$0xff]
    %v3408 = vld [vmem:[#allocation12 + $0xe8] sm:$0xff]
    %v3409 = vld [vmem:[#allocation12 + $0xf0] sm:$0xff]
    %v3410 = vld [vmem:[#allocation12 + $0xf8] sm:$0xff]
    %v3411 = vld [vmem:[#allocation12 + $0x100] sm:$0xff]
    %v3412 = vld [vmem:[#allocation12 + $0x108] sm:$0xff]
    %v3413 = vld [vmem:[#allocation12 + $0x110] sm:$0xff]
    %v3414 = vld [vmem:[#allocation12 + $0x118] sm:$0xff]
    %v3415 = vld [vmem:[#allocation12 + $0x120] sm:$0xff]
    %v3416 = vld [vmem:[#allocation12 + $0x128] sm:$0xff]
    %v3417 = vld [vmem:[#allocation12 + $0x130] sm:$0xff]
    %v3418 = vld [vmem:[#allocation12 + $0x138] sm:$0xff]
    %v3419 = vld [vmem:[#allocation12 + $0x140] sm:$0xff]
    %v3420 = vld [vmem:[#allocation12 + $0x148] sm:$0xff]
    %v3421 = vld [vmem:[#allocation12 + $0x150] sm:$0xff]
    %v3422 = vld [vmem:[#allocation12 + $0x158] sm:$0xff]
    %v3423 = vld [vmem:[#allocation12 + $0x160] sm:$0xff]
    %v3424 = vld [vmem:[#allocation12 + $0x168] sm:$0xff]
    %v3425 = vld [vmem:[#allocation12 + $0x170] sm:$0xff]
    %v3426 = vld [vmem:[#allocation12 + $0x178] sm:$0xff]
    %v3427 = vld [vmem:[#allocation12 + $0x180] sm:$0xff]
    %v3428 = vld [vmem:[#allocation12 + $0x188] sm:$0xff]
    %v3429 = vld [vmem:[#allocation12 + $0x190] sm:$0xff]
    %v3430 = vld [vmem:[#allocation12 + $0x198] sm:$0xff]
    %v3431 = vld [vmem:[#allocation12 + $0x1a0] sm:$0xff]
    %v3432 = vld [vmem:[#allocation12 + $0x1a8] sm:$0xff]
    %v3433 = vld [vmem:[#allocation12 + $0x1b0] sm:$0xff]
    %v3434 = vld [vmem:[#allocation12 + $0x1b8] sm:$0xff]
    %v3435 = vld [vmem:[#allocation12 + $0x1c0] sm:$0xff]
    %v3436 = vld [vmem:[#allocation12 + $0x1c8] sm:$0xff]
    %v3437 = vld [vmem:[#allocation12 + $0x1d0] sm:$0xff]
    %v3438 = vld [vmem:[#allocation12 + $0x1d8] sm:$0xff]
    %v3439 = vld [vmem:[#allocation12 + $0x1e0] sm:$0xff]
    %v3440 = vld [vmem:[#allocation12 + $0x1e8] sm:$0xff]
    %v3441 = vld [vmem:[#allocation12 + $0x1f0] sm:$0xff]
    %v3442 = vld [vmem:[#allocation12 + $0x1f8] sm:$0xff]
    %v3443 = vrot.slane %v2352, 4
    %v3444 = vrot.slane %v2354, 4
    %v3445 = vrot.slane %v2423, 4
    %v3446 = vrot.slane %v2425, 4
    %3451 = vmatprep.subr.mxu0 %v3380
    %3452 = vmatpush1.msra.mxu0 %v3379
    %3453 = vmatprep.subr.mxu0 %v3384
    %3454 = vmatpush1.msra.mxu0 %v3383
    %3455 = vmatprep.subr.mxu0 %v3388
    %3456 = vmatpush1.msra.mxu0 %v3387
    %3457 = vmatprep.subr.mxu0 %v3392
    %3458 = vmatpush1.msra.mxu0 %v3391
    %3459 = vmatprep.subr.mxu0 %v3396
    %3460 = vmatpush1.msra.mxu0 %v3395
    %3461 = vmatprep.subr.mxu0 %v3400
    %3462 = vmatpush1.msra.mxu0 %v3399
    %3463 = vmatprep.subr.mxu0 %v3404
    %3464 = vmatpush1.msra.mxu0 %v3403
    %3465 = vmatprep.subr.mxu0 %v3408
    %3466 = vmatpush1.msra.mxu0 %v3407
    %3467 = vmatprep.subr.mxu0 %v3412
    %3468 = vmatpush1.msra.mxu0 %v3411
    %3469 = vmatprep.subr.mxu0 %v3416
    %3470 = vmatpush1.msra.mxu0 %v3415
    %3471 = vmatprep.subr.mxu0 %v3420
    %3472 = vmatpush1.msra.mxu0 %v3419
    %3473 = vmatprep.subr.mxu0 %v3424
    %3474 = vmatpush1.msra.mxu0 %v3423
    %3475 = vmatprep.subr.mxu0 %v3428
    %3476 = vmatpush1.msra.mxu0 %v3427
    %3477 = vmatprep.subr.mxu0 %v3432
    %3478 = vmatpush1.msra.mxu0 %v3431
    %3479 = vmatprep.subr.mxu0 %v3436
    %3480 = vmatpush1.msra.mxu0 %v3435
    %3481 = vmatprep.subr.mxu0 %v3440
    %3482 = vmatpush1.msra.mxu0 %v3439
    %3483 = vmatprep.subr.mxu0 0.0
    %3484 = vmatpush1.msra.mxu0 0.0
    %3485 = vmatprep.subr.mxu0 0.0
    %3486 = vmatpush1.msra.mxu0 0.0
    %3487 = vmatprep.subr.mxu0 0.0
    %3488 = vmatpush1.msra.mxu0 0.0
    %3489 = vmatprep.subr.mxu0 0.0
    %3490 = vmatpush1.msra.mxu0 0.0
    %3491 = vmatprep.subr.mxu0 0.0
    %3492 = vmatpush1.msra.mxu0 0.0
    %3493 = vmatprep.subr.mxu0 0.0
    %3494 = vmatpush1.msra.mxu0 0.0
    %3495 = vmatprep.subr.mxu0 0.0
    %3496 = vmatpush1.msra.mxu0 0.0
    %3497 = vmatprep.subr.mxu0 0.0
    %3498 = vmatpush1.msra.mxu0 0.0
    %3499 = vmatprep.subr.mxu0 0.0
    %3500 = vmatpush1.msra.mxu0 0.0
    %3501 = vmatprep.subr.mxu0 0.0
    %3502 = vmatpush1.msra.mxu0 0.0
    %3503 = vmatprep.subr.mxu0 0.0
    %3504 = vmatpush1.msra.mxu0 0.0
    %3505 = vmatprep.subr.mxu0 0.0
    %3506 = vmatpush1.msra.mxu0 0.0
    %3507 = vmatprep.subr.mxu0 0.0
    %3508 = vmatpush1.msra.mxu0 0.0
    %3509 = vmatprep.subr.mxu0 0.0
    %3510 = vmatpush1.msra.mxu0 0.0
    %3511 = vmatprep.subr.mxu0 0.0
    %3512 = vmatpush1.msra.mxu0 0.0
    %3513 = vmatprep.subr.mxu0 0.0
    %3514 = vmatpush1.msra.mxu0 0.0
    %3515 = vmatprep.mubr.f32.mxu0 0.0
    %3516 = vmatmul.mubr.f32.gmra.mrb[0].mxu0 %v3377
    %v3517 = vpop.f32.mrb[0].mxu0
    %v3518 = vadd.f32 %v3443, %v3517
    %v3519 = vpop.f32.mrb[0].mxu0
    %v3520 = vadd.f32 %v3444, %v3519
    %3521 = vdwg.mxu0
    %3522 = vmatprep.subr.mxu0 %v3382
    %3523 = vmatpush1.msra.mxu0 %v3381
    %3524 = vmatprep.subr.mxu0 %v3386
    %3525 = vmatpush1.msra.mxu0 %v3385
    %3526 = vmatprep.subr.mxu0 %v3390
    %3527 = vmatpush1.msra.mxu0 %v3389
    %3528 = vmatprep.subr.mxu0 %v3394
    %3529 = vmatpush1.msra.mxu0 %v3393
    %3530 = vmatprep.subr.mxu0 %v3398
    %3531 = vmatpush1.msra.mxu0 %v3397
    %3532 = vmatprep.subr.mxu0 %v3402
    %3533 = vmatpush1.msra.mxu0 %v3401
    %3534 = vmatprep.subr.mxu0 %v3406
    %3535 = vmatpush1.msra.mxu0 %v3405
    %3536 = vmatprep.subr.mxu0 %v3410
    %3537 = vmatpush1.msra.mxu0 %v3409
    %3538 = vmatprep.subr.mxu0 %v3414
    %3539 = vmatpush1.msra.mxu0 %v3413
    %3540 = vmatprep.subr.mxu0 %v3418
    %3541 = vmatpush1.msra.mxu0 %v3417
    %3542 = vmatprep.subr.mxu0 %v3422
    %3543 = vmatpush1.msra.mxu0 %v3421
    %3544 = vmatprep.subr.mxu0 %v3426
    %3545 = vmatpush1.msra.mxu0 %v3425
    %3546 = vmatprep.subr.mxu0 %v3430
    %3547 = vmatpush1.msra.mxu0 %v3429
    %3548 = vmatprep.subr.mxu0 %v3434
    %3549 = vmatpush1.msra.mxu0 %v3433
    %3550 = vmatprep.subr.mxu0 %v3438
    %3551 = vmatpush1.msra.mxu0 %v3437
    %3552 = vmatprep.subr.mxu0 %v3442
    %3553 = vmatpush1.msra.mxu0 %v3441
    %3554 = vmatprep.subr.mxu0 0.0
    %3555 = vmatpush1.msra.mxu0 0.0
    %3556 = vmatprep.subr.mxu0 0.0
    %3557 = vmatpush1.msra.mxu0 0.0
    %3558 = vmatprep.subr.mxu0 0.0
    %3559 = vmatpush1.msra.mxu0 0.0
    %3560 = vmatprep.subr.mxu0 0.0
    %3561 = vmatpush1.msra.mxu0 0.0
    %3562 = vmatprep.subr.mxu0 0.0
    %3563 = vmatpush1.msra.mxu0 0.0
    %3564 = vmatprep.subr.mxu0 0.0
    %3565 = vmatpush1.msra.mxu0 0.0
    %3566 = vmatprep.subr.mxu0 0.0
    %3567 = vmatpush1.msra.mxu0 0.0
    %3568 = vmatprep.subr.mxu0 0.0
    %3569 = vmatpush1.msra.mxu0 0.0
    %3570 = vmatprep.subr.mxu0 0.0
    %3571 = vmatpush1.msra.mxu0 0.0
    %3572 = vmatprep.subr.mxu0 0.0
    %3573 = vmatpush1.msra.mxu0 0.0
    %3574 = vmatprep.subr.mxu0 0.0
    %3575 = vmatpush1.msra.mxu0 0.0
    %3576 = vmatprep.subr.mxu0 0.0
    %3577 = vmatpush1.msra.mxu0 0.0
    %3578 = vmatprep.subr.mxu0 0.0
    %3579 = vmatpush1.msra.mxu0 0.0
    %3580 = vmatprep.subr.mxu0 0.0
    %3581 = vmatpush1.msra.mxu0 0.0
    %3582 = vmatprep.subr.mxu0 0.0
    %3583 = vmatpush1.msra.mxu0 0.0
    %3584 = vmatprep.subr.mxu0 0.0
    %3585 = vmatpush1.msra.mxu0 0.0
    %3586 = vmatprep.mubr.f32.mxu0 0.0
    %3587 = vmatmul.mubr.f32.gmra.mrb[0].mxu0 %v3377
    %v3588 = vpop.f32.mrb[0].mxu0
    %v3589 = vadd.f32 %v3445, %v3588
    %v3590 = vpop.f32.mrb[0].mxu0
    %v3591 = vadd.f32 %v3446, %v3590
    %3592 = vdwg.mxu0
    %v3593 = vxor.u32 %v3518, 2147483648
    %v3594 = vmul.f32 %v3593, 1.442695
    %v3595 = vpow.pop %v3594
    %v3596 = vadd.f32 %v3595, 1.0
    %v3597 = vrcp.pop %v3596
    %v3598 = vmul.f32 1.0, %v3597
    %v3599 = vxor.u32 %v3520, 2147483648
    %v3600 = vmul.f32 %v3599, 1.442695
    %v3601 = vpow.pop %v3600
    %v3602 = vadd.f32 %v3601, 1.0
    %v3603 = vrcp.pop %v3602
    %v3604 = vmul.f32 1.0, %v3603
    %v3605 = vtanh.pop %v3589
    %v3606 = vxor.u32 %v3591, 2147483648
    %v3607 = vmul.f32 %v3606, 1.442695
    %v3608 = vpow.pop %v3607
    %v3609 = vadd.f32 %v3608, 1.0
    %v3610 = vrcp.pop %v3609
    %v3611 = vmul.f32 1.0, %v3610
    %v3612 = vmul.f32 %v3604, %v3375
    %v3613 = vmul.f32 %v3598, %v3605
    %v3614 = vadd.f32 %v3612, %v3613
    %v3615 = vtanh.pop %v3614
    %v3616 = vmul.f32 %v3611, %v3615
    %3617 = vst [vmem:[#allocation3 + $0x4] sm:$0x1] %v3616
    %v3618 = vld [vmem:[#allocation12] sm:$0xff]
    %v3619 = vld [vmem:[#allocation12 + $0x8] sm:$0xff]
    %v3620 = vld [vmem:[#allocation12 + $0x10] sm:$0xff]
    %v3621 = vld [vmem:[#allocation12 + $0x18] sm:$0xff]
    %v3622 = vld [vmem:[#allocation12 + $0x20] sm:$0xff]
    %v3623 = vld [vmem:[#allocation12 + $0x28] sm:$0xff]
    %v3624 = vld [vmem:[#allocation12 + $0x30] sm:$0xff]
    %v3625 = vld [vmem:[#allocation12 + $0x38] sm:$0xff]
    %v3626 = vld [vmem:[#allocation12 + $0x40] sm:$0xff]
    %v3627 = vld [vmem:[#allocation12 + $0x48] sm:$0xff]
    %v3628 = vld [vmem:[#allocation12 + $0x50] sm:$0xff]
    %v3629 = vld [vmem:[#allocation12 + $0x58] sm:$0xff]
    %v3630 = vld [vmem:[#allocation12 + $0x60] sm:$0xff]
    %v3631 = vld [vmem:[#allocation12 + $0x68] sm:$0xff]
    %v3632 = vld [vmem:[#allocation12 + $0x70] sm:$0xff]
    %v3633 = vld [vmem:[#allocation12 + $0x78] sm:$0xff]
    %v3634 = vld [vmem:[#allocation12 + $0x80] sm:$0xff]
    %v3635 = vld [vmem:[#allocation12 + $0x88] sm:$0xff]
    %v3636 = vld [vmem:[#allocation12 + $0x90] sm:$0xff]
    %v3637 = vld [vmem:[#allocation12 + $0x98] sm:$0xff]
    %v3638 = vld [vmem:[#allocation12 + $0xa0] sm:$0xff]
    %v3639 = vld [vmem:[#allocation12 + $0xa8] sm:$0xff]
    %v3640 = vld [vmem:[#allocation12 + $0xb0] sm:$0xff]
    %v3641 = vld [vmem:[#allocation12 + $0xb8] sm:$0xff]
    %v3642 = vld [vmem:[#allocation12 + $0xc0] sm:$0xff]
    %v3643 = vld [vmem:[#allocation12 + $0xc8] sm:$0xff]
    %v3644 = vld [vmem:[#allocation12 + $0xd0] sm:$0xff]
    %v3645 = vld [vmem:[#allocation12 + $0xd8] sm:$0xff]
    %v3646 = vld [vmem:[#allocation12 + $0xe0] sm:$0xff]
    %v3647 = vld [vmem:[#allocation12 + $0xe8] sm:$0xff]
    %v3648 = vld [vmem:[#allocation12 + $0xf0] sm:$0xff]
    %v3649 = vld [vmem:[#allocation12 + $0xf8] sm:$0xff]
    %v3650 = vld [vmem:[#allocation12 + $0x100] sm:$0xff]
    %v3651 = vld [vmem:[#allocation12 + $0x108] sm:$0xff]
    %v3652 = vld [vmem:[#allocation12 + $0x110] sm:$0xff]
    %v3653 = vld [vmem:[#allocation12 + $0x118] sm:$0xff]
    %v3654 = vld [vmem:[#allocation12 + $0x120] sm:$0xff]
    %v3655 = vld [vmem:[#allocation12 + $0x128] sm:$0xff]
    %v3656 = vld [vmem:[#allocation12 + $0x130] sm:$0xff]
    %v3657 = vld [vmem:[#allocation12 + $0x138] sm:$0xff]
    %v3658 = vld [vmem:[#allocation12 + $0x140] sm:$0xff]
    %v3659 = vld [vmem:[#allocation12 + $0x148] sm:$0xff]
    %v3660 = vld [vmem:[#allocation12 + $0x150] sm:$0xff]
    %v3661 = vld [vmem:[#allocation12 + $0x158] sm:$0xff]
    %v3662 = vld [vmem:[#allocation12 + $0x160] sm:$0xff]
    %v3663 = vld [vmem:[#allocation12 + $0x168] sm:$0xff]
    %v3664 = vld [vmem:[#allocation12 + $0x170] sm:$0xff]
    %v3665 = vld [vmem:[#allocation12 + $0x178] sm:$0xff]
    %v3666 = vld [vmem:[#allocation12 + $0x180] sm:$0xff]
    %v3667 = vld [vmem:[#allocation12 + $0x188] sm:$0xff]
    %v3668 = vld [vmem:[#allocation12 + $0x190] sm:$0xff]
    %v3669 = vld [vmem:[#allocation12 + $0x198] sm:$0xff]
    %v3670 = vld [vmem:[#allocation12 + $0x1a0] sm:$0xff]
    %v3671 = vld [vmem:[#allocation12 + $0x1a8] sm:$0xff]
    %v3672 = vld [vmem:[#allocation12 + $0x1b0] sm:$0xff]
    %v3673 = vld [vmem:[#allocation12 + $0x1b8] sm:$0xff]
    %v3674 = vld [vmem:[#allocation12 + $0x1c0] sm:$0xff]
    %v3675 = vld [vmem:[#allocation12 + $0x1c8] sm:$0xff]
    %v3676 = vld [vmem:[#allocation12 + $0x1d0] sm:$0xff]
    %v3677 = vld [vmem:[#allocation12 + $0x1d8] sm:$0xff]
    %v3678 = vld [vmem:[#allocation12 + $0x1e0] sm:$0xff]
    %v3679 = vld [vmem:[#allocation12 + $0x1e8] sm:$0xff]
    %v3680 = vld [vmem:[#allocation12 + $0x1f0] sm:$0xff]
    %v3681 = vld [vmem:[#allocation12 + $0x1f8] sm:$0xff]
    %v3682 = vrot.slane %v2352, 5
    %v3683 = vrot.slane %v2354, 5
    %v3684 = vrot.slane %v2423, 5
    %v3685 = vrot.slane %v2425, 5
    %3690 = vmatprep.subr.mxu0 %v3619
    %3691 = vmatpush1.msra.mxu0 %v3618
    %3692 = vmatprep.subr.mxu0 %v3623
    %3693 = vmatpush1.msra.mxu0 %v3622
    %3694 = vmatprep.subr.mxu0 %v3627
    %3695 = vmatpush1.msra.mxu0 %v3626
    %3696 = vmatprep.subr.mxu0 %v3631
    %3697 = vmatpush1.msra.mxu0 %v3630
    %3698 = vmatprep.subr.mxu0 %v3635
    %3699 = vmatpush1.msra.mxu0 %v3634
    %3700 = vmatprep.subr.mxu0 %v3639
    %3701 = vmatpush1.msra.mxu0 %v3638
    %3702 = vmatprep.subr.mxu0 %v3643
    %3703 = vmatpush1.msra.mxu0 %v3642
    %3704 = vmatprep.subr.mxu0 %v3647
    %3705 = vmatpush1.msra.mxu0 %v3646
    %3706 = vmatprep.subr.mxu0 %v3651
    %3707 = vmatpush1.msra.mxu0 %v3650
    %3708 = vmatprep.subr.mxu0 %v3655
    %3709 = vmatpush1.msra.mxu0 %v3654
    %3710 = vmatprep.subr.mxu0 %v3659
    %3711 = vmatpush1.msra.mxu0 %v3658
    %3712 = vmatprep.subr.mxu0 %v3663
    %3713 = vmatpush1.msra.mxu0 %v3662
    %3714 = vmatprep.subr.mxu0 %v3667
    %3715 = vmatpush1.msra.mxu0 %v3666
    %3716 = vmatprep.subr.mxu0 %v3671
    %3717 = vmatpush1.msra.mxu0 %v3670
    %3718 = vmatprep.subr.mxu0 %v3675
    %3719 = vmatpush1.msra.mxu0 %v3674
    %3720 = vmatprep.subr.mxu0 %v3679
    %3721 = vmatpush1.msra.mxu0 %v3678
    %3722 = vmatprep.subr.mxu0 0.0
    %3723 = vmatpush1.msra.mxu0 0.0
    %3724 = vmatprep.subr.mxu0 0.0
    %3725 = vmatpush1.msra.mxu0 0.0
    %3726 = vmatprep.subr.mxu0 0.0
    %3727 = vmatpush1.msra.mxu0 0.0
    %3728 = vmatprep.subr.mxu0 0.0
    %3729 = vmatpush1.msra.mxu0 0.0
    %3730 = vmatprep.subr.mxu0 0.0
    %3731 = vmatpush1.msra.mxu0 0.0
    %3732 = vmatprep.subr.mxu0 0.0
    %3733 = vmatpush1.msra.mxu0 0.0
    %3734 = vmatprep.subr.mxu0 0.0
    %3735 = vmatpush1.msra.mxu0 0.0
    %3736 = vmatprep.subr.mxu0 0.0
    %3737 = vmatpush1.msra.mxu0 0.0
    %3738 = vmatprep.subr.mxu0 0.0
    %3739 = vmatpush1.msra.mxu0 0.0
    %3740 = vmatprep.subr.mxu0 0.0
    %3741 = vmatpush1.msra.mxu0 0.0
    %3742 = vmatprep.subr.mxu0 0.0
    %3743 = vmatpush1.msra.mxu0 0.0
    %3744 = vmatprep.subr.mxu0 0.0
    %3745 = vmatpush1.msra.mxu0 0.0
    %3746 = vmatprep.subr.mxu0 0.0
    %3747 = vmatpush1.msra.mxu0 0.0
    %3748 = vmatprep.subr.mxu0 0.0
    %3749 = vmatpush1.msra.mxu0 0.0
    %3750 = vmatprep.subr.mxu0 0.0
    %3751 = vmatpush1.msra.mxu0 0.0
    %3752 = vmatprep.subr.mxu0 0.0
    %3753 = vmatpush1.msra.mxu0 0.0
    %3754 = vmatprep.mubr.f32.mxu0 0.0
    %3755 = vmatmul.mubr.f32.gmra.mrb[0].mxu0 %v3616
    %v3756 = vpop.f32.mrb[0].mxu0
    %v3757 = vadd.f32 %v3682, %v3756
    %v3758 = vpop.f32.mrb[0].mxu0
    %v3759 = vadd.f32 %v3683, %v3758
    %3760 = vdwg.mxu0
    %3761 = vmatprep.subr.mxu0 %v3621
    %3762 = vmatpush1.msra.mxu0 %v3620
    %3763 = vmatprep.subr.mxu0 %v3625
    %3764 = vmatpush1.msra.mxu0 %v3624
    %3765 = vmatprep.subr.mxu0 %v3629
    %3766 = vmatpush1.msra.mxu0 %v3628
    %3767 = vmatprep.subr.mxu0 %v3633
    %3768 = vmatpush1.msra.mxu0 %v3632
    %3769 = vmatprep.subr.mxu0 %v3637
    %3770 = vmatpush1.msra.mxu0 %v3636
    %3771 = vmatprep.subr.mxu0 %v3641
    %3772 = vmatpush1.msra.mxu0 %v3640
    %3773 = vmatprep.subr.mxu0 %v3645
    %3774 = vmatpush1.msra.mxu0 %v3644
    %3775 = vmatprep.subr.mxu0 %v3649
    %3776 = vmatpush1.msra.mxu0 %v3648
    %3777 = vmatprep.subr.mxu0 %v3653
    %3778 = vmatpush1.msra.mxu0 %v3652
    %3779 = vmatprep.subr.mxu0 %v3657
    %3780 = vmatpush1.msra.mxu0 %v3656
    %3781 = vmatprep.subr.mxu0 %v3661
    %3782 = vmatpush1.msra.mxu0 %v3660
    %3783 = vmatprep.subr.mxu0 %v3665
    %3784 = vmatpush1.msra.mxu0 %v3664
    %3785 = vmatprep.subr.mxu0 %v3669
    %3786 = vmatpush1.msra.mxu0 %v3668
    %3787 = vmatprep.subr.mxu0 %v3673
    %3788 = vmatpush1.msra.mxu0 %v3672
    %3789 = vmatprep.subr.mxu0 %v3677
    %3790 = vmatpush1.msra.mxu0 %v3676
    %3791 = vmatprep.subr.mxu0 %v3681
    %3792 = vmatpush1.msra.mxu0 %v3680
    %3793 = vmatprep.subr.mxu0 0.0
    %3794 = vmatpush1.msra.mxu0 0.0
    %3795 = vmatprep.subr.mxu0 0.0
    %3796 = vmatpush1.msra.mxu0 0.0
    %3797 = vmatprep.subr.mxu0 0.0
    %3798 = vmatpush1.msra.mxu0 0.0
    %3799 = vmatprep.subr.mxu0 0.0
    %3800 = vmatpush1.msra.mxu0 0.0
    %3801 = vmatprep.subr.mxu0 0.0
    %3802 = vmatpush1.msra.mxu0 0.0
    %3803 = vmatprep.subr.mxu0 0.0
    %3804 = vmatpush1.msra.mxu0 0.0
    %3805 = vmatprep.subr.mxu0 0.0
    %3806 = vmatpush1.msra.mxu0 0.0
    %3807 = vmatprep.subr.mxu0 0.0
    %3808 = vmatpush1.msra.mxu0 0.0
    %3809 = vmatprep.subr.mxu0 0.0
    %3810 = vmatpush1.msra.mxu0 0.0
    %3811 = vmatprep.subr.mxu0 0.0
    %3812 = vmatpush1.msra.mxu0 0.0
    %3813 = vmatprep.subr.mxu0 0.0
    %3814 = vmatpush1.msra.mxu0 0.0
    %3815 = vmatprep.subr.mxu0 0.0
    %3816 = vmatpush1.msra.mxu0 0.0
    %3817 = vmatprep.subr.mxu0 0.0
    %3818 = vmatpush1.msra.mxu0 0.0
    %3819 = vmatprep.subr.mxu0 0.0
    %3820 = vmatpush1.msra.mxu0 0.0
    %3821 = vmatprep.subr.mxu0 0.0
    %3822 = vmatpush1.msra.mxu0 0.0
    %3823 = vmatprep.subr.mxu0 0.0
    %3824 = vmatpush1.msra.mxu0 0.0
    %3825 = vmatprep.mubr.f32.mxu0 0.0
    %3826 = vmatmul.mubr.f32.gmra.mrb[0].mxu0 %v3616
    %v3827 = vpop.f32.mrb[0].mxu0
    %v3828 = vadd.f32 %v3684, %v3827
    %v3829 = vpop.f32.mrb[0].mxu0
    %v3830 = vadd.f32 %v3685, %v3829
    %3831 = vdwg.mxu0
    %v3832 = vxor.u32 %v3757, 2147483648
    %v3833 = vmul.f32 %v3832, 1.442695
    %v3834 = vpow.pop %v3833
    %v3835 = vadd.f32 %v3834, 1.0
    %v3836 = vrcp.pop %v3835
    %v3837 = vmul.f32 1.0, %v3836
    %v3838 = vxor.u32 %v3759, 2147483648
    %v3839 = vmul.f32 %v3838, 1.442695
    %v3840 = vpow.pop %v3839
    %v3841 = vadd.f32 %v3840, 1.0
    %v3842 = vrcp.pop %v3841
    %v3843 = vmul.f32 1.0, %v3842
    %v3844 = vtanh.pop %v3828
    %v3845 = vxor.u32 %v3830, 2147483648
    %v3846 = vmul.f32 %v3845, 1.442695
    %v3847 = vpow.pop %v3846
    %v3848 = vadd.f32 %v3847, 1.0
    %v3849 = vrcp.pop %v3848
    %v3850 = vmul.f32 1.0, %v3849
    %v3851 = vmul.f32 %v3843, %v3614
    %v3852 = vmul.f32 %v3837, %v3844
    %v3853 = vadd.f32 %v3851, %v3852
    %v3854 = vtanh.pop %v3853
    %v3855 = vmul.f32 %v3850, %v3854
    %3856 = vst [vmem:[#allocation3 + $0x5] sm:$0x1] %v3855
    %v3857 = vld [vmem:[#allocation12] sm:$0xff]
    %v3858 = vld [vmem:[#allocation12 + $0x8] sm:$0xff]
    %v3859 = vld [vmem:[#allocation12 + $0x10] sm:$0xff]
    %v3860 = vld [vmem:[#allocation12 + $0x18] sm:$0xff]
    %v3861 = vld [vmem:[#allocation12 + $0x20] sm:$0xff]
    %v3862 = vld [vmem:[#allocation12 + $0x28] sm:$0xff]
    %v3863 = vld [vmem:[#allocation12 + $0x30] sm:$0xff]
    %v3864 = vld [vmem:[#allocation12 + $0x38] sm:$0xff]
    %v3865 = vld [vmem:[#allocation12 + $0x40] sm:$0xff]
    %v3866 = vld [vmem:[#allocation12 + $0x48] sm:$0xff]
    %v3867 = vld [vmem:[#allocation12 + $0x50] sm:$0xff]
    %v3868 = vld [vmem:[#allocation12 + $0x58] sm:$0xff]
    %v3869 = vld [vmem:[#allocation12 + $0x60] sm:$0xff]
    %v3870 = vld [vmem:[#allocation12 + $0x68] sm:$0xff]
    %v3871 = vld [vmem:[#allocation12 + $0x70] sm:$0xff]
    %v3872 = vld [vmem:[#allocation12 + $0x78] sm:$0xff]
    %v3873 = vld [vmem:[#allocation12 + $0x80] sm:$0xff]
    %v3874 = vld [vmem:[#allocation12 + $0x88] sm:$0xff]
    %v3875 = vld [vmem:[#allocation12 + $0x90] sm:$0xff]
    %v3876 = vld [vmem:[#allocation12 + $0x98] sm:$0xff]
    %v3877 = vld [vmem:[#allocation12 + $0xa0] sm:$0xff]
    %v3878 = vld [vmem:[#allocation12 + $0xa8] sm:$0xff]
    %v3879 = vld [vmem:[#allocation12 + $0xb0] sm:$0xff]
    %v3880 = vld [vmem:[#allocation12 + $0xb8] sm:$0xff]
    %v3881 = vld [vmem:[#allocation12 + $0xc0] sm:$0xff]
    %v3882 = vld [vmem:[#allocation12 + $0xc8] sm:$0xff]
    %v3883 = vld [vmem:[#allocation12 + $0xd0] sm:$0xff]
    %v3884 = vld [vmem:[#allocation12 + $0xd8] sm:$0xff]
    %v3885 = vld [vmem:[#allocation12 + $0xe0] sm:$0xff]
    %v3886 = vld [vmem:[#allocation12 + $0xe8] sm:$0xff]
    %v3887 = vld [vmem:[#allocation12 + $0xf0] sm:$0xff]
    %v3888 = vld [vmem:[#allocation12 + $0xf8] sm:$0xff]
    %v3889 = vld [vmem:[#allocation12 + $0x100] sm:$0xff]
    %v3890 = vld [vmem:[#allocation12 + $0x108] sm:$0xff]
    %v3891 = vld [vmem:[#allocation12 + $0x110] sm:$0xff]
    %v3892 = vld [vmem:[#allocation12 + $0x118] sm:$0xff]
    %v3893 = vld [vmem:[#allocation12 + $0x120] sm:$0xff]
    %v3894 = vld [vmem:[#allocation12 + $0x128] sm:$0xff]
    %v3895 = vld [vmem:[#allocation12 + $0x130] sm:$0xff]
    %v3896 = vld [vmem:[#allocation12 + $0x138] sm:$0xff]
    %v3897 = vld [vmem:[#allocation12 + $0x140] sm:$0xff]
    %v3898 = vld [vmem:[#allocation12 + $0x148] sm:$0xff]
    %v3899 = vld [vmem:[#allocation12 + $0x150] sm:$0xff]
    %v3900 = vld [vmem:[#allocation12 + $0x158] sm:$0xff]
    %v3901 = vld [vmem:[#allocation12 + $0x160] sm:$0xff]
    %v3902 = vld [vmem:[#allocation12 + $0x168] sm:$0xff]
    %v3903 = vld [vmem:[#allocation12 + $0x170] sm:$0xff]
    %v3904 = vld [vmem:[#allocation12 + $0x178] sm:$0xff]
    %v3905 = vld [vmem:[#allocation12 + $0x180] sm:$0xff]
    %v3906 = vld [vmem:[#allocation12 + $0x188] sm:$0xff]
    %v3907 = vld [vmem:[#allocation12 + $0x190] sm:$0xff]
    %v3908 = vld [vmem:[#allocation12 + $0x198] sm:$0xff]
    %v3909 = vld [vmem:[#allocation12 + $0x1a0] sm:$0xff]
    %v3910 = vld [vmem:[#allocation12 + $0x1a8] sm:$0xff]
    %v3911 = vld [vmem:[#allocation12 + $0x1b0] sm:$0xff]
    %v3912 = vld [vmem:[#allocation12 + $0x1b8] sm:$0xff]
    %v3913 = vld [vmem:[#allocation12 + $0x1c0] sm:$0xff]
    %v3914 = vld [vmem:[#allocation12 + $0x1c8] sm:$0xff]
    %v3915 = vld [vmem:[#allocation12 + $0x1d0] sm:$0xff]
    %v3916 = vld [vmem:[#allocation12 + $0x1d8] sm:$0xff]
    %v3917 = vld [vmem:[#allocation12 + $0x1e0] sm:$0xff]
    %v3918 = vld [vmem:[#allocation12 + $0x1e8] sm:$0xff]
    %v3919 = vld [vmem:[#allocation12 + $0x1f0] sm:$0xff]
    %v3920 = vld [vmem:[#allocation12 + $0x1f8] sm:$0xff]
    %v3921 = vrot.slane %v2352, 6
    %v3922 = vrot.slane %v2354, 6
    %v3923 = vrot.slane %v2423, 6
    %v3924 = vrot.slane %v2425, 6
    %3929 = vmatprep.subr.mxu0 %v3858
    %3930 = vmatpush1.msra.mxu0 %v3857
    %3931 = vmatprep.subr.mxu0 %v3862
    %3932 = vmatpush1.msra.mxu0 %v3861
    %3933 = vmatprep.subr.mxu0 %v3866
    %3934 = vmatpush1.msra.mxu0 %v3865
    %3935 = vmatprep.subr.mxu0 %v3870
    %3936 = vmatpush1.msra.mxu0 %v3869
    %3937 = vmatprep.subr.mxu0 %v3874
    %3938 = vmatpush1.msra.mxu0 %v3873
    %3939 = vmatprep.subr.mxu0 %v3878
    %3940 = vmatpush1.msra.mxu0 %v3877
    %3941 = vmatprep.subr.mxu0 %v3882
    %3942 = vmatpush1.msra.mxu0 %v3881
    %3943 = vmatprep.subr.mxu0 %v3886
    %3944 = vmatpush1.msra.mxu0 %v3885
    %3945 = vmatprep.subr.mxu0 %v3890
    %3946 = vmatpush1.msra.mxu0 %v3889
    %3947 = vmatprep.subr.mxu0 %v3894
    %3948 = vmatpush1.msra.mxu0 %v3893
    %3949 = vmatprep.subr.mxu0 %v3898
    %3950 = vmatpush1.msra.mxu0 %v3897
    %3951 = vmatprep.subr.mxu0 %v3902
    %3952 = vmatpush1.msra.mxu0 %v3901
    %3953 = vmatprep.subr.mxu0 %v3906
    %3954 = vmatpush1.msra.mxu0 %v3905
    %3955 = vmatprep.subr.mxu0 %v3910
    %3956 = vmatpush1.msra.mxu0 %v3909
    %3957 = vmatprep.subr.mxu0 %v3914
    %3958 = vmatpush1.msra.mxu0 %v3913
    %3959 = vmatprep.subr.mxu0 %v3918
    %3960 = vmatpush1.msra.mxu0 %v3917
    %3961 = vmatprep.subr.mxu0 0.0
    %3962 = vmatpush1.msra.mxu0 0.0
    %3963 = vmatprep.subr.mxu0 0.0
    %3964 = vmatpush1.msra.mxu0 0.0
    %3965 = vmatprep.subr.mxu0 0.0
    %3966 = vmatpush1.msra.mxu0 0.0
    %3967 = vmatprep.subr.mxu0 0.0
    %3968 = vmatpush1.msra.mxu0 0.0
    %3969 = vmatprep.subr.mxu0 0.0
    %3970 = vmatpush1.msra.mxu0 0.0
    %3971 = vmatprep.subr.mxu0 0.0
    %3972 = vmatpush1.msra.mxu0 0.0
    %3973 = vmatprep.subr.mxu0 0.0
    %3974 = vmatpush1.msra.mxu0 0.0
    %3975 = vmatprep.subr.mxu0 0.0
    %3976 = vmatpush1.msra.mxu0 0.0
    %3977 = vmatprep.subr.mxu0 0.0
    %3978 = vmatpush1.msra.mxu0 0.0
    %3979 = vmatprep.subr.mxu0 0.0
    %3980 = vmatpush1.msra.mxu0 0.0
    %3981 = vmatprep.subr.mxu0 0.0
    %3982 = vmatpush1.msra.mxu0 0.0
    %3983 = vmatprep.subr.mxu0 0.0
    %3984 = vmatpush1.msra.mxu0 0.0
    %3985 = vmatprep.subr.mxu0 0.0
    %3986 = vmatpush1.msra.mxu0 0.0
    %3987 = vmatprep.subr.mxu0 0.0
    %3988 = vmatpush1.msra.mxu0 0.0
    %3989 = vmatprep.subr.mxu0 0.0
    %3990 = vmatpush1.msra.mxu0 0.0
    %3991 = vmatprep.subr.mxu0 0.0
    %3992 = vmatpush1.msra.mxu0 0.0
    %3993 = vmatprep.mubr.f32.mxu0 0.0
    %3994 = vmatmul.mubr.f32.gmra.mrb[0].mxu0 %v3855
    %v3995 = vpop.f32.mrb[0].mxu0
    %v3996 = vadd.f32 %v3921, %v3995
    %v3997 = vpop.f32.mrb[0].mxu0
    %v3998 = vadd.f32 %v3922, %v3997
    %3999 = vdwg.mxu0
    %4000 = vmatprep.subr.mxu0 %v3860
    %4001 = vmatpush1.msra.mxu0 %v3859
    %4002 = vmatprep.subr.mxu0 %v3864
    %4003 = vmatpush1.msra.mxu0 %v3863
    %4004 = vmatprep.subr.mxu0 %v3868
    %4005 = vmatpush1.msra.mxu0 %v3867
    %4006 = vmatprep.subr.mxu0 %v3872
    %4007 = vmatpush1.msra.mxu0 %v3871
    %4008 = vmatprep.subr.mxu0 %v3876
    %4009 = vmatpush1.msra.mxu0 %v3875
    %4010 = vmatprep.subr.mxu0 %v3880
    %4011 = vmatpush1.msra.mxu0 %v3879
    %4012 = vmatprep.subr.mxu0 %v3884
    %4013 = vmatpush1.msra.mxu0 %v3883
    %4014 = vmatprep.subr.mxu0 %v3888
    %4015 = vmatpush1.msra.mxu0 %v3887
    %4016 = vmatprep.subr.mxu0 %v3892
    %4017 = vmatpush1.msra.mxu0 %v3891
    %4018 = vmatprep.subr.mxu0 %v3896
    %4019 = vmatpush1.msra.mxu0 %v3895
    %4020 = vmatprep.subr.mxu0 %v3900
    %4021 = vmatpush1.msra.mxu0 %v3899
    %4022 = vmatprep.subr.mxu0 %v3904
    %4023 = vmatpush1.msra.mxu0 %v3903
    %4024 = vmatprep.subr.mxu0 %v3908
    %4025 = vmatpush1.msra.mxu0 %v3907
    %4026 = vmatprep.subr.mxu0 %v3912
    %4027 = vmatpush1.msra.mxu0 %v3911
    %4028 = vmatprep.subr.mxu0 %v3916
    %4029 = vmatpush1.msra.mxu0 %v3915
    %4030 = vmatprep.subr.mxu0 %v3920
    %4031 = vmatpush1.msra.mxu0 %v3919
    %4032 = vmatprep.subr.mxu0 0.0
    %4033 = vmatpush1.msra.mxu0 0.0
    %4034 = vmatprep.subr.mxu0 0.0
    %4035 = vmatpush1.msra.mxu0 0.0
    %4036 = vmatprep.subr.mxu0 0.0
    %4037 = vmatpush1.msra.mxu0 0.0
    %4038 = vmatprep.subr.mxu0 0.0
    %4039 = vmatpush1.msra.mxu0 0.0
    %4040 = vmatprep.subr.mxu0 0.0
    %4041 = vmatpush1.msra.mxu0 0.0
    %4042 = vmatprep.subr.mxu0 0.0
    %4043 = vmatpush1.msra.mxu0 0.0
    %4044 = vmatprep.subr.mxu0 0.0
    %4045 = vmatpush1.msra.mxu0 0.0
    %4046 = vmatprep.subr.mxu0 0.0
    %4047 = vmatpush1.msra.mxu0 0.0
    %4048 = vmatprep.subr.mxu0 0.0
    %4049 = vmatpush1.msra.mxu0 0.0
    %4050 = vmatprep.subr.mxu0 0.0
    %4051 = vmatpush1.msra.mxu0 0.0
    %4052 = vmatprep.subr.mxu0 0.0
    %4053 = vmatpush1.msra.mxu0 0.0
    %4054 = vmatprep.subr.mxu0 0.0
    %4055 = vmatpush1.msra.mxu0 0.0
    %4056 = vmatprep.subr.mxu0 0.0
    %4057 = vmatpush1.msra.mxu0 0.0
    %4058 = vmatprep.subr.mxu0 0.0
    %4059 = vmatpush1.msra.mxu0 0.0
    %4060 = vmatprep.subr.mxu0 0.0
    %4061 = vmatpush1.msra.mxu0 0.0
    %4062 = vmatprep.subr.mxu0 0.0
    %4063 = vmatpush1.msra.mxu0 0.0
    %4064 = vmatprep.mubr.f32.mxu0 0.0
    %4065 = vmatmul.mubr.f32.gmra.mrb[0].mxu0 %v3855
    %v4066 = vpop.f32.mrb[0].mxu0
    %v4067 = vadd.f32 %v3923, %v4066
    %v4068 = vpop.f32.mrb[0].mxu0
    %v4069 = vadd.f32 %v3924, %v4068
    %4070 = vdwg.mxu0
    %v4071 = vxor.u32 %v3996, 2147483648
    %v4072 = vmul.f32 %v4071, 1.442695
    %v4073 = vpow.pop %v4072
    %v4074 = vadd.f32 %v4073, 1.0
    %v4075 = vrcp.pop %v4074
    %v4076 = vmul.f32 1.0, %v4075
    %v4077 = vxor.u32 %v3998, 2147483648
    %v4078 = vmul.f32 %v4077, 1.442695
    %v4079 = vpow.pop %v4078
    %v4080 = vadd.f32 %v4079, 1.0
    %v4081 = vrcp.pop %v4080
    %v4082 = vmul.f32 1.0, %v4081
    %v4083 = vtanh.pop %v4067
    %v4084 = vxor.u32 %v4069, 2147483648
    %v4085 = vmul.f32 %v4084, 1.442695
    %v4086 = vpow.pop %v4085
    %v4087 = vadd.f32 %v4086, 1.0
    %v4088 = vrcp.pop %v4087
    %v4089 = vmul.f32 1.0, %v4088
    %v4090 = vmul.f32 %v4082, %v3853
    %v4091 = vmul.f32 %v4076, %v4083
    %v4092 = vadd.f32 %v4090, %v4091
    %v4093 = vtanh.pop %v4092
    %v4094 = vmul.f32 %v4089, %v4093
    %4095 = vst [vmem:[#allocation3 + $0x6] sm:$0x1] %v4094
    %v4096 = vld [vmem:[#allocation12] sm:$0xff]
    %v4097 = vld [vmem:[#allocation12 + $0x8] sm:$0xff]
    %v4098 = vld [vmem:[#allocation12 + $0x10] sm:$0xff]
    %v4099 = vld [vmem:[#allocation12 + $0x18] sm:$0xff]
    %v4100 = vld [vmem:[#allocation12 + $0x20] sm:$0xff]
    %v4101 = vld [vmem:[#allocation12 + $0x28] sm:$0xff]
    %v4102 = vld [vmem:[#allocation12 + $0x30] sm:$0xff]
    %v4103 = vld [vmem:[#allocation12 + $0x38] sm:$0xff]
    %v4104 = vld [vmem:[#allocation12 + $0x40] sm:$0xff]
    %v4105 = vld [vmem:[#allocation12 + $0x48] sm:$0xff]
    %v4106 = vld [vmem:[#allocation12 + $0x50] sm:$0xff]
    %v4107 = vld [vmem:[#allocation12 + $0x58] sm:$0xff]
    %v4108 = vld [vmem:[#allocation12 + $0x60] sm:$0xff]
    %v4109 = vld [vmem:[#allocation12 + $0x68] sm:$0xff]
    %v4110 = vld [vmem:[#allocation12 + $0x70] sm:$0xff]
    %v4111 = vld [vmem:[#allocation12 + $0x78] sm:$0xff]
    %v4112 = vld [vmem:[#allocation12 + $0x80] sm:$0xff]
    %v4113 = vld [vmem:[#allocation12 + $0x88] sm:$0xff]
    %v4114 = vld [vmem:[#allocation12 + $0x90] sm:$0xff]
    %v4115 = vld [vmem:[#allocation12 + $0x98] sm:$0xff]
    %v4116 = vld [vmem:[#allocation12 + $0xa0] sm:$0xff]
    %v4117 = vld [vmem:[#allocation12 + $0xa8] sm:$0xff]
    %v4118 = vld [vmem:[#allocation12 + $0xb0] sm:$0xff]
    %v4119 = vld [vmem:[#allocation12 + $0xb8] sm:$0xff]
    %v4120 = vld [vmem:[#allocation12 + $0xc0] sm:$0xff]
    %v4121 = vld [vmem:[#allocation12 + $0xc8] sm:$0xff]
    %v4122 = vld [vmem:[#allocation12 + $0xd0] sm:$0xff]
    %v4123 = vld [vmem:[#allocation12 + $0xd8] sm:$0xff]
    %v4124 = vld [vmem:[#allocation12 + $0xe0] sm:$0xff]
    %v4125 = vld [vmem:[#allocation12 + $0xe8] sm:$0xff]
    %v4126 = vld [vmem:[#allocation12 + $0xf0] sm:$0xff]
    %v4127 = vld [vmem:[#allocation12 + $0xf8] sm:$0xff]
    %v4128 = vld [vmem:[#allocation12 + $0x100] sm:$0xff]
    %v4129 = vld [vmem:[#allocation12 + $0x108] sm:$0xff]
    %v4130 = vld [vmem:[#allocation12 + $0x110] sm:$0xff]
    %v4131 = vld [vmem:[#allocation12 + $0x118] sm:$0xff]
    %v4132 = vld [vmem:[#allocation12 + $0x120] sm:$0xff]
    %v4133 = vld [vmem:[#allocation12 + $0x128] sm:$0xff]
    %v4134 = vld [vmem:[#allocation12 + $0x130] sm:$0xff]
    %v4135 = vld [vmem:[#allocation12 + $0x138] sm:$0xff]
    %v4136 = vld [vmem:[#allocation12 + $0x140] sm:$0xff]
    %v4137 = vld [vmem:[#allocation12 + $0x148] sm:$0xff]
    %v4138 = vld [vmem:[#allocation12 + $0x150] sm:$0xff]
    %v4139 = vld [vmem:[#allocation12 + $0x158] sm:$0xff]
    %v4140 = vld [vmem:[#allocation12 + $0x160] sm:$0xff]
    %v4141 = vld [vmem:[#allocation12 + $0x168] sm:$0xff]
    %v4142 = vld [vmem:[#allocation12 + $0x170] sm:$0xff]
    %v4143 = vld [vmem:[#allocation12 + $0x178] sm:$0xff]
    %v4144 = vld [vmem:[#allocation12 + $0x180] sm:$0xff]
    %v4145 = vld [vmem:[#allocation12 + $0x188] sm:$0xff]
    %v4146 = vld [vmem:[#allocation12 + $0x190] sm:$0xff]
    %v4147 = vld [vmem:[#allocation12 + $0x198] sm:$0xff]
    %v4148 = vld [vmem:[#allocation12 + $0x1a0] sm:$0xff]
    %v4149 = vld [vmem:[#allocation12 + $0x1a8] sm:$0xff]
    %v4150 = vld [vmem:[#allocation12 + $0x1b0] sm:$0xff]
    %v4151 = vld [vmem:[#allocation12 + $0x1b8] sm:$0xff]
    %v4152 = vld [vmem:[#allocation12 + $0x1c0] sm:$0xff]
    %v4153 = vld [vmem:[#allocation12 + $0x1c8] sm:$0xff]
    %v4154 = vld [vmem:[#allocation12 + $0x1d0] sm:$0xff]
    %v4155 = vld [vmem:[#allocation12 + $0x1d8] sm:$0xff]
    %v4156 = vld [vmem:[#allocation12 + $0x1e0] sm:$0xff]
    %v4157 = vld [vmem:[#allocation12 + $0x1e8] sm:$0xff]
    %v4158 = vld [vmem:[#allocation12 + $0x1f0] sm:$0xff]
    %v4159 = vld [vmem:[#allocation12 + $0x1f8] sm:$0xff]
    %v4160 = vrot.slane %v2352, 7
    %v4161 = vrot.slane %v2354, 7
    %v4162 = vrot.slane %v2423, 7
    %v4163 = vrot.slane %v2425, 7
    %4168 = vmatprep.subr.mxu0 %v4097
    %4169 = vmatpush1.msra.mxu0 %v4096
    %4170 = vmatprep.subr.mxu0 %v4101
    %4171 = vmatpush1.msra.mxu0 %v4100
    %4172 = vmatprep.subr.mxu0 %v4105
    %4173 = vmatpush1.msra.mxu0 %v4104
    %4174 = vmatprep.subr.mxu0 %v4109
    %4175 = vmatpush1.msra.mxu0 %v4108
    %4176 = vmatprep.subr.mxu0 %v4113
    %4177 = vmatpush1.msra.mxu0 %v4112
    %4178 = vmatprep.subr.mxu0 %v4117
    %4179 = vmatpush1.msra.mxu0 %v4116
    %4180 = vmatprep.subr.mxu0 %v4121
    %4181 = vmatpush1.msra.mxu0 %v4120
    %4182 = vmatprep.subr.mxu0 %v4125
    %4183 = vmatpush1.msra.mxu0 %v4124
    %4184 = vmatprep.subr.mxu0 %v4129
    %4185 = vmatpush1.msra.mxu0 %v4128
    %4186 = vmatprep.subr.mxu0 %v4133
    %4187 = vmatpush1.msra.mxu0 %v4132
    %4188 = vmatprep.subr.mxu0 %v4137
    %4189 = vmatpush1.msra.mxu0 %v4136
    %4190 = vmatprep.subr.mxu0 %v4141
    %4191 = vmatpush1.msra.mxu0 %v4140
    %4192 = vmatprep.subr.mxu0 %v4145
    %4193 = vmatpush1.msra.mxu0 %v4144
    %4194 = vmatprep.subr.mxu0 %v4149
    %4195 = vmatpush1.msra.mxu0 %v4148
    %4196 = vmatprep.subr.mxu0 %v4153
    %4197 = vmatpush1.msra.mxu0 %v4152
    %4198 = vmatprep.subr.mxu0 %v4157
    %4199 = vmatpush1.msra.mxu0 %v4156
    %4200 = vmatprep.subr.mxu0 0.0
    %4201 = vmatpush1.msra.mxu0 0.0
    %4202 = vmatprep.subr.mxu0 0.0
    %4203 = vmatpush1.msra.mxu0 0.0
    %4204 = vmatprep.subr.mxu0 0.0
    %4205 = vmatpush1.msra.mxu0 0.0
    %4206 = vmatprep.subr.mxu0 0.0
    %4207 = vmatpush1.msra.mxu0 0.0
    %4208 = vmatprep.subr.mxu0 0.0
    %4209 = vmatpush1.msra.mxu0 0.0
    %4210 = vmatprep.subr.mxu0 0.0
    %4211 = vmatpush1.msra.mxu0 0.0
    %4212 = vmatprep.subr.mxu0 0.0
    %4213 = vmatpush1.msra.mxu0 0.0
    %4214 = vmatprep.subr.mxu0 0.0
    %4215 = vmatpush1.msra.mxu0 0.0
    %4216 = vmatprep.subr.mxu0 0.0
    %4217 = vmatpush1.msra.mxu0 0.0
    %4218 = vmatprep.subr.mxu0 0.0
    %4219 = vmatpush1.msra.mxu0 0.0
    %4220 = vmatprep.subr.mxu0 0.0
    %4221 = vmatpush1.msra.mxu0 0.0
    %4222 = vmatprep.subr.mxu0 0.0
    %4223 = vmatpush1.msra.mxu0 0.0
    %4224 = vmatprep.subr.mxu0 0.0
    %4225 = vmatpush1.msra.mxu0 0.0
    %4226 = vmatprep.subr.mxu0 0.0
    %4227 = vmatpush1.msra.mxu0 0.0
    %4228 = vmatprep.subr.mxu0 0.0
    %4229 = vmatpush1.msra.mxu0 0.0
    %4230 = vmatprep.subr.mxu0 0.0
    %4231 = vmatpush1.msra.mxu0 0.0
    %4232 = vmatprep.mubr.f32.mxu0 0.0
    %4233 = vmatmul.mubr.f32.gmra.mrb[0].mxu0 %v4094
    %v4234 = vpop.f32.mrb[0].mxu0
    %v4235 = vadd.f32 %v4160, %v4234
    %v4236 = vpop.f32.mrb[0].mxu0
    %v4237 = vadd.f32 %v4161, %v4236
    %4238 = vdwg.mxu0
    %4239 = vmatprep.subr.mxu0 %v4099
    %4240 = vmatpush1.msra.mxu0 %v4098
    %4241 = vmatprep.subr.mxu0 %v4103
    %4242 = vmatpush1.msra.mxu0 %v4102
    %4243 = vmatprep.subr.mxu0 %v4107
    %4244 = vmatpush1.msra.mxu0 %v4106
    %4245 = vmatprep.subr.mxu0 %v4111
    %4246 = vmatpush1.msra.mxu0 %v4110
    %4247 = vmatprep.subr.mxu0 %v4115
    %4248 = vmatpush1.msra.mxu0 %v4114
    %4249 = vmatprep.subr.mxu0 %v4119
    %4250 = vmatpush1.msra.mxu0 %v4118
    %4251 = vmatprep.subr.mxu0 %v4123
    %4252 = vmatpush1.msra.mxu0 %v4122
    %4253 = vmatprep.subr.mxu0 %v4127
    %4254 = vmatpush1.msra.mxu0 %v4126
    %4255 = vmatprep.subr.mxu0 %v4131
    %4256 = vmatpush1.msra.mxu0 %v4130
    %4257 = vmatprep.subr.mxu0 %v4135
    %4258 = vmatpush1.msra.mxu0 %v4134
    %4259 = vmatprep.subr.mxu0 %v4139
    %4260 = vmatpush1.msra.mxu0 %v4138
    %4261 = vmatprep.subr.mxu0 %v4143
    %4262 = vmatpush1.msra.mxu0 %v4142
    %4263 = vmatprep.subr.mxu0 %v4147
    %4264 = vmatpush1.msra.mxu0 %v4146
    %4265 = vmatprep.subr.mxu0 %v4151
    %4266 = vmatpush1.msra.mxu0 %v4150
    %4267 = vmatprep.subr.mxu0 %v4155
    %4268 = vmatpush1.msra.mxu0 %v4154
    %4269 = vmatprep.subr.mxu0 %v4159
    %4270 = vmatpush1.msra.mxu0 %v4158
    %4271 = vmatprep.subr.mxu0 0.0
    %4272 = vmatpush1.msra.mxu0 0.0
    %4273 = vmatprep.subr.mxu0 0.0
    %4274 = vmatpush1.msra.mxu0 0.0
    %4275 = vmatprep.subr.mxu0 0.0
    %4276 = vmatpush1.msra.mxu0 0.0
    %4277 = vmatprep.subr.mxu0 0.0
    %4278 = vmatpush1.msra.mxu0 0.0
    %4279 = vmatprep.subr.mxu0 0.0
    %4280 = vmatpush1.msra.mxu0 0.0
    %4281 = vmatprep.subr.mxu0 0.0
    %4282 = vmatpush1.msra.mxu0 0.0
    %4283 = vmatprep.subr.mxu0 0.0
    %4284 = vmatpush1.msra.mxu0 0.0
    %4285 = vmatprep.subr.mxu0 0.0
    %4286 = vmatpush1.msra.mxu0 0.0
    %4287 = vmatprep.subr.mxu0 0.0
    %4288 = vmatpush1.msra.mxu0 0.0
    %4289 = vmatprep.subr.mxu0 0.0
    %4290 = vmatpush1.msra.mxu0 0.0
    %4291 = vmatprep.subr.mxu0 0.0
    %4292 = vmatpush1.msra.mxu0 0.0
    %4293 = vmatprep.subr.mxu0 0.0
    %4294 = vmatpush1.msra.mxu0 0.0
    %4295 = vmatprep.subr.mxu0 0.0
    %4296 = vmatpush1.msra.mxu0 0.0
    %4297 = vmatprep.subr.mxu0 0.0
    %4298 = vmatpush1.msra.mxu0 0.0
    %4299 = vmatprep.subr.mxu0 0.0
    %4300 = vmatpush1.msra.mxu0 0.0
    %4301 = vmatprep.subr.mxu0 0.0
    %4302 = vmatpush1.msra.mxu0 0.0
    %4303 = vmatprep.mubr.f32.mxu0 0.0
    %4304 = vmatmul.mubr.f32.gmra.mrb[0].mxu0 %v4094
    %v4305 = vpop.f32.mrb[0].mxu0
    %v4306 = vadd.f32 %v4162, %v4305
    %v4307 = vpop.f32.mrb[0].mxu0
    %v4308 = vadd.f32 %v4163, %v4307
    %4309 = vdwg.mxu0
    %v4310 = vxor.u32 %v4235, 2147483648
    %v4311 = vmul.f32 %v4310, 1.442695
    %v4312 = vpow.pop %v4311
    %v4313 = vadd.f32 %v4312, 1.0
    %v4314 = vrcp.pop %v4313
    %v4315 = vmul.f32 1.0, %v4314
    %v4316 = vxor.u32 %v4237, 2147483648
    %v4317 = vmul.f32 %v4316, 1.442695
    %v4318 = vpow.pop %v4317
    %v4319 = vadd.f32 %v4318, 1.0
    %v4320 = vrcp.pop %v4319
    %v4321 = vmul.f32 1.0, %v4320
    %v4322 = vtanh.pop %v4306
    %v4323 = vxor.u32 %v4308, 2147483648
    %v4324 = vmul.f32 %v4323, 1.442695
    %v4325 = vpow.pop %v4324
    %v4326 = vadd.f32 %v4325, 1.0
    %v4327 = vrcp.pop %v4326
    %v4328 = vmul.f32 1.0, %v4327
    %v4329 = vmul.f32 %v4321, %v4092
    %v4330 = vmul.f32 %v4315, %v4322
    %v4331 = vadd.f32 %v4329, %v4330
    %v4332 = vtanh.pop %v4331
    %v4333 = vmul.f32 %v4328, %v4332
    %4334 = vst [vmem:[#allocation3 + $0x7] sm:$0x1] %v4333
    %v4335 = vld [vmem:[#allocation3] sm:$0xff]
    %v4336 = vld [vmem:[#allocation13] sm:$0xff]
    %v4337 = vld [vmem:[#allocation13 + $0x8] sm:$0xff]
    %v4338 = vld [vmem:[#allocation13 + $0x10] sm:$0xff]
    %v4339 = vld [vmem:[#allocation13 + $0x18] sm:$0xff]
    %v4340 = vld [vmem:[#allocation13 + $0x20] sm:$0xff]
    %v4341 = vld [vmem:[#allocation13 + $0x28] sm:$0xff]
    %v4342 = vld [vmem:[#allocation13 + $0x30] sm:$0xff]
    %v4343 = vld [vmem:[#allocation13 + $0x38] sm:$0xff]
    %v4344 = vld [vmem:[#allocation13 + $0x40] sm:$0xff]
    %v4345 = vld [vmem:[#allocation13 + $0x48] sm:$0xff]
    %v4346 = vld [vmem:[#allocation13 + $0x50] sm:$0xff]
    %v4347 = vld [vmem:[#allocation13 + $0x58] sm:$0xff]
    %v4348 = vld [vmem:[#allocation13 + $0x60] sm:$0xff]
    %v4349 = vld [vmem:[#allocation13 + $0x68] sm:$0xff]
    %v4350 = vld [vmem:[#allocation13 + $0x70] sm:$0xff]
    %v4351 = vld [vmem:[#allocation13 + $0x78] sm:$0xff]
    %v4352 = vld [vmem:[%s8] sm:$0x1]
    %v4354 = vlaneseq
    %v4355 = vshrl.u32 %v4354, 7
    %v4356 = vsub.s32 0, %v4355
    %v4357 = vrot.slane %v4352, %v4356
    %4359 = vmatprep.subr.mxu0 0.0
    %4360 = vmatpush1.msra.mxu0 %v4336
    %4361 = vmatprep.subr.mxu0 0.0
    %4362 = vmatpush1.msra.mxu0 %v4337
    %4363 = vmatprep.subr.mxu0 0.0
    %4364 = vmatpush1.msra.mxu0 %v4338
    %4365 = vmatprep.subr.mxu0 0.0
    %4366 = vmatpush1.msra.mxu0 %v4339
    %4367 = vmatprep.subr.mxu0 0.0
    %4368 = vmatpush1.msra.mxu0 %v4340
    %4369 = vmatprep.subr.mxu0 0.0
    %4370 = vmatpush1.msra.mxu0 %v4341
    %4371 = vmatprep.subr.mxu0 0.0
    %4372 = vmatpush1.msra.mxu0 %v4342
    %4373 = vmatprep.subr.mxu0 0.0
    %4374 = vmatpush1.msra.mxu0 %v4343
    %4375 = vmatprep.subr.mxu0 0.0
    %4376 = vmatpush1.msra.mxu0 %v4344
    %4377 = vmatprep.subr.mxu0 0.0
    %4378 = vmatpush1.msra.mxu0 %v4345
    %4379 = vmatprep.subr.mxu0 0.0
    %4380 = vmatpush1.msra.mxu0 %v4346
    %4381 = vmatprep.subr.mxu0 0.0
    %4382 = vmatpush1.msra.mxu0 %v4347
    %4383 = vmatprep.subr.mxu0 0.0
    %4384 = vmatpush1.msra.mxu0 %v4348
    %4385 = vmatprep.subr.mxu0 0.0
    %4386 = vmatpush1.msra.mxu0 %v4349
    %4387 = vmatprep.subr.mxu0 0.0
    %4388 = vmatpush1.msra.mxu0 %v4350
    %4389 = vmatprep.subr.mxu0 0.0
    %4390 = vmatpush1.msra.mxu0 %v4351
    %4391 = vmatprep.subr.mxu0 0.0
    %4392 = vmatpush1.msra.mxu0 0.0
    %4393 = vmatprep.subr.mxu0 0.0
    %4394 = vmatpush1.msra.mxu0 0.0
    %4395 = vmatprep.subr.mxu0 0.0
    %4396 = vmatpush1.msra.mxu0 0.0
    %4397 = vmatprep.subr.mxu0 0.0
    %4398 = vmatpush1.msra.mxu0 0.0
    %4399 = vmatprep.subr.mxu0 0.0
    %4400 = vmatpush1.msra.mxu0 0.0
    %4401 = vmatprep.subr.mxu0 0.0
    %4402 = vmatpush1.msra.mxu0 0.0
    %4403 = vmatprep.subr.mxu0 0.0
    %4404 = vmatpush1.msra.mxu0 0.0
    %4405 = vmatprep.subr.mxu0 0.0
    %4406 = vmatpush1.msra.mxu0 0.0
    %4407 = vmatprep.subr.mxu0 0.0
    %4408 = vmatpush1.msra.mxu0 0.0
    %4409 = vmatprep.subr.mxu0 0.0
    %4410 = vmatpush1.msra.mxu0 0.0
    %4411 = vmatprep.subr.mxu0 0.0
    %4412 = vmatpush1.msra.mxu0 0.0
    %4413 = vmatprep.subr.mxu0 0.0
    %4414 = vmatpush1.msra.mxu0 0.0
    %4415 = vmatprep.subr.mxu0 0.0
    %4416 = vmatpush1.msra.mxu0 0.0
    %4417 = vmatprep.subr.mxu0 0.0
    %4418 = vmatpush1.msra.mxu0 0.0
    %4419 = vmatprep.subr.mxu0 0.0
    %4420 = vmatpush1.msra.mxu0 0.0
    %4421 = vmatprep.subr.mxu0 0.0
    %4422 = vmatpush1.msra.mxu0 0.0
    %4423 = vmatprep.mubr.f32.mxu0 0.0
    %4424 = vmatmul.mubr.f32.gmra.mrb[0].mxu0 %v4335
    %v4425 = vpop.f32.mrb[0].mxu0
    %v4426 = vadd.f32 %v4357, %v4425
    %v4427 = vpop.f32.mrb[0].mxu0
    %4428 = vdwg.mxu0
    %4429 = vmax.xlane.f32.xlu0 %v4426
    %v4430 = vpop.xlane.xlu0 %4429
    %v4431 = vsub.f32 %v4426, %v4430
    %v4432 = vmul.f32 %v4431, 1.442695
    %v4433 = vpow.pop %v4432
    %4434 = vadd.xlane.f32.xlu0 %v4433
    %v4435 = vpop.xlane.xlu0 %4434
    %v4436 = vrcp.pop %v4435
    %v4437 = vmul.f32 %v4433, %v4436
    %4438 = vst [vmem:[#allocation15] sm:$0xff] %v4437
    // Predicated region
    $region62: #{lstm_forward.1} parent=1 // pred_check
      _
    $region63: #{lstm_forward.1} parent=1 // pred_check_branch
      %4440 = sbr.rel (0) target = $region65
    $region64: #{lstm_forward.1} parent=1 // pred_region
      %s4442 = ssub.s32 128, 128
      %4443 = vsyncadd [#allocation6], %s4442
      %s4445 = sshll.u32 [#allocation15], 4
      %s4446 = int_to_ptr.vmem [resolvable:$true] %s4445
      %4448 = dma.vmem_to_hbm [thread:$0]  %s4446, 128, %s9, [#allocation6]
    $region65: #{lstm_forward.1} parent=1 // pred_fallthru
      _
    // Predicated region
    $region66: #{lstm_forward.1} parent=1 // pred_check
      _
    $region67: #{lstm_forward.1} parent=1 // pred_check_branch
      %4450 = sbr.rel (0) target = $region69
    $region68: #{lstm_forward.1} parent=1 // pred_region
      %4451 = dma.done [#allocation6], 128
    $region69: #{lstm_forward.1} parent=1 // pred_fallthru
      _
    %4452 = vsyncpa [#allocation5], 1
    %4453 = vsyncpa [#allocation8], 1
    %4454 = vsyncpa [#allocation11], 1
    %4455 = vsyncpa [#allocation14], 1
    %4456 = vsyncpa [#allocation6], 1

</llo_original>
